<compile_context>
chip_gen: v7x
topology: tpu7x:2x2x1
jax: 0.10.0
libtpu: 0.0.40
codegen_flags: <defaults>
</compile_context>

<pallas_src>
import functools
import math

import jax
import jax.numpy as jnp
from jax.experimental import pallas as pl
from jax.experimental.pallas import tpu as pltpu

_BN_EPS = 1e-5
_LANE = 128


def _round_up(v, m):
    return ((v + m - 1) // m) * m


def _pick_row_tile(ho, target):
    th = max(1, min(int(target), int(ho)))
    while ho % th:
        th -= 1
    return th


# ----------------------------------------------------------------------------
# Fused BasicBlock kernel.  One grid step = (batch image, tile of `th` output
# rows).  conv1+BN1+ReLU, conv2+BN2, residual add and final ReLU are fused;
# the intermediate activation only ever lives in VMEM scratch.
# ----------------------------------------------------------------------------
def _basic_block_kernel(*refs, stride, th, wo, has_down, cin_p, cout_p):
    if has_down:
        (x_ref, w1_ref, b1_ref, w2_ref, b2_ref, wd_ref, bd_ref,
         o_ref, *scratch) = refs
    else:
        x_ref, w1_ref, b1_ref, w2_ref, b2_ref, o_ref, *scratch = refs

    t = pl.program_id(1)
    nt = pl.num_programs(1)
    c1, c2 = cin_p, cout_p
    m1 = (th + 2) * wo          # rows of the intermediate-activation tile
    m2 = th * wo                # rows of the output tile
    f32 = jnp.float32

    # ---- stage conv1 operand: width taps dj=0,1,2 concatenated on channels --
    if stride == 1:
        xcol, hcol = scratch                     # xcol: (th+4, wo, 3*c1) bf16
        for dj in range(3):
            xcol[:, :, dj * c1:(dj + 1) * c1] = x_ref[:, dj:dj + wo, :]

        def lhs1(di):                            # contiguous H-slice
            return xcol[di:di + th + 2, :, :].reshape(m1, 3 * c1)

        # identity / downsample input = x at the output pixels (centre tap)
        id_src = xcol[2:2 + th, :, c1:2 * c1]
    else:
        # x_ref: (4, th+3, wo+1, c1); phase p = 2*(row parity)+(col parity) of
        # the zero-padded input (space-to-depth done in the wrapper), so the
        # stride-2 taps are unit-stride slices here.
        xcol_e, xcol_o, hcol = scratch
        xcol_e[:, :, 0 * c1:1 * c1] = x_ref[0, :, 0:wo, :]         # di even, dj=0
        xcol_e[:, :, 1 * c1:2 * c1] = x_ref[1, :, 0:wo, :]         # di even, dj=1
        xcol_e[:, :, 2 * c1:3 * c1] = x_ref[0, :, 1:1 + wo, :]     # di even, dj=2
        xcol_o[:, :, 0 * c1:1 * c1] = x_ref[2, 0:th + 2, 0:wo, :]
        xcol_o[:, :, 1 * c1:2 * c1] = x_ref[3, 0:th + 2, 0:wo, :]
        xcol_o[:, :, 2 * c1:3 * c1] = x_ref[2, 0:th + 2, 1:1 + wo, :]

        def lhs1(di):
            if di == 1:
                return xcol_o[0:th + 2, :, :].reshape(m1, 3 * c1)
            return xcol_e[di // 2:di // 2 + th + 2, :, :].reshape(m1, 3 * c1)

        id_src = xcol_o[1:1 + th, :, c1:2 * c1]  # x[::2, ::2] at output pixels

    # ---- conv1 (3x3, stride) + folded BN1 + ReLU ----------------------------
    acc = jnp.dot(lhs1(0), w1_ref[0], preferred_element_type=f32)
    acc = acc + jnp.dot(lhs1(1), w1_ref[1], preferred_element_type=f32)
    acc = acc + jnp.dot(lhs1(2), w1_ref[2], preferred_element_type=f32)
    h = jnp.maximum(acc + b1_ref[...], 0.0).astype(jnp.bfloat16)
    h3 = h.reshape(th + 2, wo, c2)

    # ---- stage conv2 operand: h shifted by dj-1 cols, concat on channels ----
    zcol = jnp.zeros((th + 2, 1, c2), jnp.bfloat16)
    hcol[:, :, c2:2 * c2] = h3                               # dj=1 (aligned)
    hcol[:, 1:wo, 0:c2] = h3[:, 0:wo - 1, :]                 # dj=0
    hcol[:, 0:1, 0:c2] = zcol                                # left zero pad
    hcol[:, 0:wo - 1, 2 * c2:3 * c2] = h3[:, 1:wo, :]        # dj=2
    hcol[:, wo - 1:wo, 2 * c2:3 * c2] = zcol                 # right zero pad

    # conv2 row padding: intermediate rows -1 / ho are zero, only at the ends.
    @pl.when(t == 0)
    def _():
        hcol[0:1, :, :] = jnp.zeros((1, wo, 3 * c2), jnp.bfloat16)

    @pl.when(t == nt - 1)
    def _():
        hcol[th + 1:th + 2, :, :] = jnp.zeros((1, wo, 3 * c2), jnp.bfloat16)

    # ---- conv2 (3x3, stride 1) + folded BN2 ---------------------------------
    acc2 = jnp.dot(hcol[0:th, :, :].reshape(m2, 3 * c2), w2_ref[0],
                   preferred_element_type=f32)
    acc2 = acc2 + jnp.dot(hcol[1:1 + th, :, :].reshape(m2, 3 * c2), w2_ref[1],
                          preferred_element_type=f32)
    acc2 = acc2 + jnp.dot(hcol[2:2 + th, :, :].reshape(m2, 3 * c2), w2_ref[2],
                          preferred_element_type=f32)
    out = acc2 + b2_ref[...]

    # ---- residual path + final ReLU -----------------------------------------
    if has_down:
        ident = jnp.dot(id_src.reshape(m2, c1), wd_ref[...],
                        preferred_element_type=f32) + bd_ref[...]
    else:
        ident = id_src.reshape(m2, c1).astype(f32)

    o_ref[...] = jnp.maximum(out + ident, 0.0).reshape(th, wo, c2).astype(o_ref.dtype)


# ----------------------------------------------------------------------------
# Parameter construction (deterministic, mirrors the PyTorch __init__)
# ----------------------------------------------------------------------------
def build_basic_block(key, inplanes, planes, stride=1):
    has_down = (stride != 1) or (inplanes != planes)
    k1, k2, k3 = jax.random.split(key, 3)

    def kaiming(k, kh, kw, cin, cout):
        std = math.sqrt(2.0 / (cout * kh * kw))
        return std * jax.random.normal(k, (kh, kw, cin, cout), jnp.float32)

    w1 = kaiming(k1, 3, 3, inplanes, planes)
    w2 = kaiming(k2, 3, 3, planes, planes)
    wd = kaiming(k3, 1, 1, inplanes, planes) if has_down else None

    bn_scale = 1.0 / math.sqrt(1.0 + _BN_EPS)   # BN folded (inference, init stats)
    cin_p = _round_up(inplanes, _LANE)
    cout_p = _round_up(planes, _LANE)

    def pack3x3(w, cin, ci_p):
        # (3,3,cin,cout) HWIO -> (3 [di], 3*ci_p [dj-major, channel-minor], cout_p)
        wp = jnp.zeros((3, 3, ci_p, cout_p), jnp.float32)
        wp = wp.at[:, :, :cin, :planes].set(w * bn_scale)   # fold BN scale
        return wp.reshape(3, 3 * ci_p, cout_p).astype(jnp.bfloat16)

    params = dict(
        inplanes=inplanes, planes=planes, stride=stride, has_down=has_down,
        cin_p=cin_p, cout_p=cout_p,
        w1=pack3x3(w1, inplanes, cin_p),
        b1=jnp.zeros((1, cout_p), jnp.float32),
        w2=pack3x3(w2, planes, cout_p),
        b2=jnp.zeros((1, cout_p), jnp.float32),
        # raw f32 weights kept only for the pure-JAX reference check
        w1_raw=w1, w2_raw=w2, wd_raw=wd,
    )
    if has_down:
        wdp = jnp.zeros((cin_p, cout_p), jnp.float32)
        wdp = wdp.at[:inplanes, :planes].set(wd[0, 0] * bn_scale)
        params['wd'] = wdp.astype(jnp.bfloat16)
        params['bd'] = jnp.zeros((1, cout_p), jnp.float32)
    return params


# ----------------------------------------------------------------------------
# Forward wrapper (layout plumbing in JAX, all compute in one pallas_call)
# ----------------------------------------------------------------------------
def basic_block_forward(params, x_nchw, row_tile=64):
    stride, planes = params['stride'], params['planes']
    cin_p, cout_p = params['cin_p'], params['cout_p']

    # NCHW -> NHWC, bf16 HBM traffic, lane-dense channel padding.
    x = jnp.transpose(x_nchw, (0, 2, 3, 1)).astype(jnp.bfloat16)
    n, hin, win, cin = x.shape
    ho = (hin - 1) // stride + 1
    wo = (win - 1) // stride + 1
    th = _pick_row_tile(ho, row_tile)
    nt = ho // th
    cpad = cin_p - cin

    if stride == 1:
        # rows padded by 2 (1 conv halo + 1 row-tile halo), cols by 1.
        xe = jnp.pad(x, ((0, 0), (2, 2), (1, 1), (0, cpad)))
        # Overlapping row slabs so plain Blocked BlockSpecs can express the halo.
        slabs = jnp.stack([xe[:, t * th:t * th + th + 4] for t in range(nt)],
                          axis=1)                    # (n, nt, th+4, win+2, cin_p)
        x_spec = pl.BlockSpec((None, None, th + 4, win + 2, cin_p),
                              lambda b, t: (b, t, 0, 0, 0))
        scratch = [pltpu.VMEM((th + 4, wo, 3 * cin_p), jnp.bfloat16),
                   pltpu.VMEM((th + 2, wo, 3 * cout_p), jnp.bfloat16)]
    else:
        assert hin % 2 == 0 and win % 2 == 0, "stride-2 path needs even H/W"
        # conv zero-pad then space-to-depth: phase p = 2*pu+pv holds
        # xq[2a+pu, 2b+pv], so the kernel only takes unit-stride slices.
        xq = jnp.pad(x, ((0, 0), (1, 1), (1, 1), (0, cpad)))
        hh, wh = (hin + 2) // 2, (win + 2) // 2      # = ho+1, wo+1
        ph = (xq.reshape(n, hh, 2, wh, 2, cin_p)
                .transpose(0, 2, 4, 1, 3, 5)
                .reshape(n, 4, hh, wh, cin_p))
        ph = jnp.pad(ph, ((0, 0), (0, 0), (1, 1), (0, 0), (0, 0)))
        slabs = jnp.stack([ph[:, :, t * th:t * th + th + 3] for t in range(nt)],
                          axis=1)                    # (n, nt, 4, th+3, wo+1, cin_p)
        x_spec = pl.BlockSpec((None, None, 4, th + 3, wo + 1, cin_p),
                              lambda b, t: (b, t, 0, 0, 0, 0))
        scratch = [pltpu.VMEM((th + 3, wo, 3 * cin_p), jnp.bfloat16),
                   pltpu.VMEM((th + 2, wo, 3 * cin_p), jnp.bfloat16),
                   pltpu.VMEM((th + 2, wo, 3 * cout_p), jnp.bfloat16)]

    def full(a):
        return pl.BlockSpec(a.shape, lambda b, t, nd=a.ndim: (0,) * nd)

    args = [slabs, params['w1'], params['b1'], params['w2'], params['b2']]
    in_specs = [x_spec, full(params['w1']), full(params['b1']),
                full(params['w2']), full(params['b2'])]
    if params['has_down']:
        args += [params['wd'], params['bd']]
        in_specs += [full(params['wd']), full(params['bd'])]

    kernel = functools.partial(
        _basic_block_kernel, stride=stride, th=th, wo=wo,
        has_down=params['has_down'], cin_p=cin_p, cout_p=cout_p)

    out = pl.pallas_call(
        kernel,
        out_shape=jax.ShapeDtypeStruct((n, ho, wo, cout_p), jnp.bfloat16),
        grid=(n, nt),
        in_specs=in_specs,
        out_specs=pl.BlockSpec((None, th, wo, cout_p),
                               lambda b, t: (b, t, 0, 0)),
        scratch_shapes=scratch,
        compiler_params=pltpu.CompilerParams(
            dimension_semantics=("parallel", "parallel"),
            vmem_limit_bytes=48 * 1024 * 1024),
    )(*args)

    return jnp.transpose(out[..., :planes], (0, 3, 1, 2))   # NHWC -> NCHW (bf16)


# ----------------------------------------------------------------------------
# Pure-JAX reference (for correctness check only)
# ----------------------------------------------------------------------------
def basic_block_reference(params, x_nchw):
    x = jnp.transpose(x_nchw, (0, 2, 3, 1)).astype(jnp.float32)
    s = 1.0 / math.sqrt(1.0 + _BN_EPS)
    stride = params['stride']
    dn = ('NHWC', 'HWIO', 'NHWC')
    h = jax.lax.conv_general_dilated(x, params['w1_raw'], (stride, stride),
                                     ((1, 1), (1, 1)), dimension_numbers=dn) * s
    h = jnp.maximum(h, 0.0)
    y = jax.lax.conv_general_dilated(h, params['w2_raw'], (1, 1),
                                     ((1, 1), (1, 1)), dimension_numbers=dn) * s
    if params['has_down']:
        ident = jax.lax.conv_general_dilated(x, params['wd_raw'],
                                             (stride, stride), ((0, 0), (0, 0)),
                                             dimension_numbers=dn) * s
    else:
        ident = x
    return jnp.transpose(jnp.maximum(y + ident, 0.0), (0, 3, 1, 2))


# ----------------------------------------------------------------------------
if __name__ == "__main__":
    key = jax.random.PRNGKey(0)
    kp1, kp2, kx = jax.random.split(key, 3)

    x = jax.random.normal(kx, (2, 16, 16, 16), jnp.float32)   # NCHW

    # Case A: identity residual (stride 1, inplanes == planes); 2 row tiles.
    pa = build_basic_block(kp1, inplanes=16, planes=16, stride=1)
    ya = basic_block_forward(pa, x, row_tile=8)
    ra = basic_block_reference(pa, x)

    # Case B: stride-2 block with the standard conv1x1+BN downsample; 2 tiles.
    pb = build_basic_block(kp2, inplanes=16, planes=32, stride=2)
    yb = basic_block_forward(pb, x, row_tile=4)
    rb = basic_block_reference(pb, x)

    jax.block_until_ready((ya, yb))
    assert ya.shape == (2, 16, 16, 16), ya.shape
    assert yb.shape == (2, 32, 8, 8), yb.shape
    for out, ref in ((ya, ra), (yb, rb)):
        out = out.astype(jnp.float32)
        assert bool(jnp.all(jnp.isfinite(out)))
        err = float(jnp.max(jnp.abs(out - ref)))
        scale = float(jnp.max(jnp.abs(ref))) + 1e-6
        assert err <= 0.05 * scale + 1e-3, (err, scale)

    print("KERNEL_OK")
</pallas_src>

<mosaic_0001>
module attributes {stable_mosaic.version = 11 : i64} {
  func.func @_basic_block_kernel(%arg0: i32, %arg1: i32, %arg2: memref<1x1x12x18x128xbf16, #tpu.memory_space<vmem>>, %arg3: memref<3x384x128xbf16, #tpu.memory_space<vmem>>, %arg4: memref<1x128xf32, #tpu.memory_space<vmem>>, %arg5: memref<3x384x128xbf16, #tpu.memory_space<vmem>>, %arg6: memref<1x128xf32, #tpu.memory_space<vmem>>, %arg7: memref<1x8x16x128xbf16, #tpu.memory_space<vmem>>, %arg8: memref<12x16x384xbf16, #tpu.memory_space<vmem>>, %arg9: memref<10x16x384xbf16, #tpu.memory_space<vmem>>) attributes {dimension_semantics = [#tpu.dimension_semantics<parallel>, #tpu.dimension_semantics<parallel>], iteration_bounds = array<i64: 2, 2>, scalar_prefetch = 0 : i64, scratch_operands = 2 : i64, tpu.core_type = #tpu.core_type<tc>, window_params = [{transform_indices = @transform_0, window_bounds = array<i64: 1, 1, 12, 18, 128>}, {pipeline_mode = #tpu.pipeline_mode<synchronous>, transform_indices = @transform_1, window_bounds = array<i64: 3, 384, 128>}, {pipeline_mode = #tpu.pipeline_mode<synchronous>, transform_indices = @transform_2, window_bounds = array<i64: 1, 128>}, {pipeline_mode = #tpu.pipeline_mode<synchronous>, transform_indices = @transform_3, window_bounds = array<i64: 3, 384, 128>}, {pipeline_mode = #tpu.pipeline_mode<synchronous>, transform_indices = @transform_4, window_bounds = array<i64: 1, 128>}, {transform_indices = @transform_5, window_bounds = array<i64: 1, 8, 16, 128>}]} {
    %c0 = arith.constant 0 : index
    %c0_0 = arith.constant 0 : index
    %c0_1 = arith.constant 0 : index
    %c0_2 = arith.constant 0 : index
    %c0_3 = arith.constant 0 : index
    %0 = vector.load %arg2[%c0, %c0_0, %c0_1, %c0_2, %c0_3] : memref<1x1x12x18x128xbf16, #tpu.memory_space<vmem>>, vector<1x1x12x16x128xbf16>
    %1 = vector.shape_cast %0 : vector<1x1x12x16x128xbf16> to vector<12x16x128xbf16>
    %c0_4 = arith.constant 0 : index
    %c0_5 = arith.constant 0 : index
    %c0_6 = arith.constant 0 : index
    %2 = vector.load %arg8[%c0_4, %c0_5, %c0_6] : memref<12x16x384xbf16, #tpu.memory_space<vmem>>, vector<12x16x128xbf16>
    tpu.vector_store %arg8[%c0_4, %c0_5, %c0_6], %1 {strides = array<i32>} : memref<12x16x384xbf16, #tpu.memory_space<vmem>>, vector<12x16x128xbf16>,
    %c0_7 = arith.constant 0 : index
    %c0_8 = arith.constant 0 : index
    %c0_9 = arith.constant 0 : index
    %c1 = arith.constant 1 : index
    %c0_10 = arith.constant 0 : index
    %3 = vector.load %arg2[%c0_7, %c0_8, %c0_9, %c1, %c0_10] : memref<1x1x12x18x128xbf16, #tpu.memory_space<vmem>>, vector<1x1x12x16x128xbf16>
    %4 = vector.shape_cast %3 : vector<1x1x12x16x128xbf16> to vector<12x16x128xbf16>
    %c0_11 = arith.constant 0 : index
    %c0_12 = arith.constant 0 : index
    %c128 = arith.constant 128 : index
    %5 = vector.load %arg8[%c0_11, %c0_12, %c128] : memref<12x16x384xbf16, #tpu.memory_space<vmem>>, vector<12x16x128xbf16>
    tpu.vector_store %arg8[%c0_11, %c0_12, %c128], %4 {strides = array<i32>} : memref<12x16x384xbf16, #tpu.memory_space<vmem>>, vector<12x16x128xbf16>,
    %c0_13 = arith.constant 0 : index
    %c0_14 = arith.constant 0 : index
    %c0_15 = arith.constant 0 : index
    %c2 = arith.constant 2 : index
    %c0_16 = arith.constant 0 : index
    %6 = vector.load %arg2[%c0_13, %c0_14, %c0_15, %c2, %c0_16] : memref<1x1x12x18x128xbf16, #tpu.memory_space<vmem>>, vector<1x1x12x16x128xbf16>
    %7 = vector.shape_cast %6 : vector<1x1x12x16x128xbf16> to vector<12x16x128xbf16>
    %c0_17 = arith.constant 0 : index
    %c0_18 = arith.constant 0 : index
    %c256 = arith.constant 256 : index
    %8 = vector.load %arg8[%c0_17, %c0_18, %c256] : memref<12x16x384xbf16, #tpu.memory_space<vmem>>, vector<12x16x128xbf16>
    tpu.vector_store %arg8[%c0_17, %c0_18, %c256], %7 {strides = array<i32>} : memref<12x16x384xbf16, #tpu.memory_space<vmem>>, vector<12x16x128xbf16>,
    %c2_19 = arith.constant 2 : index
    %c0_20 = arith.constant 0 : index
    %c128_21 = arith.constant 128 : index
    %9 = vector.load %arg8[%c2_19, %c0_20, %c128_21] : memref<12x16x384xbf16, #tpu.memory_space<vmem>>, vector<8x16x128xbf16>
    %c0_22 = arith.constant 0 : index
    %c0_23 = arith.constant 0 : index
    %c0_24 = arith.constant 0 : index
    %10 = vector.load %arg8[%c0_22, %c0_23, %c0_24] : memref<12x16x384xbf16, #tpu.memory_space<vmem>>, vector<10x16x384xbf16>
    %11 = vector.shape_cast %10 : vector<10x16x384xbf16> to vector<160x384xbf16>
    %c0_25 = arith.constant 0 : index
    %c0_26 = arith.constant 0 : index
    %c0_27 = arith.constant 0 : index
    %12 = vector.load %arg3[%c0_25, %c0_26, %c0_27] : memref<3x384x128xbf16, #tpu.memory_space<vmem>>, vector<1x384x128xbf16>
    %13 = vector.shape_cast %12 : vector<1x384x128xbf16> to vector<384x128xbf16>
    %cst = arith.constant dense<0.000000e+00> : vector<160x128xf32>
    %14 = tpu.matmul %11, %13, %cst {dimension_numbers = #tpu.dot_dimension_numbers<[1], [0], [0], [1], [0, 0, 1, 1], [], []>} : vector<160x384xbf16>, vector<384x128xbf16>, vector<160x128xf32> -> vector<160x128xf32>
    %c1_28 = arith.constant 1 : index
    %c0_29 = arith.constant 0 : index
    %c0_30 = arith.constant 0 : index
    %15 = vector.load %arg8[%c1_28, %c0_29, %c0_30] : memref<12x16x384xbf16, #tpu.memory_space<vmem>>, vector<10x16x384xbf16>
    %16 = vector.shape_cast %15 : vector<10x16x384xbf16> to vector<160x384xbf16>
    %c1_31 = arith.constant 1 : index
    %c0_32 = arith.constant 0 : index
    %c0_33 = arith.constant 0 : index
    %17 = vector.load %arg3[%c1_31, %c0_32, %c0_33] : memref<3x384x128xbf16, #tpu.memory_space<vmem>>, vector<1x384x128xbf16>
    %18 = vector.shape_cast %17 : vector<1x384x128xbf16> to vector<384x128xbf16>
    %cst_34 = arith.constant dense<0.000000e+00> : vector<160x128xf32>
    %19 = tpu.matmul %16, %18, %cst_34 {dimension_numbers = #tpu.dot_dimension_numbers<[1], [0], [0], [1], [0, 0, 1, 1], [], []>} : vector<160x384xbf16>, vector<384x128xbf16>, vector<160x128xf32> -> vector<160x128xf32>
    %20 = arith.addf %14, %19 : vector<160x128xf32>
    %c2_35 = arith.constant 2 : index
    %c0_36 = arith.constant 0 : index
    %c0_37 = arith.constant 0 : index
    %21 = vector.load %arg8[%c2_35, %c0_36, %c0_37] : memref<12x16x384xbf16, #tpu.memory_space<vmem>>, vector<10x16x384xbf16>
    %22 = vector.shape_cast %21 : vector<10x16x384xbf16> to vector<160x384xbf16>
    %c2_38 = arith.constant 2 : index
    %c0_39 = arith.constant 0 : index
    %c0_40 = arith.constant 0 : index
    %23 = vector.load %arg3[%c2_38, %c0_39, %c0_40] : memref<3x384x128xbf16, #tpu.memory_space<vmem>>, vector<1x384x128xbf16>
    %24 = vector.shape_cast %23 : vector<1x384x128xbf16> to vector<384x128xbf16>
    %cst_41 = arith.constant dense<0.000000e+00> : vector<160x128xf32>
    %25 = tpu.matmul %22, %24, %cst_41 {dimension_numbers = #tpu.dot_dimension_numbers<[1], [0], [0], [1], [0, 0, 1, 1], [], []>} : vector<160x384xbf16>, vector<384x128xbf16>, vector<160x128xf32> -> vector<160x128xf32>
    %26 = arith.addf %20, %25 : vector<160x128xf32>
    %c0_42 = arith.constant 0 : index
    %c0_43 = arith.constant 0 : index
    %27 = vector.load %arg4[%c0_42, %c0_43] : memref<1x128xf32, #tpu.memory_space<vmem>>, vector<1x128xf32>
    %28 = vector.broadcast %27 : vector<1x128xf32> to vector<160x128xf32>
    %29 = arith.addf %26, %28 : vector<160x128xf32>
    %cst_44 = arith.constant 0.000000e+00 : f32
    %30 = vector.broadcast %cst_44 : f32 to vector<160x128xf32>
    %31 = arith.maximumf %29, %30 : vector<160x128xf32>
    %32 = arith.truncf %31 : vector<160x128xf32> to vector<160x128xbf16>
    %33 = vector.shape_cast %32 : vector<160x128xbf16> to vector<10x16x128xbf16>
    %cst_45 = arith.constant 0.000000e+00 : bf16
    %34 = vector.broadcast %cst_45 : bf16 to vector<10x1x128xbf16>
    %c0_46 = arith.constant 0 : index
    %c0_47 = arith.constant 0 : index
    %c128_48 = arith.constant 128 : index
    %35 = vector.load %arg9[%c0_46, %c0_47, %c128_48] : memref<10x16x384xbf16, #tpu.memory_space<vmem>>, vector<10x16x128xbf16>
    tpu.vector_store %arg9[%c0_46, %c0_47, %c128_48], %33 {strides = array<i32>} : memref<10x16x384xbf16, #tpu.memory_space<vmem>>, vector<10x16x128xbf16>,
    %36 = vector.extract_strided_slice %33 {offsets = [0, 0, 0], sizes = [10, 15, 128], strides = [1, 1, 1]} : vector<10x16x128xbf16> to vector<10x15x128xbf16>
    %c0_49 = arith.constant 0 : index
    %c1_50 = arith.constant 1 : index
    %c0_51 = arith.constant 0 : index
    %37 = vector.load %arg9[%c0_49, %c1_50, %c0_51] : memref<10x16x384xbf16, #tpu.memory_space<vmem>>, vector<10x15x128xbf16>
    tpu.vector_store %arg9[%c0_49, %c1_50, %c0_51], %36 {strides = array<i32>} : memref<10x16x384xbf16, #tpu.memory_space<vmem>>, vector<10x15x128xbf16>,
    %c0_52 = arith.constant 0 : index
    %c0_53 = arith.constant 0 : index
    %c0_54 = arith.constant 0 : index
    %38 = vector.load %arg9[%c0_52, %c0_53, %c0_54] : memref<10x16x384xbf16, #tpu.memory_space<vmem>>, vector<10x1x128xbf16>
    tpu.vector_store %arg9[%c0_52, %c0_53, %c0_54], %34 {strides = array<i32>} : memref<10x16x384xbf16, #tpu.memory_space<vmem>>, vector<10x1x128xbf16>,
    %39 = vector.extract_strided_slice %33 {offsets = [0, 1, 0], sizes = [10, 15, 128], strides = [1, 1, 1]} : vector<10x16x128xbf16> to vector<10x15x128xbf16>
    %c0_55 = arith.constant 0 : index
    %c0_56 = arith.constant 0 : index
    %c256_57 = arith.constant 256 : index
    %40 = vector.load %arg9[%c0_55, %c0_56, %c256_57] : memref<10x16x384xbf16, #tpu.memory_space<vmem>>, vector<10x15x128xbf16>
    tpu.vector_store %arg9[%c0_55, %c0_56, %c256_57], %39 {strides = array<i32>} : memref<10x16x384xbf16, #tpu.memory_space<vmem>>, vector<10x15x128xbf16>,
    %c0_58 = arith.constant 0 : index
    %c15 = arith.constant 15 : index
    %c256_59 = arith.constant 256 : index
    %41 = vector.load %arg9[%c0_58, %c15, %c256_59] : memref<10x16x384xbf16, #tpu.memory_space<vmem>>, vector<10x1x128xbf16>
    tpu.vector_store %arg9[%c0_58, %c15, %c256_59], %34 {strides = array<i32>} : memref<10x16x384xbf16, #tpu.memory_space<vmem>>, vector<10x1x128xbf16>,
    %c0_i32 = arith.constant 0 : i32
    %42 = arith.cmpi eq, %arg1, %c0_i32 : i32
    %43 = arith.extui %42 : i1 to i32
    %c0_i32_60 = arith.constant 0 : i32
    %44 = arith.cmpi ne, %43, %c0_i32_60 : i32
    scf.if %44 {
      %cst_90 = arith.constant 0.000000e+00 : bf16
      %78 = vector.broadcast %cst_90 : bf16 to vector<1x16x384xbf16>
      %c0_91 = arith.constant 0 : index
      %c0_92 = arith.constant 0 : index
      %c0_93 = arith.constant 0 : index
      %79 = vector.load %arg9[%c0_91, %c0_92, %c0_93] : memref<10x16x384xbf16, #tpu.memory_space<vmem>>, vector<1x16x384xbf16>
      tpu.vector_store %arg9[%c0_91, %c0_92, %c0_93], %78 {strides = array<i32>} : memref<10x16x384xbf16, #tpu.memory_space<vmem>>, vector<1x16x384xbf16>,
    } else {
    }
    %c1_i32 = arith.constant 1 : i32
    %45 = arith.cmpi eq, %arg1, %c1_i32 : i32
    %46 = arith.extui %45 : i1 to i32
    %c0_i32_61 = arith.constant 0 : i32
    %47 = arith.cmpi ne, %46, %c0_i32_61 : i32
    scf.if %47 {
      %cst_90 = arith.constant 0.000000e+00 : bf16
      %78 = vector.broadcast %cst_90 : bf16 to vector<1x16x384xbf16>
      %c9 = arith.constant 9 : index
      %c0_91 = arith.constant 0 : index
      %c0_92 = arith.constant 0 : index
      %79 = vector.load %arg9[%c9, %c0_91, %c0_92] : memref<10x16x384xbf16, #tpu.memory_space<vmem>>, vector<1x16x384xbf16>
      tpu.vector_store %arg9[%c9, %c0_91, %c0_92], %78 {strides = array<i32>} : memref<10x16x384xbf16, #tpu.memory_space<vmem>>, vector<1x16x384xbf16>,
    } else {
    }
    %c0_62 = arith.constant 0 : index
    %c0_63 = arith.constant 0 : index
    %c0_64 = arith.constant 0 : index
    %48 = vector.load %arg9[%c0_62, %c0_63, %c0_64] : memref<10x16x384xbf16, #tpu.memory_space<vmem>>, vector<8x16x384xbf16>
    %49 = vector.shape_cast %48 : vector<8x16x384xbf16> to vector<128x384xbf16>
    %c0_65 = arith.constant 0 : index
    %c0_66 = arith.constant 0 : index
    %c0_67 = arith.constant 0 : index
    %50 = vector.load %arg5[%c0_65, %c0_66, %c0_67] : memref<3x384x128xbf16, #tpu.memory_space<vmem>>, vector<1x384x128xbf16>
    %51 = vector.shape_cast %50 : vector<1x384x128xbf16> to vector<384x128xbf16>
    %cst_68 = arith.constant dense<0.000000e+00> : vector<128x128xf32>
    %52 = tpu.matmul %49, %51, %cst_68 {dimension_numbers = #tpu.dot_dimension_numbers<[1], [0], [0], [1], [0, 0, 1, 1], [], []>} : vector<128x384xbf16>, vector<384x128xbf16>, vector<128x128xf32> -> vector<128x128xf32>
    %c1_69 = arith.constant 1 : index
    %c0_70 = arith.constant 0 : index
    %c0_71 = arith.constant 0 : index
    %53 = vector.load %arg9[%c1_69, %c0_70, %c0_71] : memref<10x16x384xbf16, #tpu.memory_space<vmem>>, vector<8x16x384xbf16>
    %54 = vector.shape_cast %53 : vector<8x16x384xbf16> to vector<128x384xbf16>
    %c1_72 = arith.constant 1 : index
    %c0_73 = arith.constant 0 : index
    %c0_74 = arith.constant 0 : index
    %55 = vector.load %arg5[%c1_72, %c0_73, %c0_74] : memref<3x384x128xbf16, #tpu.memory_space<vmem>>, vector<1x384x128xbf16>
    %56 = vector.shape_cast %55 : vector<1x384x128xbf16> to vector<384x128xbf16>
    %cst_75 = arith.constant dense<0.000000e+00> : vector<128x128xf32>
    %57 = tpu.matmul %54, %56, %cst_75 {dimension_numbers = #tpu.dot_dimension_numbers<[1], [0], [0], [1], [0, 0, 1, 1], [], []>} : vector<128x384xbf16>, vector<384x128xbf16>, vector<128x128xf32> -> vector<128x128xf32>
    %58 = arith.addf %52, %57 : vector<128x128xf32>
    %c2_76 = arith.constant 2 : index
    %c0_77 = arith.constant 0 : index
    %c0_78 = arith.constant 0 : index
    %59 = vector.load %arg9[%c2_76, %c0_77, %c0_78] : memref<10x16x384xbf16, #tpu.memory_space<vmem>>, vector<8x16x384xbf16>
    %60 = vector.shape_cast %59 : vector<8x16x384xbf16> to vector<128x384xbf16>
    %c2_79 = arith.constant 2 : index
    %c0_80 = arith.constant 0 : index
    %c0_81 = arith.constant 0 : index
    %61 = vector.load %arg5[%c2_79, %c0_80, %c0_81] : memref<3x384x128xbf16, #tpu.memory_space<vmem>>, vector<1x384x128xbf16>
    %62 = vector.shape_cast %61 : vector<1x384x128xbf16> to vector<384x128xbf16>
    %cst_82 = arith.constant dense<0.000000e+00> : vector<128x128xf32>
    %63 = tpu.matmul %60, %62, %cst_82 {dimension_numbers = #tpu.dot_dimension_numbers<[1], [0], [0], [1], [0, 0, 1, 1], [], []>} : vector<128x384xbf16>, vector<384x128xbf16>, vector<128x128xf32> -> vector<128x128xf32>
    %64 = arith.addf %58, %63 : vector<128x128xf32>
    %c0_83 = arith.constant 0 : index
    %c0_84 = arith.constant 0 : index
    %65 = vector.load %arg6[%c0_83, %c0_84] : memref<1x128xf32, #tpu.memory_space<vmem>>, vector<1x128xf32>
    %66 = vector.broadcast %65 : vector<1x128xf32> to vector<128x128xf32>
    %67 = arith.addf %64, %66 : vector<128x128xf32>
    %68 = vector.shape_cast %9 : vector<8x16x128xbf16> to vector<128x128xbf16>
    %69 = arith.extf %68 : vector<128x128xbf16> to vector<128x128xf32>
    %70 = arith.addf %67, %69 : vector<128x128xf32>
    %cst_85 = arith.constant 0.000000e+00 : f32
    %71 = vector.broadcast %cst_85 : f32 to vector<128x128xf32>
    %72 = arith.maximumf %70, %71 : vector<128x128xf32>
    %73 = vector.shape_cast %72 : vector<128x128xf32> to vector<8x16x128xf32>
    %74 = arith.truncf %73 : vector<8x16x128xf32> to vector<8x16x128xbf16>
    %c0_86 = arith.constant 0 : index
    %c0_87 = arith.constant 0 : index
    %c0_88 = arith.constant 0 : index
    %c0_89 = arith.constant 0 : index
    %75 = vector.load %arg7[%c0_86, %c0_87, %c0_88, %c0_89] : memref<1x8x16x128xbf16, #tpu.memory_space<vmem>>, vector<1x8x16x128xbf16>
    %76 = vector.shape_cast %75 : vector<1x8x16x128xbf16> to vector<8x16x128xbf16>
    %77 = vector.shape_cast %74 : vector<8x16x128xbf16> to vector<1x8x16x128xbf16>
    tpu.vector_store %arg7[%c0_86, %c0_87, %c0_88, %c0_89], %77 {strides = array<i32>} : memref<1x8x16x128xbf16, #tpu.memory_space<vmem>>, vector<1x8x16x128xbf16>,
    return
  }
  func.func @transform_0(%arg0: i32, %arg1: i32) -> (i32, i32, i32, i32, i32) {
    %c0_i32 = arith.constant 0 : i32
    %c0_i32_0 = arith.constant 0 : i32
    %c0_i32_1 = arith.constant 0 : i32
    %c0_i32_2 = arith.constant 0 : i32
    return %arg0, %arg1, %c0_i32, %c0_i32_0, %c0_i32_1 : i32, i32, i32, i32, i32
  }
  func.func @transform_1(%arg0: i32, %arg1: i32) -> (i32, i32, i32) {
    %c0_i32 = arith.constant 0 : i32
    %c0_i32_0 = arith.constant 0 : i32
    %c0_i32_1 = arith.constant 0 : i32
    %c0_i32_2 = arith.constant 0 : i32
    return %c0_i32, %c0_i32_0, %c0_i32_1 : i32, i32, i32
  }
  func.func @transform_2(%arg0: i32, %arg1: i32) -> (i32, i32) {
    %c0_i32 = arith.constant 0 : i32
    %c0_i32_0 = arith.constant 0 : i32
    %c0_i32_1 = arith.constant 0 : i32
    return %c0_i32, %c0_i32_0 : i32, i32
  }
  func.func @transform_3(%arg0: i32, %arg1: i32) -> (i32, i32, i32) {
    %c0_i32 = arith.constant 0 : i32
    %c0_i32_0 = arith.constant 0 : i32
    %c0_i32_1 = arith.constant 0 : i32
    %c0_i32_2 = arith.constant 0 : i32
    return %c0_i32, %c0_i32_0, %c0_i32_1 : i32, i32, i32
  }
  func.func @transform_4(%arg0: i32, %arg1: i32) -> (i32, i32) {
    %c0_i32 = arith.constant 0 : i32
    %c0_i32_0 = arith.constant 0 : i32
    %c0_i32_1 = arith.constant 0 : i32
    return %c0_i32, %c0_i32_0 : i32, i32
  }
  func.func @transform_5(%arg0: i32, %arg1: i32) -> (i32, i32, i32, i32) {
    %c0_i32 = arith.constant 0 : i32
    %c0_i32_0 = arith.constant 0 : i32
    %c0_i32_1 = arith.constant 0 : i32
    return %arg0, %arg1, %c0_i32, %c0_i32_0 : i32, i32, i32, i32
  }
}

</mosaic_0001>

<llo_original>
// kernel: tpu_custom_call.1
$region0: #{tpu_custom_call.1}
  #allocation0 [shape = 'u32[]', space=smem, size = 0x4, offset = 0x4, fixed_abs, tag = 'smem constant byte address 0x4 - core index']
  #allocation1 [shape = 'u32[144,128]{1,0:T(1,128)}', space=vmem, size = 0x12000, scoped, tag = 'internal scratch']
  #allocation2 [shape = 'bf16[12,16,384]{2,1,0:T(16,128)(2,1)}', space=vmem, size = 0x24000, scoped, tag = 'scratch operand']
  #allocation3 [shape = 'bf16[10,16,384]{2,1,0:T(16,128)(2,1)}', space=vmem, size = 0x1e000, scoped, tag = 'scratch operand']
  %s0 = inlined_call_operand.vmem [shape: bf16[2,2,12,18,128], index: 0, kind: input, shape index: {}]
  %s1 = inlined_call_operand.vmem [shape: bf16[3,384,128], index: 1, kind: input, shape index: {}]
  %s2 = inlined_call_operand.vmem [shape: f32[1,128], index: 2, kind: input, shape index: {}]
  %s3 = inlined_call_operand.hbm [shape: bf16[3,384,128], index: 3, kind: input, shape index: {}]
  %s4 = inlined_call_operand.vmem [shape: f32[1,128], index: 4, kind: input, shape index: {}]
  %s5 = inlined_call_operand.hbm [shape: bf16[2,16,16,128], index: 5, kind: output, shape index: {}]
  %s6 = sld [smem:[#allocation0]]
  $region65: #{tpu_custom_call.1} parent=0
    _
  %s8 = ssub.s32 1, %s6
  %s9 = scalar_select 0, %s8, %s6
  $region1: #{tpu_custom_call.1} parent=0
    #allocation4 [shape = 'u8[294912]{0}', space=vmem, size = 0x48000, scoped, tag = 'input window, operand 3, single buffered']
    #allocation5 [shape = 's32[2]{0}', space=sflag, size = 0x8, scoped, tag = 'scoped memory for tpu_custom_call.1']
    #allocation6 [shape = 's32[2]{0}', space=sflag, size = 0x8, scoped, tag = 'scoped memory for tpu_custom_call.1']
    #allocation7 [shape = 'u8[65536]{0}', space=vmem, size = 0x10000, scoped, tag = 'output window, operand 0']
    %10 = vsyncpa [#allocation5], 0
    %11 = vsyncpa [#allocation6], 0
    %s12 = scalar_lea.sflag [#allocation6], 1
    %13 = vsyncpa %s12, 0
    loop: start=0, step=1, limit=6
    $region2: #{tpu_custom_call.1} parent=1 // loop_pre_header
      _
    $region3: #{tpu_custom_call.1} parent=1 // loop_header
      %s15 = sphi 0, %s19
      %p16 = scmp.ge.s32.totalorder %s15, 6
      %s22 = sphi 0, %s34
      %s23 = sphi 0, %s30
      %s24 = sphi 0, %s22
      %s25 = sphi 0, %s23
      %s26 = sphi 0, %s24
      %s27 = sphi 0, %s25
      %s39 = sphi 0, %s41
      %s42 = sphi 0, %s39
      %s43 = sphi 0, %s42
      %s59 = sphi 0, %s43
      %s63 = sphi 0, %s63
      %s65 = sphi 0, %s63
      %s66 = sphi 0, %s65
      %s80 = sphi 0, %s66
      %s84 = sphi 0, %s84
      %s86 = sphi 0, %s84
      %s87 = sphi 0, %s86
      %s101 = sphi 0, %s87
      %s105 = sphi 0, %s105
      %s107 = sphi 0, %s105
      %s108 = sphi 0, %s107
      %s122 = sphi 0, %s108
      %s126 = sphi 0, %s126
      %s128 = sphi 0, %s126
      %s129 = sphi 0, %s128
      %s143 = sphi 0, %s129
      %s151 = sphi 0, %s153
      %s154 = sphi 0, %s151
      %s155 = sphi 0, %s154
      %s171 = sphi 0, %s155
    $region4: #{tpu_custom_call.1} parent=1 // loop_header_branch
      %18 = sbr.rel (%p16) target = $region8
    $region5: #{tpu_custom_call.1} parent=1 // loop_body
      %s20 = ssub.s32 %s15, 1
      %s21 = ssub.s32 %s15, 2
      %s28 = sadd.s32 1, %s23
      %p29 = scmp.ge.s32.totalorder %s28, 2
      %s30 = scalar_select %p29, 0, %s28
      %s31 = sadd.s32 1, %s22
      %s32 = scalar_select %p29, %s31, %s22
      %p33 = scmp.ge.s32.totalorder %s32, 2
      %s34 = scalar_select %p33, 0, %s32
      %s35 = ssub.s32 %s22, %s34
      %s36 = ssub.s32 %s23, %s30
      %s37 = sor.u32 %s35, %s36
      %p38 = scmp.eq.s32.totalorder %s37, 0
      %s40 = sadd.s32 %s39, 1
      %s41 = scalar_select %p38, %s39, %s40
      %p44 = pneg %p38
      %p45 = scmp.eq.s32.totalorder %s15, 3
      %p46 = por %p44, %p45
      %p47 = scmp.ne.s32.totalorder %s39, %s42
      %p48 = scmp.eq.s32.totalorder %s15, 0
      %p49 = por %p47, %p48
      %p50 = scmp.ne.s32.totalorder %s39, %s42
      %p51 = scmp.eq.s32.totalorder %s20, 3
      %p52 = por %p50, %p51
      %p53 = scmp.ne.s32.totalorder %s42, %s43
      %p54 = scmp.eq.s32.totalorder %s20, 0
      %p55 = por %p53, %p54
      %p56 = scmp.ne.s32.totalorder %s42, %s43
      %p57 = scmp.eq.s32.totalorder %s21, 3
      %p58 = por %p56, %p57
      %p60 = scmp.ne.s32.totalorder %s43, %s59
      %p61 = scmp.eq.s32.totalorder %s21, 0
      %p62 = por %p60, %p61
      %s64 = sadd.s32 %s63, 1
      %p67 = scmp.eq.s32.totalorder %s15, 3
      %p68 = scmp.ne.s32.totalorder %s63, %s65
      %p69 = scmp.eq.s32.totalorder %s15, 0
      %p70 = por %p68, %p69
      %p71 = scmp.ne.s32.totalorder %s63, %s65
      %p72 = scmp.eq.s32.totalorder %s20, 3
      %p73 = por %p71, %p72
      %p74 = scmp.ne.s32.totalorder %s65, %s66
      %p75 = scmp.eq.s32.totalorder %s20, 0
      %p76 = por %p74, %p75
      %p77 = scmp.ne.s32.totalorder %s65, %s66
      %p78 = scmp.eq.s32.totalorder %s21, 3
      %p79 = por %p77, %p78
      %p81 = scmp.ne.s32.totalorder %s66, %s80
      %p82 = scmp.eq.s32.totalorder %s21, 0
      %p83 = por %p81, %p82
      %s85 = sadd.s32 %s84, 1
      %p88 = scmp.eq.s32.totalorder %s15, 3
      %p89 = scmp.ne.s32.totalorder %s84, %s86
      %p90 = scmp.eq.s32.totalorder %s15, 0
      %p91 = por %p89, %p90
      %p92 = scmp.ne.s32.totalorder %s84, %s86
      %p93 = scmp.eq.s32.totalorder %s20, 3
      %p94 = por %p92, %p93
      %p95 = scmp.ne.s32.totalorder %s86, %s87
      %p96 = scmp.eq.s32.totalorder %s20, 0
      %p97 = por %p95, %p96
      %p98 = scmp.ne.s32.totalorder %s86, %s87
      %p99 = scmp.eq.s32.totalorder %s21, 3
      %p100 = por %p98, %p99
      %p102 = scmp.ne.s32.totalorder %s87, %s101
      %p103 = scmp.eq.s32.totalorder %s21, 0
      %p104 = por %p102, %p103
      %s106 = sadd.s32 %s105, 1
      %p109 = scmp.eq.s32.totalorder %s15, 3
      %p110 = scmp.ne.s32.totalorder %s105, %s107
      %p111 = scmp.eq.s32.totalorder %s15, 0
      %p112 = por %p110, %p111
      %p113 = scmp.ne.s32.totalorder %s105, %s107
      %p114 = scmp.eq.s32.totalorder %s20, 3
      %p115 = por %p113, %p114
      %p116 = scmp.ne.s32.totalorder %s107, %s108
      %p117 = scmp.eq.s32.totalorder %s20, 0
      %p118 = por %p116, %p117
      %p119 = scmp.ne.s32.totalorder %s107, %s108
      %p120 = scmp.eq.s32.totalorder %s21, 3
      %p121 = por %p119, %p120
      %p123 = scmp.ne.s32.totalorder %s108, %s122
      %p124 = scmp.eq.s32.totalorder %s21, 0
      %p125 = por %p123, %p124
      %s127 = sadd.s32 %s126, 1
      %p130 = scmp.eq.s32.totalorder %s15, 3
      %p131 = scmp.ne.s32.totalorder %s126, %s128
      %p132 = scmp.eq.s32.totalorder %s15, 0
      %p133 = por %p131, %p132
      %p134 = scmp.ne.s32.totalorder %s126, %s128
      %p135 = scmp.eq.s32.totalorder %s20, 3
      %p136 = por %p134, %p135
      %p137 = scmp.ne.s32.totalorder %s128, %s129
      %p138 = scmp.eq.s32.totalorder %s20, 0
      %p139 = por %p137, %p138
      %p140 = scmp.ne.s32.totalorder %s128, %s129
      %p141 = scmp.eq.s32.totalorder %s21, 3
      %p142 = por %p140, %p141
      %p144 = scmp.ne.s32.totalorder %s129, %s143
      %p145 = scmp.eq.s32.totalorder %s21, 0
      %p146 = por %p144, %p145
      %s147 = ssub.s32 %s22, %s34
      %s148 = ssub.s32 %s23, %s30
      %s149 = sor.u32 %s147, %s148
      %p150 = scmp.eq.s32.totalorder %s149, 0
      %s152 = sadd.s32 %s151, 1
      %s153 = scalar_select %p150, %s151, %s152
      %p156 = pneg %p150
      %p157 = scmp.eq.s32.totalorder %s15, 3
      %p158 = por %p156, %p157
      %p159 = scmp.ne.s32.totalorder %s151, %s154
      %p160 = scmp.eq.s32.totalorder %s15, 0
      %p161 = por %p159, %p160
      %p162 = scmp.ne.s32.totalorder %s151, %s154
      %p163 = scmp.eq.s32.totalorder %s20, 3
      %p164 = por %p162, %p163
      %p165 = scmp.ne.s32.totalorder %s154, %s155
      %p166 = scmp.eq.s32.totalorder %s20, 0
      %p167 = por %p165, %p166
      %p168 = scmp.ne.s32.totalorder %s154, %s155
      %p169 = scmp.eq.s32.totalorder %s21, 3
      %p170 = por %p168, %p169
      %p172 = scmp.ne.s32.totalorder %s155, %s171
      %p173 = scmp.eq.s32.totalorder %s21, 0
      %p174 = por %p172, %p173
      %p175 = scmp.le.s32.totalorder 1, %s15
      %p176 = scmp.lt.s32.totalorder %s15, 5
      %p177 = pnand %p175, %p176
      %p178 = pneg %p177
      // Predicated region
      $region9: #{tpu_custom_call.1} parent=5 // pred_check
        _
      $region10: #{tpu_custom_call.1} parent=5 // pred_check_branch
        %180 = sbr.rel (%p177) target = $region12
      $region11: #{tpu_custom_call.1} parent=5 // pred_region
        %s181 = ssub.s32 %s15, 1
        // Predicated region
        $region13: #{tpu_custom_call.1} parent=11 // pred_check
          %p182 = pneg %p76
        $region14: #{tpu_custom_call.1} parent=11 // pred_check_branch
          %184 = sbr.rel (%p182) target = $region16
        $region15: #{tpu_custom_call.1} parent=11 // pred_region
          _
        $region16: #{tpu_custom_call.1} parent=11 // pred_fallthru
          _
        // Predicated region
        $region17: #{tpu_custom_call.1} parent=11 // pred_check
          %p185 = pneg %p97
        $region18: #{tpu_custom_call.1} parent=11 // pred_check_branch
          %187 = sbr.rel (%p185) target = $region20
        $region19: #{tpu_custom_call.1} parent=11 // pred_region
          _
        $region20: #{tpu_custom_call.1} parent=11 // pred_fallthru
          _
        // Predicated region
        $region21: #{tpu_custom_call.1} parent=11 // pred_check
          %p188 = pneg %p118
        $region22: #{tpu_custom_call.1} parent=11 // pred_check_branch
          %190 = sbr.rel (%p188) target = $region24
        $region23: #{tpu_custom_call.1} parent=11 // pred_region
          %s192 = ssub.s32 9216, 9216
          %193 = vsyncadd [#allocation5], %s192
          %s194 = sshll.u32 [#allocation4], 4
          %s195 = int_to_ptr.vmem [resolvable:$true] %s194
          %200 = dma.hbm_to_vmem [thread:$0]  %s3, 9216, %s195, [#allocation5], 64, 64, 4
        $region24: #{tpu_custom_call.1} parent=11 // pred_fallthru
          _
        // Predicated region
        $region25: #{tpu_custom_call.1} parent=11 // pred_check
          %p201 = pneg %p139
        $region26: #{tpu_custom_call.1} parent=11 // pred_check_branch
          %203 = sbr.rel (%p201) target = $region28
        $region27: #{tpu_custom_call.1} parent=11 // pred_region
          _
        $region28: #{tpu_custom_call.1} parent=11 // pred_fallthru
          _
      $region12: #{tpu_custom_call.1} parent=5 // pred_fallthru
        _
      %p204 = scmp.lt.s32.totalorder %s15, 4
      // Predicated region
      $region29: #{tpu_custom_call.1} parent=5 // pred_check
        %p205 = pneg %p204
      $region30: #{tpu_custom_call.1} parent=5 // pred_check_branch
        %207 = sbr.rel (%p205) target = $region32
      $region31: #{tpu_custom_call.1} parent=5 // pred_region
        // Predicated region
        $region33: #{tpu_custom_call.1} parent=31 // pred_check
          %p208 = pneg %p49
        $region34: #{tpu_custom_call.1} parent=31 // pred_check_branch
          %210 = sbr.rel (%p208) target = $region36
        $region35: #{tpu_custom_call.1} parent=31 // pred_region
          %p211 = scmp.lt.s32.totalorder %s22, 1
          %s212 = scalar_select %p211, %s22, 1
          %p213 = scmp.lt.s32.totalorder %s23, 1
          %s214 = scalar_select %p213, %s23, 1
          %s215 = smul.addr %s214, 36
          %s216 = smul.addr %s212, 72
          %s217 = sadd.s32 %s215, %s216
          %s218 = smul.addr %s217, 4
          %s219 = scalar_lea.vmem %s0, %s218
        $region36: #{tpu_custom_call.1} parent=31 // pred_fallthru
          _
      $region32: #{tpu_custom_call.1} parent=5 // pred_fallthru
        _
      %p220 = scmp.le.s32.totalorder 1, %s15
      %p221 = scmp.lt.s32.totalorder %s15, 5
      %p222 = pnand %p220, %p221
      %p223 = pneg %p222
      // Predicated region
      $region37: #{tpu_custom_call.1} parent=5 // pred_check
        _
      $region38: #{tpu_custom_call.1} parent=5 // pred_check_branch
        %225 = sbr.rel (%p222) target = $region40
      $region39: #{tpu_custom_call.1} parent=5 // pred_region
        %s226 = ssub.s32 %s15, 1
        // Predicated region
        $region41: #{tpu_custom_call.1} parent=39 // pred_check
          %p227 = pneg %p118
        $region42: #{tpu_custom_call.1} parent=39 // pred_check_branch
          %229 = sbr.rel (%p227) target = $region44
        $region43: #{tpu_custom_call.1} parent=39 // pred_region
          %230 = dma.done [#allocation5], 9216
        $region44: #{tpu_custom_call.1} parent=39 // pred_fallthru
          _
        %p231 = scmp.lt.s32.totalorder %s24, 1
        %s232 = scalar_select %p231, %s24, 1
        %p233 = scmp.lt.s32.totalorder %s25, 1
        %s234 = scalar_select %p233, %s25, 1
        %s235 = smul.addr %s234, 36
        %s236 = smul.addr %s232, 72
        %s237 = sadd.s32 %s235, %s236
        %s238 = smul.addr %s237, 4
        %s239 = scalar_lea.vmem %s0, %s238
        %p240 = pneg %p55
        %p241 = pneg %p52
        %p242 = pneg %p76
        %p243 = pneg %p73
        %p244 = pneg %p97
        %p245 = pneg %p94
        %p246 = pneg %p118
        %p247 = pneg %p115
        %p248 = pneg %p139
        %p249 = pneg %p136
        %p250 = pneg %p167
        %p251 = pneg %p164
        %s252 = sand.u32 %s154, 1
        %s253 = scalar_lea.sflag [#allocation6], %s252
        %s254 = sand.u32 %s154, 1
        %s255 = smul.addr %s254, 64
        %s256 = scalar_lea.vmem [#allocation7], %s255
        %p257 = scmp.lt.s32.totalorder %s24, 1
        %s258 = scalar_select %p257, %s24, 1
        %p259 = scmp.lt.s32.totalorder %s25, 1
        %s260 = scalar_select %p259, %s25, 1
        %s261 = smul.addr %s260, 36
        %s262 = smul.addr %s258, 72
        %s263 = sadd.s32 %s261, %s262
        %s264 = smul.addr %s263, 4
        %s265 = scalar_lea.vmem %s0, %s264
        %s266 = smul.u32 8, %s25
        %v268 = vld [vmem:[%s265] sm:$0xf]
        %v269 = vld [vmem:[%s265 + $0x4] sm:$0xf]
        %v270 = vld [vmem:[%s265 + $0xc] sm:$0xf]
        %v271 = vld [vmem:[%s265 + $0x10] sm:$0xf]
        %v272 = vld [vmem:[%s265 + $0x18] sm:$0xf]
        %v273 = vld [vmem:[%s265 + $0x1c] sm:$0xf]
        %v274 = vld [vmem:[%s265 + $0x24] sm:$0xf]
        %v275 = vld [vmem:[%s265 + $0x28] sm:$0xf]
        %v276 = vld [vmem:[%s265 + $0x30] sm:$0xf]
        %v277 = vld [vmem:[%s265 + $0x34] sm:$0xf]
        %v278 = vld [vmem:[%s265 + $0x3c] sm:$0xf]
        %v279 = vld [vmem:[%s265 + $0x40] sm:$0xf]
        %v280 = vld [vmem:[%s265 + $0x48] sm:$0xf]
        %v281 = vld [vmem:[%s265 + $0x4c] sm:$0xf]
        %v282 = vld [vmem:[%s265 + $0x54] sm:$0xf]
        %v283 = vld [vmem:[%s265 + $0x58] sm:$0xf]
        %v284 = vld [vmem:[%s265 + $0x60] sm:$0xf]
        %v285 = vld [vmem:[%s265 + $0x64] sm:$0xf]
        %v286 = vld [vmem:[%s265 + $0x6c] sm:$0xf]
        %v287 = vld [vmem:[%s265 + $0x70] sm:$0xf]
        %v288 = vld [vmem:[%s265 + $0x78] sm:$0xf]
        %v289 = vld [vmem:[%s265 + $0x7c] sm:$0xf]
        %v290 = vld [vmem:[%s265 + $0x84] sm:$0xf]
        %v291 = vld [vmem:[%s265 + $0x88] sm:$0xf]
        %v316 = vunpack.c.l.b16 %v268
        %v317 = vunpack.c.l.b16 %v269
        %v318 = vunpack.c.l.b16 %v270
        %v319 = vunpack.c.l.b16 %v271
        %v320 = vunpack.c.l.b16 %v272
        %v321 = vunpack.c.l.b16 %v273
        %v322 = vunpack.c.l.b16 %v274
        %v323 = vunpack.c.l.b16 %v275
        %v324 = vunpack.c.l.b16 %v276
        %v325 = vunpack.c.l.b16 %v277
        %v326 = vunpack.c.l.b16 %v278
        %v327 = vunpack.c.l.b16 %v279
        %v328 = vunpack.c.l.b16 %v280
        %v329 = vunpack.c.l.b16 %v281
        %v330 = vunpack.c.l.b16 %v282
        %v331 = vunpack.c.l.b16 %v283
        %v332 = vunpack.c.l.b16 %v284
        %v333 = vunpack.c.l.b16 %v285
        %v334 = vunpack.c.l.b16 %v286
        %v335 = vunpack.c.l.b16 %v287
        %v336 = vunpack.c.l.b16 %v288
        %v337 = vunpack.c.l.b16 %v289
        %v338 = vunpack.c.l.b16 %v290
        %v339 = vunpack.c.l.b16 %v291
        %v340 = vpack.c.b16 %v317, %v316
        %v341 = vpack.c.b16 %v319, %v318
        %v342 = vpack.c.b16 %v321, %v320
        %v343 = vpack.c.b16 %v323, %v322
        %v344 = vpack.c.b16 %v325, %v324
        %v345 = vpack.c.b16 %v327, %v326
        %v346 = vpack.c.b16 %v329, %v328
        %v347 = vpack.c.b16 %v331, %v330
        %v348 = vpack.c.b16 %v333, %v332
        %v349 = vpack.c.b16 %v335, %v334
        %v350 = vpack.c.b16 %v337, %v336
        %v351 = vpack.c.b16 %v339, %v338
        %364 = vst [vmem:[#allocation2] sm:$0xff] %v340
        %365 = vst [vmem:[#allocation2 + $0x18] sm:$0xff] %v341
        %366 = vst [vmem:[#allocation2 + $0x30] sm:$0xff] %v342
        %367 = vst [vmem:[#allocation2 + $0x48] sm:$0xff] %v343
        %368 = vst [vmem:[#allocation2 + $0x60] sm:$0xff] %v344
        %369 = vst [vmem:[#allocation2 + $0x78] sm:$0xff] %v345
        %370 = vst [vmem:[#allocation2 + $0x90] sm:$0xff] %v346
        %371 = vst [vmem:[#allocation2 + $0xa8] sm:$0xff] %v347
        %372 = vst [vmem:[#allocation2 + $0xc0] sm:$0xff] %v348
        %373 = vst [vmem:[#allocation2 + $0xd8] sm:$0xff] %v349
        %374 = vst [vmem:[#allocation2 + $0xf0] sm:$0xff] %v350
        %375 = vst [vmem:[#allocation2 + $0x108] sm:$0xff] %v351
        %v376 = vld [vmem:[%s265] sm:$0xf]
        %v377 = vld [vmem:[%s265 + $0x4] sm:$0xf]
        %v378 = vld [vmem:[%s265 + $0x8] sm:$0x1]
        %v379 = vld [vmem:[%s265 + $0xc] sm:$0xf]
        %v380 = vld [vmem:[%s265 + $0x10] sm:$0xf]
        %v381 = vld [vmem:[%s265 + $0x14] sm:$0x1]
        %v382 = vld [vmem:[%s265 + $0x18] sm:$0xf]
        %v383 = vld [vmem:[%s265 + $0x1c] sm:$0xf]
        %v384 = vld [vmem:[%s265 + $0x20] sm:$0x1]
        %v385 = vld [vmem:[%s265 + $0x24] sm:$0xf]
        %v386 = vld [vmem:[%s265 + $0x28] sm:$0xf]
        %v387 = vld [vmem:[%s265 + $0x2c] sm:$0x1]
        %v388 = vld [vmem:[%s265 + $0x30] sm:$0xf]
        %v389 = vld [vmem:[%s265 + $0x34] sm:$0xf]
        %v390 = vld [vmem:[%s265 + $0x38] sm:$0x1]
        %v391 = vld [vmem:[%s265 + $0x3c] sm:$0xf]
        %v392 = vld [vmem:[%s265 + $0x40] sm:$0xf]
        %v393 = vld [vmem:[%s265 + $0x44] sm:$0x1]
        %v394 = vld [vmem:[%s265 + $0x48] sm:$0xf]
        %v395 = vld [vmem:[%s265 + $0x4c] sm:$0xf]
        %v396 = vld [vmem:[%s265 + $0x50] sm:$0x1]
        %v397 = vld [vmem:[%s265 + $0x54] sm:$0xf]
        %v398 = vld [vmem:[%s265 + $0x58] sm:$0xf]
        %v399 = vld [vmem:[%s265 + $0x5c] sm:$0x1]
        %v400 = vld [vmem:[%s265 + $0x60] sm:$0xf]
        %v401 = vld [vmem:[%s265 + $0x64] sm:$0xf]
        %v402 = vld [vmem:[%s265 + $0x68] sm:$0x1]
        %v403 = vld [vmem:[%s265 + $0x6c] sm:$0xf]
        %v404 = vld [vmem:[%s265 + $0x70] sm:$0xf]
        %v405 = vld [vmem:[%s265 + $0x74] sm:$0x1]
        %v406 = vld [vmem:[%s265 + $0x78] sm:$0xf]
        %v407 = vld [vmem:[%s265 + $0x7c] sm:$0xf]
        %v408 = vld [vmem:[%s265 + $0x80] sm:$0x1]
        %v409 = vld [vmem:[%s265 + $0x84] sm:$0xf]
        %v410 = vld [vmem:[%s265 + $0x88] sm:$0xf]
        %v411 = vld [vmem:[%s265 + $0x8c] sm:$0x1]
        %v448 = vunpack.c.l.b16 %v376
        %v449 = vunpack.c.l.b16 %v377
        %v450 = vunpack.c.l.b16 %v378
        %v451 = vunpack.c.l.b16 %v379
        %v452 = vunpack.c.l.b16 %v380
        %v453 = vunpack.c.l.b16 %v381
        %v454 = vunpack.c.l.b16 %v382
        %v455 = vunpack.c.l.b16 %v383
        %v456 = vunpack.c.l.b16 %v384
        %v457 = vunpack.c.l.b16 %v385
        %v458 = vunpack.c.l.b16 %v386
        %v459 = vunpack.c.l.b16 %v387
        %v460 = vunpack.c.l.b16 %v388
        %v461 = vunpack.c.l.b16 %v389
        %v462 = vunpack.c.l.b16 %v390
        %v463 = vunpack.c.l.b16 %v391
        %v464 = vunpack.c.l.b16 %v392
        %v465 = vunpack.c.l.b16 %v393
        %v466 = vunpack.c.l.b16 %v394
        %v467 = vunpack.c.l.b16 %v395
        %v468 = vunpack.c.l.b16 %v396
        %v469 = vunpack.c.l.b16 %v397
        %v470 = vunpack.c.l.b16 %v398
        %v471 = vunpack.c.l.b16 %v399
        %v472 = vunpack.c.l.b16 %v400
        %v473 = vunpack.c.l.b16 %v401
        %v474 = vunpack.c.l.b16 %v402
        %v475 = vunpack.c.l.b16 %v403
        %v476 = vunpack.c.l.b16 %v404
        %v477 = vunpack.c.l.b16 %v405
        %v478 = vunpack.c.l.b16 %v406
        %v479 = vunpack.c.l.b16 %v407
        %v480 = vunpack.c.l.b16 %v408
        %v481 = vunpack.c.l.b16 %v409
        %v482 = vunpack.c.l.b16 %v410
        %v483 = vunpack.c.l.b16 %v411
        %v484 = vpack.c.b16 %v449, %v448
        %v485 = vpack.c.b16 %v450, %v450
        %v486 = vpack.c.b16 %v452, %v451
        %v487 = vpack.c.b16 %v453, %v453
        %v488 = vpack.c.b16 %v455, %v454
        %v489 = vpack.c.b16 %v456, %v456
        %v490 = vpack.c.b16 %v458, %v457
        %v491 = vpack.c.b16 %v459, %v459
        %v492 = vpack.c.b16 %v461, %v460
        %v493 = vpack.c.b16 %v462, %v462
        %v494 = vpack.c.b16 %v464, %v463
        %v495 = vpack.c.b16 %v465, %v465
        %v496 = vpack.c.b16 %v467, %v466
        %v497 = vpack.c.b16 %v468, %v468
        %v498 = vpack.c.b16 %v470, %v469
        %v499 = vpack.c.b16 %v471, %v471
        %v500 = vpack.c.b16 %v473, %v472
        %v501 = vpack.c.b16 %v474, %v474
        %v502 = vpack.c.b16 %v476, %v475
        %v503 = vpack.c.b16 %v477, %v477
        %v504 = vpack.c.b16 %v479, %v478
        %v505 = vpack.c.b16 %v480, %v480
        %v506 = vpack.c.b16 %v482, %v481
        %v507 = vpack.c.b16 %v483, %v483
        %vm508 = vsmask.f32 7424
        %v510 = vshrl.u32 %v484, 16
        %v512 = vshll.u32 %v484, 16
        %v514 = vrot.slane %v512, 1
        %v515 = vor.u32 %v510, %v514
        %v517 = vshll.u32 %v485, 16
        %v519 = vrot.slane %v517, 1
        %v520 = vsel %vm508, %v515, %v519
        %v522 = vshrl.u32 %v486, 16
        %v524 = vshll.u32 %v486, 16
        %v526 = vrot.slane %v524, 1
        %v527 = vor.u32 %v522, %v526
        %v529 = vshll.u32 %v487, 16
        %v531 = vrot.slane %v529, 1
        %v532 = vsel %vm508, %v527, %v531
        %v534 = vshrl.u32 %v488, 16
        %v536 = vshll.u32 %v488, 16
        %v538 = vrot.slane %v536, 1
        %v539 = vor.u32 %v534, %v538
        %v541 = vshll.u32 %v489, 16
        %v543 = vrot.slane %v541, 1
        %v544 = vsel %vm508, %v539, %v543
        %v546 = vshrl.u32 %v490, 16
        %v548 = vshll.u32 %v490, 16
        %v550 = vrot.slane %v548, 1
        %v551 = vor.u32 %v546, %v550
        %v553 = vshll.u32 %v491, 16
        %v555 = vrot.slane %v553, 1
        %v556 = vsel %vm508, %v551, %v555
        %v558 = vshrl.u32 %v492, 16
        %v560 = vshll.u32 %v492, 16
        %v562 = vrot.slane %v560, 1
        %v563 = vor.u32 %v558, %v562
        %v565 = vshll.u32 %v493, 16
        %v567 = vrot.slane %v565, 1
        %v568 = vsel %vm508, %v563, %v567
        %v570 = vshrl.u32 %v494, 16
        %v572 = vshll.u32 %v494, 16
        %v574 = vrot.slane %v572, 1
        %v575 = vor.u32 %v570, %v574
        %v577 = vshll.u32 %v495, 16
        %v579 = vrot.slane %v577, 1
        %v580 = vsel %vm508, %v575, %v579
        %v582 = vshrl.u32 %v496, 16
        %v584 = vshll.u32 %v496, 16
        %v586 = vrot.slane %v584, 1
        %v587 = vor.u32 %v582, %v586
        %v589 = vshll.u32 %v497, 16
        %v591 = vrot.slane %v589, 1
        %v592 = vsel %vm508, %v587, %v591
        %v594 = vshrl.u32 %v498, 16
        %v596 = vshll.u32 %v498, 16
        %v598 = vrot.slane %v596, 1
        %v599 = vor.u32 %v594, %v598
        %v601 = vshll.u32 %v499, 16
        %v603 = vrot.slane %v601, 1
        %v604 = vsel %vm508, %v599, %v603
        %v606 = vshrl.u32 %v500, 16
        %v608 = vshll.u32 %v500, 16
        %v610 = vrot.slane %v608, 1
        %v611 = vor.u32 %v606, %v610
        %v613 = vshll.u32 %v501, 16
        %v615 = vrot.slane %v613, 1
        %v616 = vsel %vm508, %v611, %v615
        %v618 = vshrl.u32 %v502, 16
        %v620 = vshll.u32 %v502, 16
        %v622 = vrot.slane %v620, 1
        %v623 = vor.u32 %v618, %v622
        %v625 = vshll.u32 %v503, 16
        %v627 = vrot.slane %v625, 1
        %v628 = vsel %vm508, %v623, %v627
        %v630 = vshrl.u32 %v504, 16
        %v632 = vshll.u32 %v504, 16
        %v634 = vrot.slane %v632, 1
        %v635 = vor.u32 %v630, %v634
        %v637 = vshll.u32 %v505, 16
        %v639 = vrot.slane %v637, 1
        %v640 = vsel %vm508, %v635, %v639
        %v642 = vshrl.u32 %v506, 16
        %v644 = vshll.u32 %v506, 16
        %v646 = vrot.slane %v644, 1
        %v647 = vor.u32 %v642, %v646
        %v649 = vshll.u32 %v507, 16
        %v651 = vrot.slane %v649, 1
        %v652 = vsel %vm508, %v647, %v651
        %665 = vst [vmem:[#allocation2 + $0x8] sm:$0xff] %v520
        %666 = vst [vmem:[#allocation2 + $0x20] sm:$0xff] %v532
        %667 = vst [vmem:[#allocation2 + $0x38] sm:$0xff] %v544
        %668 = vst [vmem:[#allocation2 + $0x50] sm:$0xff] %v556
        %669 = vst [vmem:[#allocation2 + $0x68] sm:$0xff] %v568
        %670 = vst [vmem:[#allocation2 + $0x80] sm:$0xff] %v580
        %671 = vst [vmem:[#allocation2 + $0x98] sm:$0xff] %v592
        %672 = vst [vmem:[#allocation2 + $0xb0] sm:$0xff] %v604
        %673 = vst [vmem:[#allocation2 + $0xc8] sm:$0xff] %v616
        %674 = vst [vmem:[#allocation2 + $0xe0] sm:$0xff] %v628
        %675 = vst [vmem:[#allocation2 + $0xf8] sm:$0xff] %v640
        %676 = vst [vmem:[#allocation2 + $0x110] sm:$0xff] %v652
        %v677 = vld [vmem:[%s265] sm:$0xe]
        %v678 = vld [vmem:[%s265 + $0x4] sm:$0xf]
        %v679 = vld [vmem:[%s265 + $0x8] sm:$0x1]
        %v680 = vld [vmem:[%s265 + $0xc] sm:$0xe]
        %v681 = vld [vmem:[%s265 + $0x10] sm:$0xf]
        %v682 = vld [vmem:[%s265 + $0x14] sm:$0x1]
        %v683 = vld [vmem:[%s265 + $0x18] sm:$0xe]
        %v684 = vld [vmem:[%s265 + $0x1c] sm:$0xf]
        %v685 = vld [vmem:[%s265 + $0x20] sm:$0x1]
        %v686 = vld [vmem:[%s265 + $0x24] sm:$0xe]
        %v687 = vld [vmem:[%s265 + $0x28] sm:$0xf]
        %v688 = vld [vmem:[%s265 + $0x2c] sm:$0x1]
        %v689 = vld [vmem:[%s265 + $0x30] sm:$0xe]
        %v690 = vld [vmem:[%s265 + $0x34] sm:$0xf]
        %v691 = vld [vmem:[%s265 + $0x38] sm:$0x1]
        %v692 = vld [vmem:[%s265 + $0x3c] sm:$0xe]
        %v693 = vld [vmem:[%s265 + $0x40] sm:$0xf]
        %v694 = vld [vmem:[%s265 + $0x44] sm:$0x1]
        %v695 = vld [vmem:[%s265 + $0x48] sm:$0xe]
        %v696 = vld [vmem:[%s265 + $0x4c] sm:$0xf]
        %v697 = vld [vmem:[%s265 + $0x50] sm:$0x1]
        %v698 = vld [vmem:[%s265 + $0x54] sm:$0xe]
        %v699 = vld [vmem:[%s265 + $0x58] sm:$0xf]
        %v700 = vld [vmem:[%s265 + $0x5c] sm:$0x1]
        %v701 = vld [vmem:[%s265 + $0x60] sm:$0xe]
        %v702 = vld [vmem:[%s265 + $0x64] sm:$0xf]
        %v703 = vld [vmem:[%s265 + $0x68] sm:$0x1]
        %v704 = vld [vmem:[%s265 + $0x6c] sm:$0xe]
        %v705 = vld [vmem:[%s265 + $0x70] sm:$0xf]
        %v706 = vld [vmem:[%s265 + $0x74] sm:$0x1]
        %v707 = vld [vmem:[%s265 + $0x78] sm:$0xe]
        %v708 = vld [vmem:[%s265 + $0x7c] sm:$0xf]
        %v709 = vld [vmem:[%s265 + $0x80] sm:$0x1]
        %v710 = vld [vmem:[%s265 + $0x84] sm:$0xe]
        %v711 = vld [vmem:[%s265 + $0x88] sm:$0xf]
        %v712 = vld [vmem:[%s265 + $0x8c] sm:$0x1]
        %v749 = vunpack.c.l.b16 %v677
        %v750 = vunpack.c.l.b16 %v678
        %v751 = vunpack.c.l.b16 %v679
        %v752 = vunpack.c.l.b16 %v680
        %v753 = vunpack.c.l.b16 %v681
        %v754 = vunpack.c.l.b16 %v682
        %v755 = vunpack.c.l.b16 %v683
        %v756 = vunpack.c.l.b16 %v684
        %v757 = vunpack.c.l.b16 %v685
        %v758 = vunpack.c.l.b16 %v686
        %v759 = vunpack.c.l.b16 %v687
        %v760 = vunpack.c.l.b16 %v688
        %v761 = vunpack.c.l.b16 %v689
        %v762 = vunpack.c.l.b16 %v690
        %v763 = vunpack.c.l.b16 %v691
        %v764 = vunpack.c.l.b16 %v692
        %v765 = vunpack.c.l.b16 %v693
        %v766 = vunpack.c.l.b16 %v694
        %v767 = vunpack.c.l.b16 %v695
        %v768 = vunpack.c.l.b16 %v696
        %v769 = vunpack.c.l.b16 %v697
        %v770 = vunpack.c.l.b16 %v698
        %v771 = vunpack.c.l.b16 %v699
        %v772 = vunpack.c.l.b16 %v700
        %v773 = vunpack.c.l.b16 %v701
        %v774 = vunpack.c.l.b16 %v702
        %v775 = vunpack.c.l.b16 %v703
        %v776 = vunpack.c.l.b16 %v704
        %v777 = vunpack.c.l.b16 %v705
        %v778 = vunpack.c.l.b16 %v706
        %v779 = vunpack.c.l.b16 %v707
        %v780 = vunpack.c.l.b16 %v708
        %v781 = vunpack.c.l.b16 %v709
        %v782 = vunpack.c.l.b16 %v710
        %v783 = vunpack.c.l.b16 %v711
        %v784 = vunpack.c.l.b16 %v712
        %v785 = vpack.c.b16 %v750, %v749
        %v786 = vpack.c.b16 %v751, %v751
        %v787 = vpack.c.b16 %v753, %v752
        %v788 = vpack.c.b16 %v754, %v754
        %v789 = vpack.c.b16 %v756, %v755
        %v790 = vpack.c.b16 %v757, %v757
        %v791 = vpack.c.b16 %v759, %v758
        %v792 = vpack.c.b16 %v760, %v760
        %v793 = vpack.c.b16 %v762, %v761
        %v794 = vpack.c.b16 %v763, %v763
        %v795 = vpack.c.b16 %v765, %v764
        %v796 = vpack.c.b16 %v766, %v766
        %v797 = vpack.c.b16 %v768, %v767
        %v798 = vpack.c.b16 %v769, %v769
        %v799 = vpack.c.b16 %v771, %v770
        %v800 = vpack.c.b16 %v772, %v772
        %v801 = vpack.c.b16 %v774, %v773
        %v802 = vpack.c.b16 %v775, %v775
        %v803 = vpack.c.b16 %v777, %v776
        %v804 = vpack.c.b16 %v778, %v778
        %v805 = vpack.c.b16 %v780, %v779
        %v806 = vpack.c.b16 %v781, %v781
        %v807 = vpack.c.b16 %v783, %v782
        %v808 = vpack.c.b16 %v784, %v784
        %vm809 = vcmask 1046528
        %v810 = vrot.slane %v785, 1
        %v811 = vrot.slane %v786, 1
        %v812 = vsel %vm809, %v810, %v811
        %v813 = vrot.slane %v787, 1
        %v814 = vrot.slane %v788, 1
        %v815 = vsel %vm809, %v813, %v814
        %v816 = vrot.slane %v789, 1
        %v817 = vrot.slane %v790, 1
        %v818 = vsel %vm809, %v816, %v817
        %v819 = vrot.slane %v791, 1
        %v820 = vrot.slane %v792, 1
        %v821 = vsel %vm809, %v819, %v820
        %v822 = vrot.slane %v793, 1
        %v823 = vrot.slane %v794, 1
        %v824 = vsel %vm809, %v822, %v823
        %v825 = vrot.slane %v795, 1
        %v826 = vrot.slane %v796, 1
        %v827 = vsel %vm809, %v825, %v826
        %v828 = vrot.slane %v797, 1
        %v829 = vrot.slane %v798, 1
        %v830 = vsel %vm809, %v828, %v829
        %v831 = vrot.slane %v799, 1
        %v832 = vrot.slane %v800, 1
        %v833 = vsel %vm809, %v831, %v832
        %v834 = vrot.slane %v801, 1
        %v835 = vrot.slane %v802, 1
        %v836 = vsel %vm809, %v834, %v835
        %v837 = vrot.slane %v803, 1
        %v838 = vrot.slane %v804, 1
        %v839 = vsel %vm809, %v837, %v838
        %v840 = vrot.slane %v805, 1
        %v841 = vrot.slane %v806, 1
        %v842 = vsel %vm809, %v840, %v841
        %v843 = vrot.slane %v807, 1
        %v844 = vrot.slane %v808, 1
        %v845 = vsel %vm809, %v843, %v844
        %858 = vst [vmem:[#allocation2 + $0x10] sm:$0xff] %v812
        %859 = vst [vmem:[#allocation2 + $0x28] sm:$0xff] %v815
        %860 = vst [vmem:[#allocation2 + $0x40] sm:$0xff] %v818
        %861 = vst [vmem:[#allocation2 + $0x58] sm:$0xff] %v821
        %862 = vst [vmem:[#allocation2 + $0x70] sm:$0xff] %v824
        %863 = vst [vmem:[#allocation2 + $0x88] sm:$0xff] %v827
        %864 = vst [vmem:[#allocation2 + $0xa0] sm:$0xff] %v830
        %865 = vst [vmem:[#allocation2 + $0xb8] sm:$0xff] %v833
        %866 = vst [vmem:[#allocation2 + $0xd0] sm:$0xff] %v836
        %867 = vst [vmem:[#allocation2 + $0xe8] sm:$0xff] %v839
        %868 = vst [vmem:[#allocation2 + $0x100] sm:$0xff] %v842
        %869 = vst [vmem:[#allocation2 + $0x118] sm:$0xff] %v845
        %s870 = scalar_lea.vmem [#allocation2], 48
        %v871 = vld [vmem:[%s870 + $0x8] sm:$0xff]
        %v872 = vld [vmem:[%s870 + $0x20] sm:$0xff]
        %v873 = vld [vmem:[%s870 + $0x38] sm:$0xff]
        %v874 = vld [vmem:[%s870 + $0x50] sm:$0xff]
        %v875 = vld [vmem:[%s870 + $0x68] sm:$0xff]
        %v876 = vld [vmem:[%s870 + $0x80] sm:$0xff]
        %v877 = vld [vmem:[%s870 + $0x98] sm:$0xff]
        %v878 = vld [vmem:[%s870 + $0xb0] sm:$0xff]
        %v879 = vld [vmem:[#allocation2] sm:$0xff]
        %v880 = vld [vmem:[#allocation2 + $0x8] sm:$0xff]
        %v881 = vld [vmem:[#allocation2 + $0x10] sm:$0xff]
        %v882 = vld [vmem:[#allocation2 + $0x18] sm:$0xff]
        %v883 = vld [vmem:[#allocation2 + $0x20] sm:$0xff]
        %v884 = vld [vmem:[#allocation2 + $0x28] sm:$0xff]
        %v885 = vld [vmem:[#allocation2 + $0x30] sm:$0xff]
        %v886 = vld [vmem:[#allocation2 + $0x38] sm:$0xff]
        %v887 = vld [vmem:[#allocation2 + $0x40] sm:$0xff]
        %v888 = vld [vmem:[#allocation2 + $0x48] sm:$0xff]
        %v889 = vld [vmem:[#allocation2 + $0x50] sm:$0xff]
        %v890 = vld [vmem:[#allocation2 + $0x58] sm:$0xff]
        %v891 = vld [vmem:[#allocation2 + $0x60] sm:$0xff]
        %v892 = vld [vmem:[#allocation2 + $0x68] sm:$0xff]
        %v893 = vld [vmem:[#allocation2 + $0x70] sm:$0xff]
        %v894 = vld [vmem:[#allocation2 + $0x78] sm:$0xff]
        %v895 = vld [vmem:[#allocation2 + $0x80] sm:$0xff]
        %v896 = vld [vmem:[#allocation2 + $0x88] sm:$0xff]
        %v897 = vld [vmem:[#allocation2 + $0x90] sm:$0xff]
        %v898 = vld [vmem:[#allocation2 + $0x98] sm:$0xff]
        %v899 = vld [vmem:[#allocation2 + $0xa0] sm:$0xff]
        %v900 = vld [vmem:[#allocation2 + $0xa8] sm:$0xff]
        %v901 = vld [vmem:[#allocation2 + $0xb0] sm:$0xff]
        %v902 = vld [vmem:[#allocation2 + $0xb8] sm:$0xff]
        %v903 = vld [vmem:[#allocation2 + $0xc0] sm:$0xff]
        %v904 = vld [vmem:[#allocation2 + $0xc8] sm:$0xff]
        %v905 = vld [vmem:[#allocation2 + $0xd0] sm:$0xff]
        %v906 = vld [vmem:[#allocation2 + $0xd8] sm:$0xff]
        %v907 = vld [vmem:[#allocation2 + $0xe0] sm:$0xff]
        %v908 = vld [vmem:[#allocation2 + $0xe8] sm:$0xff]
        %v909 = vld [vmem:[%s1] sm:$0xf]
        %v910 = vld [vmem:[%s1 + $0x4] sm:$0xf]
        %v911 = vld [vmem:[%s1 + $0x8] sm:$0xf]
        %v912 = vld [vmem:[%s1 + $0xc] sm:$0xf]
        %v913 = vld [vmem:[%s1 + $0x10] sm:$0xf]
        %v914 = vld [vmem:[%s1 + $0x14] sm:$0xf]
        %v915 = vld [vmem:[%s1 + $0x18] sm:$0xf]
        %v916 = vld [vmem:[%s1 + $0x1c] sm:$0xf]
        %v917 = vld [vmem:[%s1 + $0x20] sm:$0xf]
        %v918 = vld [vmem:[%s1 + $0x24] sm:$0xf]
        %v919 = vld [vmem:[%s1 + $0x28] sm:$0xf]
        %v920 = vld [vmem:[%s1 + $0x2c] sm:$0xf]
        %v921 = vld [vmem:[%s1 + $0x30] sm:$0xf]
        %v922 = vld [vmem:[%s1 + $0x34] sm:$0xf]
        %v923 = vld [vmem:[%s1 + $0x38] sm:$0xf]
        %v924 = vld [vmem:[%s1 + $0x3c] sm:$0xf]
        %v925 = vld [vmem:[%s1 + $0x40] sm:$0xf]
        %v926 = vld [vmem:[%s1 + $0x44] sm:$0xf]
        %v927 = vld [vmem:[%s1 + $0x48] sm:$0xf]
        %v928 = vld [vmem:[%s1 + $0x4c] sm:$0xf]
        %v929 = vld [vmem:[%s1 + $0x50] sm:$0xf]
        %v930 = vld [vmem:[%s1 + $0x54] sm:$0xf]
        %v931 = vld [vmem:[%s1 + $0x58] sm:$0xf]
        %v932 = vld [vmem:[%s1 + $0x5c] sm:$0xf]
        %v933 = vld [vmem:[%s1 + $0x60] sm:$0xf]
        %v934 = vld [vmem:[%s1 + $0x64] sm:$0xf]
        %v935 = vld [vmem:[%s1 + $0x68] sm:$0xf]
        %v936 = vld [vmem:[%s1 + $0x6c] sm:$0xf]
        %v937 = vld [vmem:[%s1 + $0x70] sm:$0xf]
        %v938 = vld [vmem:[%s1 + $0x74] sm:$0xf]
        %v939 = vld [vmem:[%s1 + $0x78] sm:$0xf]
        %v940 = vld [vmem:[%s1 + $0x7c] sm:$0xf]
        %v941 = vld [vmem:[%s1 + $0x80] sm:$0xf]
        %v942 = vld [vmem:[%s1 + $0x84] sm:$0xf]
        %v943 = vld [vmem:[%s1 + $0x88] sm:$0xf]
        %v944 = vld [vmem:[%s1 + $0x8c] sm:$0xf]
        %v945 = vld [vmem:[%s1 + $0x90] sm:$0xf]
        %v946 = vld [vmem:[%s1 + $0x94] sm:$0xf]
        %v947 = vld [vmem:[%s1 + $0x98] sm:$0xf]
        %v948 = vld [vmem:[%s1 + $0x9c] sm:$0xf]
        %v949 = vld [vmem:[%s1 + $0xa0] sm:$0xf]
        %v950 = vld [vmem:[%s1 + $0xa4] sm:$0xf]
        %v951 = vld [vmem:[%s1 + $0xa8] sm:$0xf]
        %v952 = vld [vmem:[%s1 + $0xac] sm:$0xf]
        %v953 = vld [vmem:[%s1 + $0xb0] sm:$0xf]
        %v954 = vld [vmem:[%s1 + $0xb4] sm:$0xf]
        %v955 = vld [vmem:[%s1 + $0xb8] sm:$0xf]
        %v956 = vld [vmem:[%s1 + $0xbc] sm:$0xf]
        %s957 = scalar_lea.vmem [#allocation2], 24
        %v958 = vld [vmem:[%s957] sm:$0xff]
        %v959 = vld [vmem:[%s957 + $0x8] sm:$0xff]
        %v960 = vld [vmem:[%s957 + $0x10] sm:$0xff]
        %v961 = vld [vmem:[%s957 + $0x18] sm:$0xff]
        %v962 = vld [vmem:[%s957 + $0x20] sm:$0xff]
        %v963 = vld [vmem:[%s957 + $0x28] sm:$0xff]
        %v964 = vld [vmem:[%s957 + $0x30] sm:$0xff]
        %v965 = vld [vmem:[%s957 + $0x38] sm:$0xff]
        %v966 = vld [vmem:[%s957 + $0x40] sm:$0xff]
        %v967 = vld [vmem:[%s957 + $0x48] sm:$0xff]
        %v968 = vld [vmem:[%s957 + $0x50] sm:$0xff]
        %v969 = vld [vmem:[%s957 + $0x58] sm:$0xff]
        %v970 = vld [vmem:[%s957 + $0x60] sm:$0xff]
        %v971 = vld [vmem:[%s957 + $0x68] sm:$0xff]
        %v972 = vld [vmem:[%s957 + $0x70] sm:$0xff]
        %v973 = vld [vmem:[%s957 + $0x78] sm:$0xff]
        %v974 = vld [vmem:[%s957 + $0x80] sm:$0xff]
        %v975 = vld [vmem:[%s957 + $0x88] sm:$0xff]
        %v976 = vld [vmem:[%s957 + $0x90] sm:$0xff]
        %v977 = vld [vmem:[%s957 + $0x98] sm:$0xff]
        %v978 = vld [vmem:[%s957 + $0xa0] sm:$0xff]
        %v979 = vld [vmem:[%s957 + $0xa8] sm:$0xff]
        %v980 = vld [vmem:[%s957 + $0xb0] sm:$0xff]
        %v981 = vld [vmem:[%s957 + $0xb8] sm:$0xff]
        %v982 = vld [vmem:[%s957 + $0xc0] sm:$0xff]
        %v983 = vld [vmem:[%s957 + $0xc8] sm:$0xff]
        %v984 = vld [vmem:[%s957 + $0xd0] sm:$0xff]
        %v985 = vld [vmem:[%s957 + $0xd8] sm:$0xff]
        %v986 = vld [vmem:[%s957 + $0xe0] sm:$0xff]
        %v987 = vld [vmem:[%s957 + $0xe8] sm:$0xff]
        %s988 = scalar_lea.vmem %s1, 192
        %v989 = vld [vmem:[%s988] sm:$0xf]
        %v990 = vld [vmem:[%s988 + $0x4] sm:$0xf]
        %v991 = vld [vmem:[%s988 + $0x8] sm:$0xf]
        %v992 = vld [vmem:[%s988 + $0xc] sm:$0xf]
        %v993 = vld [vmem:[%s988 + $0x10] sm:$0xf]
        %v994 = vld [vmem:[%s988 + $0x14] sm:$0xf]
        %v995 = vld [vmem:[%s988 + $0x18] sm:$0xf]
        %v996 = vld [vmem:[%s988 + $0x1c] sm:$0xf]
        %v997 = vld [vmem:[%s988 + $0x20] sm:$0xf]
        %v998 = vld [vmem:[%s988 + $0x24] sm:$0xf]
        %v999 = vld [vmem:[%s988 + $0x28] sm:$0xf]
        %v1000 = vld [vmem:[%s988 + $0x2c] sm:$0xf]
        %v1001 = vld [vmem:[%s988 + $0x30] sm:$0xf]
        %v1002 = vld [vmem:[%s988 + $0x34] sm:$0xf]
        %v1003 = vld [vmem:[%s988 + $0x38] sm:$0xf]
        %v1004 = vld [vmem:[%s988 + $0x3c] sm:$0xf]
        %v1005 = vld [vmem:[%s988 + $0x40] sm:$0xf]
        %v1006 = vld [vmem:[%s988 + $0x44] sm:$0xf]
        %v1007 = vld [vmem:[%s988 + $0x48] sm:$0xf]
        %v1008 = vld [vmem:[%s988 + $0x4c] sm:$0xf]
        %v1009 = vld [vmem:[%s988 + $0x50] sm:$0xf]
        %v1010 = vld [vmem:[%s988 + $0x54] sm:$0xf]
        %v1011 = vld [vmem:[%s988 + $0x58] sm:$0xf]
        %v1012 = vld [vmem:[%s988 + $0x5c] sm:$0xf]
        %v1013 = vld [vmem:[%s988 + $0x60] sm:$0xf]
        %v1014 = vld [vmem:[%s988 + $0x64] sm:$0xf]
        %v1015 = vld [vmem:[%s988 + $0x68] sm:$0xf]
        %v1016 = vld [vmem:[%s988 + $0x6c] sm:$0xf]
        %v1017 = vld [vmem:[%s988 + $0x70] sm:$0xf]
        %v1018 = vld [vmem:[%s988 + $0x74] sm:$0xf]
        %v1019 = vld [vmem:[%s988 + $0x78] sm:$0xf]
        %v1020 = vld [vmem:[%s988 + $0x7c] sm:$0xf]
        %v1021 = vld [vmem:[%s988 + $0x80] sm:$0xf]
        %v1022 = vld [vmem:[%s988 + $0x84] sm:$0xf]
        %v1023 = vld [vmem:[%s988 + $0x88] sm:$0xf]
        %v1024 = vld [vmem:[%s988 + $0x8c] sm:$0xf]
        %v1025 = vld [vmem:[%s988 + $0x90] sm:$0xf]
        %v1026 = vld [vmem:[%s988 + $0x94] sm:$0xf]
        %v1027 = vld [vmem:[%s988 + $0x98] sm:$0xf]
        %v1028 = vld [vmem:[%s988 + $0x9c] sm:$0xf]
        %v1029 = vld [vmem:[%s988 + $0xa0] sm:$0xf]
        %v1030 = vld [vmem:[%s988 + $0xa4] sm:$0xf]
        %v1031 = vld [vmem:[%s988 + $0xa8] sm:$0xf]
        %v1032 = vld [vmem:[%s988 + $0xac] sm:$0xf]
        %v1033 = vld [vmem:[%s988 + $0xb0] sm:$0xf]
        %v1034 = vld [vmem:[%s988 + $0xb4] sm:$0xf]
        %v1035 = vld [vmem:[%s988 + $0xb8] sm:$0xf]
        %v1036 = vld [vmem:[%s988 + $0xbc] sm:$0xf]
        %v1085 = vunpack.c.l.b16 %v989
        %v1086 = vunpack.c.l.b16 %v990
        %v1087 = vunpack.c.l.b16 %v991
        %v1088 = vunpack.c.l.b16 %v992
        %v1089 = vunpack.c.l.b16 %v993
        %v1090 = vunpack.c.l.b16 %v994
        %v1091 = vunpack.c.l.b16 %v995
        %v1092 = vunpack.c.l.b16 %v996
        %v1093 = vunpack.c.l.b16 %v997
        %v1094 = vunpack.c.l.b16 %v998
        %v1095 = vunpack.c.l.b16 %v999
        %v1096 = vunpack.c.l.b16 %v1000
        %v1097 = vunpack.c.l.b16 %v1001
        %v1098 = vunpack.c.l.b16 %v1002
        %v1099 = vunpack.c.l.b16 %v1003
        %v1100 = vunpack.c.l.b16 %v1004
        %v1101 = vunpack.c.l.b16 %v1005
        %v1102 = vunpack.c.l.b16 %v1006
        %v1103 = vunpack.c.l.b16 %v1007
        %v1104 = vunpack.c.l.b16 %v1008
        %v1105 = vunpack.c.l.b16 %v1009
        %v1106 = vunpack.c.l.b16 %v1010
        %v1107 = vunpack.c.l.b16 %v1011
        %v1108 = vunpack.c.l.b16 %v1012
        %v1109 = vunpack.c.l.b16 %v1013
        %v1110 = vunpack.c.l.b16 %v1014
        %v1111 = vunpack.c.l.b16 %v1015
        %v1112 = vunpack.c.l.b16 %v1016
        %v1113 = vunpack.c.l.b16 %v1017
        %v1114 = vunpack.c.l.b16 %v1018
        %v1115 = vunpack.c.l.b16 %v1019
        %v1116 = vunpack.c.l.b16 %v1020
        %v1117 = vunpack.c.l.b16 %v1021
        %v1118 = vunpack.c.l.b16 %v1022
        %v1119 = vunpack.c.l.b16 %v1023
        %v1120 = vunpack.c.l.b16 %v1024
        %v1121 = vunpack.c.l.b16 %v1025
        %v1122 = vunpack.c.l.b16 %v1026
        %v1123 = vunpack.c.l.b16 %v1027
        %v1124 = vunpack.c.l.b16 %v1028
        %v1125 = vunpack.c.l.b16 %v1029
        %v1126 = vunpack.c.l.b16 %v1030
        %v1127 = vunpack.c.l.b16 %v1031
        %v1128 = vunpack.c.l.b16 %v1032
        %v1129 = vunpack.c.l.b16 %v1033
        %v1130 = vunpack.c.l.b16 %v1034
        %v1131 = vunpack.c.l.b16 %v1035
        %v1132 = vunpack.c.l.b16 %v1036
        %v1133 = vpack.c.b16 %v1086, %v1085
        %v1134 = vpack.c.b16 %v1088, %v1087
        %v1135 = vpack.c.b16 %v1090, %v1089
        %v1136 = vpack.c.b16 %v1092, %v1091
        %v1137 = vpack.c.b16 %v1094, %v1093
        %v1138 = vpack.c.b16 %v1096, %v1095
        %v1139 = vpack.c.b16 %v1098, %v1097
        %v1140 = vpack.c.b16 %v1100, %v1099
        %v1141 = vpack.c.b16 %v1102, %v1101
        %v1142 = vpack.c.b16 %v1104, %v1103
        %v1143 = vpack.c.b16 %v1106, %v1105
        %v1144 = vpack.c.b16 %v1108, %v1107
        %v1145 = vpack.c.b16 %v1110, %v1109
        %v1146 = vpack.c.b16 %v1112, %v1111
        %v1147 = vpack.c.b16 %v1114, %v1113
        %v1148 = vpack.c.b16 %v1116, %v1115
        %v1149 = vpack.c.b16 %v1118, %v1117
        %v1150 = vpack.c.b16 %v1120, %v1119
        %v1151 = vpack.c.b16 %v1122, %v1121
        %v1152 = vpack.c.b16 %v1124, %v1123
        %v1153 = vpack.c.b16 %v1126, %v1125
        %v1154 = vpack.c.b16 %v1128, %v1127
        %v1155 = vpack.c.b16 %v1130, %v1129
        %v1156 = vpack.c.b16 %v1132, %v1131
        %1181 = vmatprep.subr.bf16.mxu0 0
        %1182 = vmatpush1.bf16.msra.mxu0 %v1133
        %1183 = vmatprep.subr.bf16.mxu0 0
        %1184 = vmatpush1.bf16.msra.mxu0 %v1134
        %1185 = vmatprep.subr.bf16.mxu0 0
        %1186 = vmatpush1.bf16.msra.mxu0 %v1135
        %1187 = vmatprep.subr.bf16.mxu0 0
        %1188 = vmatpush1.bf16.msra.mxu0 %v1136
        %1189 = vmatprep.subr.bf16.mxu0 0
        %1190 = vmatpush1.bf16.msra.mxu0 %v1137
        %1191 = vmatprep.subr.bf16.mxu0 0
        %1192 = vmatpush1.bf16.msra.mxu0 %v1138
        %1193 = vmatprep.subr.bf16.mxu0 0
        %1194 = vmatpush1.bf16.msra.mxu0 %v1139
        %1195 = vmatprep.subr.bf16.mxu0 0
        %1196 = vmatpush1.bf16.msra.mxu0 %v1140
        %1197 = vmatprep.subr.bf16.mxu0 0
        %1198 = vmatpush1.bf16.msra.mxu0 %v1141
        %1199 = vmatprep.subr.bf16.mxu0 0
        %1200 = vmatpush1.bf16.msra.mxu0 %v1142
        %1201 = vmatprep.subr.bf16.mxu0 0
        %1202 = vmatpush1.bf16.msra.mxu0 %v1143
        %1203 = vmatprep.subr.bf16.mxu0 0
        %1204 = vmatpush1.bf16.msra.mxu0 %v1144
        %1205 = vmatprep.subr.bf16.mxu0 0
        %1206 = vmatpush1.bf16.msra.mxu0 %v1145
        %1207 = vmatprep.subr.bf16.mxu0 0
        %1208 = vmatpush1.bf16.msra.mxu0 %v1146
        %1209 = vmatprep.subr.bf16.mxu0 0
        %1210 = vmatpush1.bf16.msra.mxu0 %v1147
        %1211 = vmatprep.subr.bf16.mxu0 0
        %1212 = vmatpush1.bf16.msra.mxu0 %v1148
        %1213 = vmatprep.mubr.bf16.mxu0 %v959
        %1214 = vmatmul.mubr.bf16.gmra.mrb[0].mxu0 %v958
        %v1215 = vpop.f32.mrb[0].mxu0
        %v1216 = vadd.f32 0.0, %v1215
        %v1217 = vpop.f32.mrb[0].mxu0
        %v1218 = vpop.f32.mrb[0].mxu0
        %v1219 = vadd.f32 0.0, %v1218
        %v1220 = vpop.f32.mrb[0].mxu0
        %1221 = vmatprep.mubr.bf16.mxu0 %v962
        %1222 = vmatmul.mubr.bf16.gmra.mrb[0].mxu0 %v961
        %v1223 = vpop.f32.mrb[0].mxu0
        %v1224 = vadd.f32 0.0, %v1223
        %v1225 = vpop.f32.mrb[0].mxu0
        %v1226 = vpop.f32.mrb[0].mxu0
        %v1227 = vadd.f32 0.0, %v1226
        %v1228 = vpop.f32.mrb[0].mxu0
        %1229 = vmatprep.mubr.bf16.mxu0 %v965
        %1230 = vmatmul.mubr.bf16.gmra.mrb[0].mxu0 %v964
        %v1231 = vpop.f32.mrb[0].mxu0
        %v1232 = vadd.f32 0.0, %v1231
        %v1233 = vpop.f32.mrb[0].mxu0
        %v1234 = vpop.f32.mrb[0].mxu0
        %v1235 = vadd.f32 0.0, %v1234
        %v1236 = vpop.f32.mrb[0].mxu0
        %1237 = vmatprep.mubr.bf16.mxu0 %v968
        %1238 = vmatmul.mubr.bf16.gmra.mrb[0].mxu0 %v967
        %v1239 = vpop.f32.mrb[0].mxu0
        %v1240 = vadd.f32 0.0, %v1239
        %v1241 = vpop.f32.mrb[0].mxu0
        %v1242 = vpop.f32.mrb[0].mxu0
        %v1243 = vadd.f32 0.0, %v1242
        %v1244 = vpop.f32.mrb[0].mxu0
        %1245 = vmatprep.mubr.bf16.mxu0 %v971
        %1246 = vmatmul.mubr.bf16.gmra.mrb[0].mxu0 %v970
        %v1247 = vpop.f32.mrb[0].mxu0
        %v1248 = vadd.f32 0.0, %v1247
        %v1249 = vpop.f32.mrb[0].mxu0
        %v1250 = vpop.f32.mrb[0].mxu0
        %v1251 = vadd.f32 0.0, %v1250
        %v1252 = vpop.f32.mrb[0].mxu0
        %1253 = vmatprep.mubr.bf16.mxu0 %v974
        %1254 = vmatmul.mubr.bf16.gmra.mrb[0].mxu0 %v973
        %v1255 = vpop.f32.mrb[0].mxu0
        %v1256 = vadd.f32 0.0, %v1255
        %v1257 = vpop.f32.mrb[0].mxu0
        %v1258 = vpop.f32.mrb[0].mxu0
        %v1259 = vadd.f32 0.0, %v1258
        %v1260 = vpop.f32.mrb[0].mxu0
        %1261 = vmatprep.mubr.bf16.mxu0 %v977
        %1262 = vmatmul.mubr.bf16.gmra.mrb[0].mxu0 %v976
        %v1263 = vpop.f32.mrb[0].mxu0
        %v1264 = vadd.f32 0.0, %v1263
        %v1265 = vpop.f32.mrb[0].mxu0
        %v1266 = vpop.f32.mrb[0].mxu0
        %v1267 = vadd.f32 0.0, %v1266
        %v1268 = vpop.f32.mrb[0].mxu0
        %1269 = vmatprep.mubr.bf16.mxu0 %v980
        %1270 = vmatmul.mubr.bf16.gmra.mrb[0].mxu0 %v979
        %v1271 = vpop.f32.mrb[0].mxu0
        %v1272 = vadd.f32 0.0, %v1271
        %v1273 = vpop.f32.mrb[0].mxu0
        %v1274 = vpop.f32.mrb[0].mxu0
        %v1275 = vadd.f32 0.0, %v1274
        %v1276 = vpop.f32.mrb[0].mxu0
        %1277 = vmatprep.mubr.bf16.mxu0 %v983
        %1278 = vmatmul.mubr.bf16.gmra.mrb[0].mxu0 %v982
        %v1279 = vpop.f32.mrb[0].mxu0
        %v1280 = vadd.f32 0.0, %v1279
        %v1281 = vpop.f32.mrb[0].mxu0
        %v1282 = vpop.f32.mrb[0].mxu0
        %v1283 = vadd.f32 0.0, %v1282
        %v1284 = vpop.f32.mrb[0].mxu0
        %1285 = vmatprep.mubr.bf16.mxu0 %v986
        %1286 = vmatmul.mubr.bf16.gmra.mrb[0].mxu0 %v985
        %v1287 = vpop.f32.mrb[0].mxu0
        %v1288 = vadd.f32 0.0, %v1287
        %v1289 = vpop.f32.mrb[0].mxu0
        %v1290 = vpop.f32.mrb[0].mxu0
        %v1291 = vadd.f32 0.0, %v1290
        %v1292 = vpop.f32.mrb[0].mxu0
        %1293 = vdwg.mxu0
        %1294 = vmatprep.subr.bf16.mxu0 0
        %1295 = vmatpush1.bf16.msra.mxu0 %v1149
        %1296 = vmatprep.subr.bf16.mxu0 0
        %1297 = vmatpush1.bf16.msra.mxu0 %v1150
        %1298 = vmatprep.subr.bf16.mxu0 0
        %1299 = vmatpush1.bf16.msra.mxu0 %v1151
        %1300 = vmatprep.subr.bf16.mxu0 0
        %1301 = vmatpush1.bf16.msra.mxu0 %v1152
        %1302 = vmatprep.subr.bf16.mxu0 0
        %1303 = vmatpush1.bf16.msra.mxu0 %v1153
        %1304 = vmatprep.subr.bf16.mxu0 0
        %1305 = vmatpush1.bf16.msra.mxu0 %v1154
        %1306 = vmatprep.subr.bf16.mxu0 0
        %1307 = vmatpush1.bf16.msra.mxu0 %v1155
        %1308 = vmatprep.subr.bf16.mxu0 0
        %1309 = vmatpush1.bf16.msra.mxu0 %v1156
        %1310 = vmatprep.subr.bf16.mxu0 0
        %1311 = vmatpush1.bf16.msra.mxu0 0
        %1312 = vmatprep.subr.bf16.mxu0 0
        %1313 = vmatpush1.bf16.msra.mxu0 0
        %1314 = vmatprep.subr.bf16.mxu0 0
        %1315 = vmatpush1.bf16.msra.mxu0 0
        %1316 = vmatprep.subr.bf16.mxu0 0
        %1317 = vmatpush1.bf16.msra.mxu0 0
        %1318 = vmatprep.subr.bf16.mxu0 0
        %1319 = vmatpush1.bf16.msra.mxu0 0
        %1320 = vmatprep.subr.bf16.mxu0 0
        %1321 = vmatpush1.bf16.msra.mxu0 0
        %1322 = vmatprep.subr.bf16.mxu0 0
        %1323 = vmatpush1.bf16.msra.mxu0 0
        %1324 = vmatprep.subr.bf16.mxu0 0
        %1325 = vmatpush1.bf16.msra.mxu0 0
        %1326 = vmatprep.mubr.bf16.mxu0 0
        %1327 = vmatmul.mubr.bf16.gmra.mrb[0].mxu0 %v960
        %v1328 = vpop.f32.mrb[0].mxu0
        %v1329 = vadd.f32 %v1216, %v1328
        %v1330 = vpop.f32.mrb[0].mxu0
        %v1331 = vpop.f32.mrb[0].mxu0
        %v1332 = vadd.f32 %v1219, %v1331
        %v1333 = vpop.f32.mrb[0].mxu0
        %1334 = vmatprep.mubr.bf16.mxu0 0
        %1335 = vmatmul.mubr.bf16.gmra.mrb[0].mxu0 %v963
        %v1336 = vpop.f32.mrb[0].mxu0
        %v1337 = vadd.f32 %v1224, %v1336
        %v1338 = vpop.f32.mrb[0].mxu0
        %v1339 = vpop.f32.mrb[0].mxu0
        %v1340 = vadd.f32 %v1227, %v1339
        %v1341 = vpop.f32.mrb[0].mxu0
        %1342 = vmatprep.mubr.bf16.mxu0 0
        %1343 = vmatmul.mubr.bf16.gmra.mrb[0].mxu0 %v966
        %v1344 = vpop.f32.mrb[0].mxu0
        %v1345 = vadd.f32 %v1232, %v1344
        %v1346 = vpop.f32.mrb[0].mxu0
        %v1347 = vpop.f32.mrb[0].mxu0
        %v1348 = vadd.f32 %v1235, %v1347
        %v1349 = vpop.f32.mrb[0].mxu0
        %1350 = vmatprep.mubr.bf16.mxu0 0
        %1351 = vmatmul.mubr.bf16.gmra.mrb[0].mxu0 %v969
        %v1352 = vpop.f32.mrb[0].mxu0
        %v1353 = vadd.f32 %v1240, %v1352
        %v1354 = vpop.f32.mrb[0].mxu0
        %v1355 = vpop.f32.mrb[0].mxu0
        %v1356 = vadd.f32 %v1243, %v1355
        %v1357 = vpop.f32.mrb[0].mxu0
        %1358 = vmatprep.mubr.bf16.mxu0 0
        %1359 = vmatmul.mubr.bf16.gmra.mrb[0].mxu0 %v972
        %v1360 = vpop.f32.mrb[0].mxu0
        %v1361 = vadd.f32 %v1248, %v1360
        %v1362 = vpop.f32.mrb[0].mxu0
        %v1363 = vpop.f32.mrb[0].mxu0
        %v1364 = vadd.f32 %v1251, %v1363
        %v1365 = vpop.f32.mrb[0].mxu0
        %1366 = vmatprep.mubr.bf16.mxu0 0
        %1367 = vmatmul.mubr.bf16.gmra.mrb[0].mxu0 %v975
        %v1368 = vpop.f32.mrb[0].mxu0
        %v1369 = vadd.f32 %v1256, %v1368
        %v1370 = vpop.f32.mrb[0].mxu0
        %v1371 = vpop.f32.mrb[0].mxu0
        %v1372 = vadd.f32 %v1259, %v1371
        %v1373 = vpop.f32.mrb[0].mxu0
        %1374 = vmatprep.mubr.bf16.mxu0 0
        %1375 = vmatmul.mubr.bf16.gmra.mrb[0].mxu0 %v978
        %v1376 = vpop.f32.mrb[0].mxu0
        %v1377 = vadd.f32 %v1264, %v1376
        %v1378 = vpop.f32.mrb[0].mxu0
        %v1379 = vpop.f32.mrb[0].mxu0
        %v1380 = vadd.f32 %v1267, %v1379
        %v1381 = vpop.f32.mrb[0].mxu0
        %1382 = vmatprep.mubr.bf16.mxu0 0
        %1383 = vmatmul.mubr.bf16.gmra.mrb[0].mxu0 %v981
        %v1384 = vpop.f32.mrb[0].mxu0
        %v1385 = vadd.f32 %v1272, %v1384
        %v1386 = vpop.f32.mrb[0].mxu0
        %v1387 = vpop.f32.mrb[0].mxu0
        %v1388 = vadd.f32 %v1275, %v1387
        %v1389 = vpop.f32.mrb[0].mxu0
        %1390 = vmatprep.mubr.bf16.mxu0 0
        %1391 = vmatmul.mubr.bf16.gmra.mrb[0].mxu0 %v984
        %v1392 = vpop.f32.mrb[0].mxu0
        %v1393 = vadd.f32 %v1280, %v1392
        %v1394 = vpop.f32.mrb[0].mxu0
        %v1395 = vpop.f32.mrb[0].mxu0
        %v1396 = vadd.f32 %v1283, %v1395
        %v1397 = vpop.f32.mrb[0].mxu0
        %1398 = vmatprep.mubr.bf16.mxu0 0
        %1399 = vmatmul.mubr.bf16.gmra.mrb[0].mxu0 %v987
        %v1400 = vpop.f32.mrb[0].mxu0
        %v1401 = vadd.f32 %v1288, %v1400
        %v1402 = vpop.f32.mrb[0].mxu0
        %v1403 = vpop.f32.mrb[0].mxu0
        %v1404 = vadd.f32 %v1291, %v1403
        %v1405 = vpop.f32.mrb[0].mxu0
        %1406 = vdwg.mxu0
        %v1455 = vunpack.c.l.b16 %v909
        %v1456 = vunpack.c.l.b16 %v910
        %v1457 = vunpack.c.l.b16 %v911
        %v1458 = vunpack.c.l.b16 %v912
        %v1459 = vunpack.c.l.b16 %v913
        %v1460 = vunpack.c.l.b16 %v914
        %v1461 = vunpack.c.l.b16 %v915
        %v1462 = vunpack.c.l.b16 %v916
        %v1463 = vunpack.c.l.b16 %v917
        %v1464 = vunpack.c.l.b16 %v918
        %v1465 = vunpack.c.l.b16 %v919
        %v1466 = vunpack.c.l.b16 %v920
        %v1467 = vunpack.c.l.b16 %v921
        %v1468 = vunpack.c.l.b16 %v922
        %v1469 = vunpack.c.l.b16 %v923
        %v1470 = vunpack.c.l.b16 %v924
        %v1471 = vunpack.c.l.b16 %v925
        %v1472 = vunpack.c.l.b16 %v926
        %v1473 = vunpack.c.l.b16 %v927
        %v1474 = vunpack.c.l.b16 %v928
        %v1475 = vunpack.c.l.b16 %v929
        %v1476 = vunpack.c.l.b16 %v930
        %v1477 = vunpack.c.l.b16 %v931
        %v1478 = vunpack.c.l.b16 %v932
        %v1479 = vunpack.c.l.b16 %v933
        %v1480 = vunpack.c.l.b16 %v934
        %v1481 = vunpack.c.l.b16 %v935
        %v1482 = vunpack.c.l.b16 %v936
        %v1483 = vunpack.c.l.b16 %v937
        %v1484 = vunpack.c.l.b16 %v938
        %v1485 = vunpack.c.l.b16 %v939
        %v1486 = vunpack.c.l.b16 %v940
        %v1487 = vunpack.c.l.b16 %v941
        %v1488 = vunpack.c.l.b16 %v942
        %v1489 = vunpack.c.l.b16 %v943
        %v1490 = vunpack.c.l.b16 %v944
        %v1491 = vunpack.c.l.b16 %v945
        %v1492 = vunpack.c.l.b16 %v946
        %v1493 = vunpack.c.l.b16 %v947
        %v1494 = vunpack.c.l.b16 %v948
        %v1495 = vunpack.c.l.b16 %v949
        %v1496 = vunpack.c.l.b16 %v950
        %v1497 = vunpack.c.l.b16 %v951
        %v1498 = vunpack.c.l.b16 %v952
        %v1499 = vunpack.c.l.b16 %v953
        %v1500 = vunpack.c.l.b16 %v954
        %v1501 = vunpack.c.l.b16 %v955
        %v1502 = vunpack.c.l.b16 %v956
        %v1503 = vpack.c.b16 %v1456, %v1455
        %v1504 = vpack.c.b16 %v1458, %v1457
        %v1505 = vpack.c.b16 %v1460, %v1459
        %v1506 = vpack.c.b16 %v1462, %v1461
        %v1507 = vpack.c.b16 %v1464, %v1463
        %v1508 = vpack.c.b16 %v1466, %v1465
        %v1509 = vpack.c.b16 %v1468, %v1467
        %v1510 = vpack.c.b16 %v1470, %v1469
        %v1511 = vpack.c.b16 %v1472, %v1471
        %v1512 = vpack.c.b16 %v1474, %v1473
        %v1513 = vpack.c.b16 %v1476, %v1475
        %v1514 = vpack.c.b16 %v1478, %v1477
        %v1515 = vpack.c.b16 %v1480, %v1479
        %v1516 = vpack.c.b16 %v1482, %v1481
        %v1517 = vpack.c.b16 %v1484, %v1483
        %v1518 = vpack.c.b16 %v1486, %v1485
        %v1519 = vpack.c.b16 %v1488, %v1487
        %v1520 = vpack.c.b16 %v1490, %v1489
        %v1521 = vpack.c.b16 %v1492, %v1491
        %v1522 = vpack.c.b16 %v1494, %v1493
        %v1523 = vpack.c.b16 %v1496, %v1495
        %v1524 = vpack.c.b16 %v1498, %v1497
        %v1525 = vpack.c.b16 %v1500, %v1499
        %v1526 = vpack.c.b16 %v1502, %v1501
        %1551 = vmatprep.subr.bf16.mxu0 0
        %1552 = vmatpush1.bf16.msra.mxu0 %v1503
        %1553 = vmatprep.subr.bf16.mxu0 0
        %1554 = vmatpush1.bf16.msra.mxu0 %v1504
        %1555 = vmatprep.subr.bf16.mxu0 0
        %1556 = vmatpush1.bf16.msra.mxu0 %v1505
        %1557 = vmatprep.subr.bf16.mxu0 0
        %1558 = vmatpush1.bf16.msra.mxu0 %v1506
        %1559 = vmatprep.subr.bf16.mxu0 0
        %1560 = vmatpush1.bf16.msra.mxu0 %v1507
        %1561 = vmatprep.subr.bf16.mxu0 0
        %1562 = vmatpush1.bf16.msra.mxu0 %v1508
        %1563 = vmatprep.subr.bf16.mxu0 0
        %1564 = vmatpush1.bf16.msra.mxu0 %v1509
        %1565 = vmatprep.subr.bf16.mxu0 0
        %1566 = vmatpush1.bf16.msra.mxu0 %v1510
        %1567 = vmatprep.subr.bf16.mxu0 0
        %1568 = vmatpush1.bf16.msra.mxu0 %v1511
        %1569 = vmatprep.subr.bf16.mxu0 0
        %1570 = vmatpush1.bf16.msra.mxu0 %v1512
        %1571 = vmatprep.subr.bf16.mxu0 0
        %1572 = vmatpush1.bf16.msra.mxu0 %v1513
        %1573 = vmatprep.subr.bf16.mxu0 0
        %1574 = vmatpush1.bf16.msra.mxu0 %v1514
        %1575 = vmatprep.subr.bf16.mxu0 0
        %1576 = vmatpush1.bf16.msra.mxu0 %v1515
        %1577 = vmatprep.subr.bf16.mxu0 0
        %1578 = vmatpush1.bf16.msra.mxu0 %v1516
        %1579 = vmatprep.subr.bf16.mxu0 0
        %1580 = vmatpush1.bf16.msra.mxu0 %v1517
        %1581 = vmatprep.subr.bf16.mxu0 0
        %1582 = vmatpush1.bf16.msra.mxu0 %v1518
        %1583 = vmatprep.mubr.bf16.mxu0 %v880
        %1584 = vmatmul.mubr.bf16.gmra.mrb[0].mxu0 %v879
        %v1585 = vpop.f32.mrb[0].mxu0
        %v1586 = vadd.f32 %v1329, %v1585
        %v1587 = vpop.f32.mrb[0].mxu0
        %v1588 = vpop.f32.mrb[0].mxu0
        %v1589 = vadd.f32 %v1332, %v1588
        %v1590 = vpop.f32.mrb[0].mxu0
        %1591 = vmatprep.mubr.bf16.mxu0 %v883
        %1592 = vmatmul.mubr.bf16.gmra.mrb[0].mxu0 %v882
        %v1593 = vpop.f32.mrb[0].mxu0
        %v1594 = vadd.f32 %v1337, %v1593
        %v1595 = vpop.f32.mrb[0].mxu0
        %v1596 = vpop.f32.mrb[0].mxu0
        %v1597 = vadd.f32 %v1340, %v1596
        %v1598 = vpop.f32.mrb[0].mxu0
        %1599 = vmatprep.mubr.bf16.mxu0 %v886
        %1600 = vmatmul.mubr.bf16.gmra.mrb[0].mxu0 %v885
        %v1601 = vpop.f32.mrb[0].mxu0
        %v1602 = vadd.f32 %v1345, %v1601
        %v1603 = vpop.f32.mrb[0].mxu0
        %v1604 = vpop.f32.mrb[0].mxu0
        %v1605 = vadd.f32 %v1348, %v1604
        %v1606 = vpop.f32.mrb[0].mxu0
        %1607 = vmatprep.mubr.bf16.mxu0 %v889
        %1608 = vmatmul.mubr.bf16.gmra.mrb[0].mxu0 %v888
        %v1609 = vpop.f32.mrb[0].mxu0
        %v1610 = vadd.f32 %v1353, %v1609
        %v1611 = vpop.f32.mrb[0].mxu0
        %v1612 = vpop.f32.mrb[0].mxu0
        %v1613 = vadd.f32 %v1356, %v1612
        %v1614 = vpop.f32.mrb[0].mxu0
        %1615 = vmatprep.mubr.bf16.mxu0 %v892
        %1616 = vmatmul.mubr.bf16.gmra.mrb[0].mxu0 %v891
        %v1617 = vpop.f32.mrb[0].mxu0
        %v1618 = vadd.f32 %v1361, %v1617
        %v1619 = vpop.f32.mrb[0].mxu0
        %v1620 = vpop.f32.mrb[0].mxu0
        %v1621 = vadd.f32 %v1364, %v1620
        %v1622 = vpop.f32.mrb[0].mxu0
        %1623 = vmatprep.mubr.bf16.mxu0 %v895
        %1624 = vmatmul.mubr.bf16.gmra.mrb[0].mxu0 %v894
        %v1625 = vpop.f32.mrb[0].mxu0
        %v1626 = vadd.f32 %v1369, %v1625
        %v1627 = vpop.f32.mrb[0].mxu0
        %v1628 = vpop.f32.mrb[0].mxu0
        %v1629 = vadd.f32 %v1372, %v1628
        %v1630 = vpop.f32.mrb[0].mxu0
        %1631 = vmatprep.mubr.bf16.mxu0 %v898
        %1632 = vmatmul.mubr.bf16.gmra.mrb[0].mxu0 %v897
        %v1633 = vpop.f32.mrb[0].mxu0
        %v1634 = vadd.f32 %v1377, %v1633
        %v1635 = vpop.f32.mrb[0].mxu0
        %v1636 = vpop.f32.mrb[0].mxu0
        %v1637 = vadd.f32 %v1380, %v1636
        %v1638 = vpop.f32.mrb[0].mxu0
        %1639 = vmatprep.mubr.bf16.mxu0 %v901
        %1640 = vmatmul.mubr.bf16.gmra.mrb[0].mxu0 %v900
        %v1641 = vpop.f32.mrb[0].mxu0
        %v1642 = vadd.f32 %v1385, %v1641
        %v1643 = vpop.f32.mrb[0].mxu0
        %v1644 = vpop.f32.mrb[0].mxu0
        %v1645 = vadd.f32 %v1388, %v1644
        %v1646 = vpop.f32.mrb[0].mxu0
        %1647 = vmatprep.mubr.bf16.mxu0 %v904
        %1648 = vmatmul.mubr.bf16.gmra.mrb[0].mxu0 %v903
        %v1649 = vpop.f32.mrb[0].mxu0
        %v1650 = vadd.f32 %v1393, %v1649
        %v1651 = vpop.f32.mrb[0].mxu0
        %v1652 = vpop.f32.mrb[0].mxu0
        %v1653 = vadd.f32 %v1396, %v1652
        %v1654 = vpop.f32.mrb[0].mxu0
        %1655 = vmatprep.mubr.bf16.mxu0 %v907
        %1656 = vmatmul.mubr.bf16.gmra.mrb[0].mxu0 %v906
        %v1657 = vpop.f32.mrb[0].mxu0
        %v1658 = vadd.f32 %v1401, %v1657
        %v1659 = vpop.f32.mrb[0].mxu0
        %v1660 = vpop.f32.mrb[0].mxu0
        %v1661 = vadd.f32 %v1404, %v1660
        %v1662 = vpop.f32.mrb[0].mxu0
        %1663 = vdwg.mxu0
        %1664 = vmatprep.subr.bf16.mxu0 0
        %1665 = vmatpush1.bf16.msra.mxu0 %v1519
        %1666 = vmatprep.subr.bf16.mxu0 0
        %1667 = vmatpush1.bf16.msra.mxu0 %v1520
        %1668 = vmatprep.subr.bf16.mxu0 0
        %1669 = vmatpush1.bf16.msra.mxu0 %v1521
        %1670 = vmatprep.subr.bf16.mxu0 0
        %1671 = vmatpush1.bf16.msra.mxu0 %v1522
        %1672 = vmatprep.subr.bf16.mxu0 0
        %1673 = vmatpush1.bf16.msra.mxu0 %v1523
        %1674 = vmatprep.subr.bf16.mxu0 0
        %1675 = vmatpush1.bf16.msra.mxu0 %v1524
        %1676 = vmatprep.subr.bf16.mxu0 0
        %1677 = vmatpush1.bf16.msra.mxu0 %v1525
        %1678 = vmatprep.subr.bf16.mxu0 0
        %1679 = vmatpush1.bf16.msra.mxu0 %v1526
        %1680 = vmatprep.subr.bf16.mxu0 0
        %1681 = vmatpush1.bf16.msra.mxu0 0
        %1682 = vmatprep.subr.bf16.mxu0 0
        %1683 = vmatpush1.bf16.msra.mxu0 0
        %1684 = vmatprep.subr.bf16.mxu0 0
        %1685 = vmatpush1.bf16.msra.mxu0 0
        %1686 = vmatprep.subr.bf16.mxu0 0
        %1687 = vmatpush1.bf16.msra.mxu0 0
        %1688 = vmatprep.subr.bf16.mxu0 0
        %1689 = vmatpush1.bf16.msra.mxu0 0
        %1690 = vmatprep.subr.bf16.mxu0 0
        %1691 = vmatpush1.bf16.msra.mxu0 0
        %1692 = vmatprep.subr.bf16.mxu0 0
        %1693 = vmatpush1.bf16.msra.mxu0 0
        %1694 = vmatprep.subr.bf16.mxu0 0
        %1695 = vmatpush1.bf16.msra.mxu0 0
        %1696 = vmatprep.mubr.bf16.mxu0 0
        %1697 = vmatmul.mubr.bf16.gmra.mrb[0].mxu0 %v881
        %v1698 = vpop.f32.mrb[0].mxu0
        %v1699 = vadd.f32 %v1586, %v1698
        %v1700 = vpop.f32.mrb[0].mxu0
        %v1701 = vpop.f32.mrb[0].mxu0
        %v1702 = vadd.f32 %v1589, %v1701
        %v1703 = vpop.f32.mrb[0].mxu0
        %1704 = vmatprep.mubr.bf16.mxu0 0
        %1705 = vmatmul.mubr.bf16.gmra.mrb[0].mxu0 %v884
        %v1706 = vpop.f32.mrb[0].mxu0
        %v1707 = vadd.f32 %v1594, %v1706
        %v1708 = vpop.f32.mrb[0].mxu0
        %v1709 = vpop.f32.mrb[0].mxu0
        %v1710 = vadd.f32 %v1597, %v1709
        %v1711 = vpop.f32.mrb[0].mxu0
        %1712 = vmatprep.mubr.bf16.mxu0 0
        %1713 = vmatmul.mubr.bf16.gmra.mrb[0].mxu0 %v887
        %v1714 = vpop.f32.mrb[0].mxu0
        %v1715 = vadd.f32 %v1602, %v1714
        %v1716 = vpop.f32.mrb[0].mxu0
        %v1717 = vpop.f32.mrb[0].mxu0
        %v1718 = vadd.f32 %v1605, %v1717
        %v1719 = vpop.f32.mrb[0].mxu0
        %1720 = vmatprep.mubr.bf16.mxu0 0
        %1721 = vmatmul.mubr.bf16.gmra.mrb[0].mxu0 %v890
        %v1722 = vpop.f32.mrb[0].mxu0
        %v1723 = vadd.f32 %v1610, %v1722
        %v1724 = vpop.f32.mrb[0].mxu0
        %v1725 = vpop.f32.mrb[0].mxu0
        %v1726 = vadd.f32 %v1613, %v1725
        %v1727 = vpop.f32.mrb[0].mxu0
        %1728 = vmatprep.mubr.bf16.mxu0 0
        %1729 = vmatmul.mubr.bf16.gmra.mrb[0].mxu0 %v893
        %v1730 = vpop.f32.mrb[0].mxu0
        %v1731 = vadd.f32 %v1618, %v1730
        %v1732 = vpop.f32.mrb[0].mxu0
        %v1733 = vpop.f32.mrb[0].mxu0
        %v1734 = vadd.f32 %v1621, %v1733
        %v1735 = vpop.f32.mrb[0].mxu0
        %1736 = vmatprep.mubr.bf16.mxu0 0
        %1737 = vmatmul.mubr.bf16.gmra.mrb[0].mxu0 %v896
        %v1738 = vpop.f32.mrb[0].mxu0
        %v1739 = vadd.f32 %v1626, %v1738
        %v1740 = vpop.f32.mrb[0].mxu0
        %v1741 = vpop.f32.mrb[0].mxu0
        %v1742 = vadd.f32 %v1629, %v1741
        %v1743 = vpop.f32.mrb[0].mxu0
        %1744 = vmatprep.mubr.bf16.mxu0 0
        %1745 = vmatmul.mubr.bf16.gmra.mrb[0].mxu0 %v899
        %v1746 = vpop.f32.mrb[0].mxu0
        %v1747 = vadd.f32 %v1634, %v1746
        %v1748 = vpop.f32.mrb[0].mxu0
        %v1749 = vpop.f32.mrb[0].mxu0
        %v1750 = vadd.f32 %v1637, %v1749
        %v1751 = vpop.f32.mrb[0].mxu0
        %1752 = vmatprep.mubr.bf16.mxu0 0
        %1753 = vmatmul.mubr.bf16.gmra.mrb[0].mxu0 %v902
        %v1754 = vpop.f32.mrb[0].mxu0
        %v1755 = vadd.f32 %v1642, %v1754
        %v1756 = vpop.f32.mrb[0].mxu0
        %v1757 = vpop.f32.mrb[0].mxu0
        %v1758 = vadd.f32 %v1645, %v1757
        %v1759 = vpop.f32.mrb[0].mxu0
        %1760 = vmatprep.mubr.bf16.mxu0 0
        %1761 = vmatmul.mubr.bf16.gmra.mrb[0].mxu0 %v905
        %v1762 = vpop.f32.mrb[0].mxu0
        %v1763 = vadd.f32 %v1650, %v1762
        %v1764 = vpop.f32.mrb[0].mxu0
        %v1765 = vpop.f32.mrb[0].mxu0
        %v1766 = vadd.f32 %v1653, %v1765
        %v1767 = vpop.f32.mrb[0].mxu0
        %1768 = vmatprep.mubr.bf16.mxu0 0
        %1769 = vmatmul.mubr.bf16.gmra.mrb[0].mxu0 %v908
        %v1770 = vpop.f32.mrb[0].mxu0
        %v1771 = vadd.f32 %v1658, %v1770
        %v1772 = vpop.f32.mrb[0].mxu0
        %v1773 = vpop.f32.mrb[0].mxu0
        %v1774 = vadd.f32 %v1661, %v1773
        %v1775 = vpop.f32.mrb[0].mxu0
        %1776 = vdwg.mxu0
        %v1777 = vld [vmem:[%s870] sm:$0xff]
        %v1778 = vld [vmem:[%s870 + $0x8] sm:$0xff]
        %v1779 = vld [vmem:[%s870 + $0x10] sm:$0xff]
        %v1780 = vld [vmem:[%s870 + $0x18] sm:$0xff]
        %v1781 = vld [vmem:[%s870 + $0x20] sm:$0xff]
        %v1782 = vld [vmem:[%s870 + $0x28] sm:$0xff]
        %v1783 = vld [vmem:[%s870 + $0x30] sm:$0xff]
        %v1784 = vld [vmem:[%s870 + $0x38] sm:$0xff]
        %v1785 = vld [vmem:[%s870 + $0x40] sm:$0xff]
        %v1786 = vld [vmem:[%s870 + $0x48] sm:$0xff]
        %v1787 = vld [vmem:[%s870 + $0x50] sm:$0xff]
        %v1788 = vld [vmem:[%s870 + $0x58] sm:$0xff]
        %v1789 = vld [vmem:[%s870 + $0x60] sm:$0xff]
        %v1790 = vld [vmem:[%s870 + $0x68] sm:$0xff]
        %v1791 = vld [vmem:[%s870 + $0x70] sm:$0xff]
        %v1792 = vld [vmem:[%s870 + $0x78] sm:$0xff]
        %v1793 = vld [vmem:[%s870 + $0x80] sm:$0xff]
        %v1794 = vld [vmem:[%s870 + $0x88] sm:$0xff]
        %v1795 = vld [vmem:[%s870 + $0x90] sm:$0xff]
        %v1796 = vld [vmem:[%s870 + $0x98] sm:$0xff]
        %v1797 = vld [vmem:[%s870 + $0xa0] sm:$0xff]
        %v1798 = vld [vmem:[%s870 + $0xa8] sm:$0xff]
        %v1799 = vld [vmem:[%s870 + $0xb0] sm:$0xff]
        %v1800 = vld [vmem:[%s870 + $0xb8] sm:$0xff]
        %v1801 = vld [vmem:[%s870 + $0xc0] sm:$0xff]
        %v1802 = vld [vmem:[%s870 + $0xc8] sm:$0xff]
        %v1803 = vld [vmem:[%s870 + $0xd0] sm:$0xff]
        %v1804 = vld [vmem:[%s870 + $0xd8] sm:$0xff]
        %v1805 = vld [vmem:[%s870 + $0xe0] sm:$0xff]
        %v1806 = vld [vmem:[%s870 + $0xe8] sm:$0xff]
        %s1807 = scalar_lea.vmem %s1, 384
        %v1808 = vld [vmem:[%s1807] sm:$0xf]
        %v1809 = vld [vmem:[%s1807 + $0x4] sm:$0xf]
        %v1810 = vld [vmem:[%s1807 + $0x8] sm:$0xf]
        %v1811 = vld [vmem:[%s1807 + $0xc] sm:$0xf]
        %v1812 = vld [vmem:[%s1807 + $0x10] sm:$0xf]
        %v1813 = vld [vmem:[%s1807 + $0x14] sm:$0xf]
        %v1814 = vld [vmem:[%s1807 + $0x18] sm:$0xf]
        %v1815 = vld [vmem:[%s1807 + $0x1c] sm:$0xf]
        %v1816 = vld [vmem:[%s1807 + $0x20] sm:$0xf]
        %v1817 = vld [vmem:[%s1807 + $0x24] sm:$0xf]
        %v1818 = vld [vmem:[%s1807 + $0x28] sm:$0xf]
        %v1819 = vld [vmem:[%s1807 + $0x2c] sm:$0xf]
        %v1820 = vld [vmem:[%s1807 + $0x30] sm:$0xf]
        %v1821 = vld [vmem:[%s1807 + $0x34] sm:$0xf]
        %v1822 = vld [vmem:[%s1807 + $0x38] sm:$0xf]
        %v1823 = vld [vmem:[%s1807 + $0x3c] sm:$0xf]
        %v1824 = vld [vmem:[%s1807 + $0x40] sm:$0xf]
        %v1825 = vld [vmem:[%s1807 + $0x44] sm:$0xf]
        %v1826 = vld [vmem:[%s1807 + $0x48] sm:$0xf]
        %v1827 = vld [vmem:[%s1807 + $0x4c] sm:$0xf]
        %v1828 = vld [vmem:[%s1807 + $0x50] sm:$0xf]
        %v1829 = vld [vmem:[%s1807 + $0x54] sm:$0xf]
        %v1830 = vld [vmem:[%s1807 + $0x58] sm:$0xf]
        %v1831 = vld [vmem:[%s1807 + $0x5c] sm:$0xf]
        %v1832 = vld [vmem:[%s1807 + $0x60] sm:$0xf]
        %v1833 = vld [vmem:[%s1807 + $0x64] sm:$0xf]
        %v1834 = vld [vmem:[%s1807 + $0x68] sm:$0xf]
        %v1835 = vld [vmem:[%s1807 + $0x6c] sm:$0xf]
        %v1836 = vld [vmem:[%s1807 + $0x70] sm:$0xf]
        %v1837 = vld [vmem:[%s1807 + $0x74] sm:$0xf]
        %v1838 = vld [vmem:[%s1807 + $0x78] sm:$0xf]
        %v1839 = vld [vmem:[%s1807 + $0x7c] sm:$0xf]
        %v1840 = vld [vmem:[%s1807 + $0x80] sm:$0xf]
        %v1841 = vld [vmem:[%s1807 + $0x84] sm:$0xf]
        %v1842 = vld [vmem:[%s1807 + $0x88] sm:$0xf]
        %v1843 = vld [vmem:[%s1807 + $0x8c] sm:$0xf]
        %v1844 = vld [vmem:[%s1807 + $0x90] sm:$0xf]
        %v1845 = vld [vmem:[%s1807 + $0x94] sm:$0xf]
        %v1846 = vld [vmem:[%s1807 + $0x98] sm:$0xf]
        %v1847 = vld [vmem:[%s1807 + $0x9c] sm:$0xf]
        %v1848 = vld [vmem:[%s1807 + $0xa0] sm:$0xf]
        %v1849 = vld [vmem:[%s1807 + $0xa4] sm:$0xf]
        %v1850 = vld [vmem:[%s1807 + $0xa8] sm:$0xf]
        %v1851 = vld [vmem:[%s1807 + $0xac] sm:$0xf]
        %v1852 = vld [vmem:[%s1807 + $0xb0] sm:$0xf]
        %v1853 = vld [vmem:[%s1807 + $0xb4] sm:$0xf]
        %v1854 = vld [vmem:[%s1807 + $0xb8] sm:$0xf]
        %v1855 = vld [vmem:[%s1807 + $0xbc] sm:$0xf]
        %v1904 = vunpack.c.l.b16 %v1808
        %v1905 = vunpack.c.l.b16 %v1809
        %v1906 = vunpack.c.l.b16 %v1810
        %v1907 = vunpack.c.l.b16 %v1811
        %v1908 = vunpack.c.l.b16 %v1812
        %v1909 = vunpack.c.l.b16 %v1813
        %v1910 = vunpack.c.l.b16 %v1814
        %v1911 = vunpack.c.l.b16 %v1815
        %v1912 = vunpack.c.l.b16 %v1816
        %v1913 = vunpack.c.l.b16 %v1817
        %v1914 = vunpack.c.l.b16 %v1818
        %v1915 = vunpack.c.l.b16 %v1819
        %v1916 = vunpack.c.l.b16 %v1820
        %v1917 = vunpack.c.l.b16 %v1821
        %v1918 = vunpack.c.l.b16 %v1822
        %v1919 = vunpack.c.l.b16 %v1823
        %v1920 = vunpack.c.l.b16 %v1824
        %v1921 = vunpack.c.l.b16 %v1825
        %v1922 = vunpack.c.l.b16 %v1826
        %v1923 = vunpack.c.l.b16 %v1827
        %v1924 = vunpack.c.l.b16 %v1828
        %v1925 = vunpack.c.l.b16 %v1829
        %v1926 = vunpack.c.l.b16 %v1830
        %v1927 = vunpack.c.l.b16 %v1831
        %v1928 = vunpack.c.l.b16 %v1832
        %v1929 = vunpack.c.l.b16 %v1833
        %v1930 = vunpack.c.l.b16 %v1834
        %v1931 = vunpack.c.l.b16 %v1835
        %v1932 = vunpack.c.l.b16 %v1836
        %v1933 = vunpack.c.l.b16 %v1837
        %v1934 = vunpack.c.l.b16 %v1838
        %v1935 = vunpack.c.l.b16 %v1839
        %v1936 = vunpack.c.l.b16 %v1840
        %v1937 = vunpack.c.l.b16 %v1841
        %v1938 = vunpack.c.l.b16 %v1842
        %v1939 = vunpack.c.l.b16 %v1843
        %v1940 = vunpack.c.l.b16 %v1844
        %v1941 = vunpack.c.l.b16 %v1845
        %v1942 = vunpack.c.l.b16 %v1846
        %v1943 = vunpack.c.l.b16 %v1847
        %v1944 = vunpack.c.l.b16 %v1848
        %v1945 = vunpack.c.l.b16 %v1849
        %v1946 = vunpack.c.l.b16 %v1850
        %v1947 = vunpack.c.l.b16 %v1851
        %v1948 = vunpack.c.l.b16 %v1852
        %v1949 = vunpack.c.l.b16 %v1853
        %v1950 = vunpack.c.l.b16 %v1854
        %v1951 = vunpack.c.l.b16 %v1855
        %v1952 = vpack.c.b16 %v1905, %v1904
        %v1953 = vpack.c.b16 %v1907, %v1906
        %v1954 = vpack.c.b16 %v1909, %v1908
        %v1955 = vpack.c.b16 %v1911, %v1910
        %v1956 = vpack.c.b16 %v1913, %v1912
        %v1957 = vpack.c.b16 %v1915, %v1914
        %v1958 = vpack.c.b16 %v1917, %v1916
        %v1959 = vpack.c.b16 %v1919, %v1918
        %v1960 = vpack.c.b16 %v1921, %v1920
        %v1961 = vpack.c.b16 %v1923, %v1922
        %v1962 = vpack.c.b16 %v1925, %v1924
        %v1963 = vpack.c.b16 %v1927, %v1926
        %v1964 = vpack.c.b16 %v1929, %v1928
        %v1965 = vpack.c.b16 %v1931, %v1930
        %v1966 = vpack.c.b16 %v1933, %v1932
        %v1967 = vpack.c.b16 %v1935, %v1934
        %v1968 = vpack.c.b16 %v1937, %v1936
        %v1969 = vpack.c.b16 %v1939, %v1938
        %v1970 = vpack.c.b16 %v1941, %v1940
        %v1971 = vpack.c.b16 %v1943, %v1942
        %v1972 = vpack.c.b16 %v1945, %v1944
        %v1973 = vpack.c.b16 %v1947, %v1946
        %v1974 = vpack.c.b16 %v1949, %v1948
        %v1975 = vpack.c.b16 %v1951, %v1950
        %2000 = vmatprep.subr.bf16.mxu0 0
        %2001 = vmatpush1.bf16.msra.mxu0 %v1952
        %2002 = vmatprep.subr.bf16.mxu0 0
        %2003 = vmatpush1.bf16.msra.mxu0 %v1953
        %2004 = vmatprep.subr.bf16.mxu0 0
        %2005 = vmatpush1.bf16.msra.mxu0 %v1954
        %2006 = vmatprep.subr.bf16.mxu0 0
        %2007 = vmatpush1.bf16.msra.mxu0 %v1955
        %2008 = vmatprep.subr.bf16.mxu0 0
        %2009 = vmatpush1.bf16.msra.mxu0 %v1956
        %2010 = vmatprep.subr.bf16.mxu0 0
        %2011 = vmatpush1.bf16.msra.mxu0 %v1957
        %2012 = vmatprep.subr.bf16.mxu0 0
        %2013 = vmatpush1.bf16.msra.mxu0 %v1958
        %2014 = vmatprep.subr.bf16.mxu0 0
        %2015 = vmatpush1.bf16.msra.mxu0 %v1959
        %2016 = vmatprep.subr.bf16.mxu0 0
        %2017 = vmatpush1.bf16.msra.mxu0 %v1960
        %2018 = vmatprep.subr.bf16.mxu0 0
        %2019 = vmatpush1.bf16.msra.mxu0 %v1961
        %2020 = vmatprep.subr.bf16.mxu0 0
        %2021 = vmatpush1.bf16.msra.mxu0 %v1962
        %2022 = vmatprep.subr.bf16.mxu0 0
        %2023 = vmatpush1.bf16.msra.mxu0 %v1963
        %2024 = vmatprep.subr.bf16.mxu0 0
        %2025 = vmatpush1.bf16.msra.mxu0 %v1964
        %2026 = vmatprep.subr.bf16.mxu0 0
        %2027 = vmatpush1.bf16.msra.mxu0 %v1965
        %2028 = vmatprep.subr.bf16.mxu0 0
        %2029 = vmatpush1.bf16.msra.mxu0 %v1966
        %2030 = vmatprep.subr.bf16.mxu0 0
        %2031 = vmatpush1.bf16.msra.mxu0 %v1967
        %2032 = vmatprep.mubr.bf16.mxu0 %v1778
        %2033 = vmatmul.mubr.bf16.gmra.mrb[0].mxu0 %v1777
        %v2034 = vpop.f32.mrb[0].mxu0
        %v2035 = vadd.f32 0.0, %v2034
        %v2036 = vpop.f32.mrb[0].mxu0
        %v2037 = vpop.f32.mrb[0].mxu0
        %v2038 = vadd.f32 0.0, %v2037
        %v2039 = vpop.f32.mrb[0].mxu0
        %2040 = vmatprep.mubr.bf16.mxu0 %v1781
        %2041 = vmatmul.mubr.bf16.gmra.mrb[0].mxu0 %v1780
        %v2042 = vpop.f32.mrb[0].mxu0
        %v2043 = vadd.f32 0.0, %v2042
        %v2044 = vpop.f32.mrb[0].mxu0
        %v2045 = vpop.f32.mrb[0].mxu0
        %v2046 = vadd.f32 0.0, %v2045
        %v2047 = vpop.f32.mrb[0].mxu0
        %2048 = vmatprep.mubr.bf16.mxu0 %v1784
        %2049 = vmatmul.mubr.bf16.gmra.mrb[0].mxu0 %v1783
        %v2050 = vpop.f32.mrb[0].mxu0
        %v2051 = vadd.f32 0.0, %v2050
        %v2052 = vpop.f32.mrb[0].mxu0
        %v2053 = vpop.f32.mrb[0].mxu0
        %v2054 = vadd.f32 0.0, %v2053
        %v2055 = vpop.f32.mrb[0].mxu0
        %2056 = vmatprep.mubr.bf16.mxu0 %v1787
        %2057 = vmatmul.mubr.bf16.gmra.mrb[0].mxu0 %v1786
        %v2058 = vpop.f32.mrb[0].mxu0
        %v2059 = vadd.f32 0.0, %v2058
        %v2060 = vpop.f32.mrb[0].mxu0
        %v2061 = vpop.f32.mrb[0].mxu0
        %v2062 = vadd.f32 0.0, %v2061
        %v2063 = vpop.f32.mrb[0].mxu0
        %2064 = vmatprep.mubr.bf16.mxu0 %v1790
        %2065 = vmatmul.mubr.bf16.gmra.mrb[0].mxu0 %v1789
        %v2066 = vpop.f32.mrb[0].mxu0
        %v2067 = vadd.f32 0.0, %v2066
        %v2068 = vpop.f32.mrb[0].mxu0
        %v2069 = vpop.f32.mrb[0].mxu0
        %v2070 = vadd.f32 0.0, %v2069
        %v2071 = vpop.f32.mrb[0].mxu0
        %2072 = vmatprep.mubr.bf16.mxu0 %v1793
        %2073 = vmatmul.mubr.bf16.gmra.mrb[0].mxu0 %v1792
        %v2074 = vpop.f32.mrb[0].mxu0
        %v2075 = vadd.f32 0.0, %v2074
        %v2076 = vpop.f32.mrb[0].mxu0
        %v2077 = vpop.f32.mrb[0].mxu0
        %v2078 = vadd.f32 0.0, %v2077
        %v2079 = vpop.f32.mrb[0].mxu0
        %2080 = vmatprep.mubr.bf16.mxu0 %v1796
        %2081 = vmatmul.mubr.bf16.gmra.mrb[0].mxu0 %v1795
        %v2082 = vpop.f32.mrb[0].mxu0
        %v2083 = vadd.f32 0.0, %v2082
        %v2084 = vpop.f32.mrb[0].mxu0
        %v2085 = vpop.f32.mrb[0].mxu0
        %v2086 = vadd.f32 0.0, %v2085
        %v2087 = vpop.f32.mrb[0].mxu0
        %2088 = vmatprep.mubr.bf16.mxu0 %v1799
        %2089 = vmatmul.mubr.bf16.gmra.mrb[0].mxu0 %v1798
        %v2090 = vpop.f32.mrb[0].mxu0
        %v2091 = vadd.f32 0.0, %v2090
        %v2092 = vpop.f32.mrb[0].mxu0
        %v2093 = vpop.f32.mrb[0].mxu0
        %v2094 = vadd.f32 0.0, %v2093
        %v2095 = vpop.f32.mrb[0].mxu0
        %2096 = vmatprep.mubr.bf16.mxu0 %v1802
        %2097 = vmatmul.mubr.bf16.gmra.mrb[0].mxu0 %v1801
        %v2098 = vpop.f32.mrb[0].mxu0
        %v2099 = vadd.f32 0.0, %v2098
        %v2100 = vpop.f32.mrb[0].mxu0
        %v2101 = vpop.f32.mrb[0].mxu0
        %v2102 = vadd.f32 0.0, %v2101
        %v2103 = vpop.f32.mrb[0].mxu0
        %2104 = vmatprep.mubr.bf16.mxu0 %v1805
        %2105 = vmatmul.mubr.bf16.gmra.mrb[0].mxu0 %v1804
        %v2106 = vpop.f32.mrb[0].mxu0
        %v2107 = vadd.f32 0.0, %v2106
        %v2108 = vpop.f32.mrb[0].mxu0
        %v2109 = vpop.f32.mrb[0].mxu0
        %v2110 = vadd.f32 0.0, %v2109
        %v2111 = vpop.f32.mrb[0].mxu0
        %2112 = vdwg.mxu0
        %2113 = vmatprep.subr.bf16.mxu0 0
        %2114 = vmatpush1.bf16.msra.mxu0 %v1968
        %2115 = vmatprep.subr.bf16.mxu0 0
        %2116 = vmatpush1.bf16.msra.mxu0 %v1969
        %2117 = vmatprep.subr.bf16.mxu0 0
        %2118 = vmatpush1.bf16.msra.mxu0 %v1970
        %2119 = vmatprep.subr.bf16.mxu0 0
        %2120 = vmatpush1.bf16.msra.mxu0 %v1971
        %2121 = vmatprep.subr.bf16.mxu0 0
        %2122 = vmatpush1.bf16.msra.mxu0 %v1972
        %2123 = vmatprep.subr.bf16.mxu0 0
        %2124 = vmatpush1.bf16.msra.mxu0 %v1973
        %2125 = vmatprep.subr.bf16.mxu0 0
        %2126 = vmatpush1.bf16.msra.mxu0 %v1974
        %2127 = vmatprep.subr.bf16.mxu0 0
        %2128 = vmatpush1.bf16.msra.mxu0 %v1975
        %2129 = vmatprep.subr.bf16.mxu0 0
        %2130 = vmatpush1.bf16.msra.mxu0 0
        %2131 = vmatprep.subr.bf16.mxu0 0
        %2132 = vmatpush1.bf16.msra.mxu0 0
        %2133 = vmatprep.subr.bf16.mxu0 0
        %2134 = vmatpush1.bf16.msra.mxu0 0
        %2135 = vmatprep.subr.bf16.mxu0 0
        %2136 = vmatpush1.bf16.msra.mxu0 0
        %2137 = vmatprep.subr.bf16.mxu0 0
        %2138 = vmatpush1.bf16.msra.mxu0 0
        %2139 = vmatprep.subr.bf16.mxu0 0
        %2140 = vmatpush1.bf16.msra.mxu0 0
        %2141 = vmatprep.subr.bf16.mxu0 0
        %2142 = vmatpush1.bf16.msra.mxu0 0
        %2143 = vmatprep.subr.bf16.mxu0 0
        %2144 = vmatpush1.bf16.msra.mxu0 0
        %2145 = vmatprep.mubr.bf16.mxu0 0
        %2146 = vmatmul.mubr.bf16.gmra.mrb[0].mxu0 %v1779
        %v2147 = vpop.f32.mrb[0].mxu0
        %v2148 = vadd.f32 %v2035, %v2147
        %v2149 = vpop.f32.mrb[0].mxu0
        %v2150 = vpop.f32.mrb[0].mxu0
        %v2151 = vadd.f32 %v2038, %v2150
        %v2152 = vpop.f32.mrb[0].mxu0
        %2153 = vmatprep.mubr.bf16.mxu0 0
        %2154 = vmatmul.mubr.bf16.gmra.mrb[0].mxu0 %v1782
        %v2155 = vpop.f32.mrb[0].mxu0
        %v2156 = vadd.f32 %v2043, %v2155
        %v2157 = vpop.f32.mrb[0].mxu0
        %v2158 = vpop.f32.mrb[0].mxu0
        %v2159 = vadd.f32 %v2046, %v2158
        %v2160 = vpop.f32.mrb[0].mxu0
        %2161 = vmatprep.mubr.bf16.mxu0 0
        %2162 = vmatmul.mubr.bf16.gmra.mrb[0].mxu0 %v1785
        %v2163 = vpop.f32.mrb[0].mxu0
        %v2164 = vadd.f32 %v2051, %v2163
        %v2165 = vpop.f32.mrb[0].mxu0
        %v2166 = vpop.f32.mrb[0].mxu0
        %v2167 = vadd.f32 %v2054, %v2166
        %v2168 = vpop.f32.mrb[0].mxu0
        %2169 = vmatprep.mubr.bf16.mxu0 0
        %2170 = vmatmul.mubr.bf16.gmra.mrb[0].mxu0 %v1788
        %v2171 = vpop.f32.mrb[0].mxu0
        %v2172 = vadd.f32 %v2059, %v2171
        %v2173 = vpop.f32.mrb[0].mxu0
        %v2174 = vpop.f32.mrb[0].mxu0
        %v2175 = vadd.f32 %v2062, %v2174
        %v2176 = vpop.f32.mrb[0].mxu0
        %2177 = vmatprep.mubr.bf16.mxu0 0
        %2178 = vmatmul.mubr.bf16.gmra.mrb[0].mxu0 %v1791
        %v2179 = vpop.f32.mrb[0].mxu0
        %v2180 = vadd.f32 %v2067, %v2179
        %v2181 = vpop.f32.mrb[0].mxu0
        %v2182 = vpop.f32.mrb[0].mxu0
        %v2183 = vadd.f32 %v2070, %v2182
        %v2184 = vpop.f32.mrb[0].mxu0
        %2185 = vmatprep.mubr.bf16.mxu0 0
        %2186 = vmatmul.mubr.bf16.gmra.mrb[0].mxu0 %v1794
        %v2187 = vpop.f32.mrb[0].mxu0
        %v2188 = vadd.f32 %v2075, %v2187
        %v2189 = vpop.f32.mrb[0].mxu0
        %v2190 = vpop.f32.mrb[0].mxu0
        %v2191 = vadd.f32 %v2078, %v2190
        %v2192 = vpop.f32.mrb[0].mxu0
        %2193 = vmatprep.mubr.bf16.mxu0 0
        %2194 = vmatmul.mubr.bf16.gmra.mrb[0].mxu0 %v1797
        %v2195 = vpop.f32.mrb[0].mxu0
        %v2196 = vadd.f32 %v2083, %v2195
        %v2197 = vpop.f32.mrb[0].mxu0
        %v2198 = vpop.f32.mrb[0].mxu0
        %v2199 = vadd.f32 %v2086, %v2198
        %v2200 = vpop.f32.mrb[0].mxu0
        %2201 = vmatprep.mubr.bf16.mxu0 0
        %2202 = vmatmul.mubr.bf16.gmra.mrb[0].mxu0 %v1800
        %v2203 = vpop.f32.mrb[0].mxu0
        %v2204 = vadd.f32 %v2091, %v2203
        %v2205 = vpop.f32.mrb[0].mxu0
        %v2206 = vpop.f32.mrb[0].mxu0
        %v2207 = vadd.f32 %v2094, %v2206
        %v2208 = vpop.f32.mrb[0].mxu0
        %2209 = vmatprep.mubr.bf16.mxu0 0
        %2210 = vmatmul.mubr.bf16.gmra.mrb[0].mxu0 %v1803
        %v2211 = vpop.f32.mrb[0].mxu0
        %v2212 = vadd.f32 %v2099, %v2211
        %v2213 = vpop.f32.mrb[0].mxu0
        %v2214 = vpop.f32.mrb[0].mxu0
        %v2215 = vadd.f32 %v2102, %v2214
        %v2216 = vpop.f32.mrb[0].mxu0
        %2217 = vmatprep.mubr.bf16.mxu0 0
        %2218 = vmatmul.mubr.bf16.gmra.mrb[0].mxu0 %v1806
        %v2219 = vpop.f32.mrb[0].mxu0
        %v2220 = vadd.f32 %v2107, %v2219
        %v2221 = vpop.f32.mrb[0].mxu0
        %v2222 = vpop.f32.mrb[0].mxu0
        %v2223 = vadd.f32 %v2110, %v2222
        %v2224 = vpop.f32.mrb[0].mxu0
        %2225 = vdwg.mxu0
        %v2226 = vadd.f32 %v1699, %v2148
        %v2227 = vadd.f32 %v1702, %v2151
        %v2228 = vadd.f32 %v1707, %v2156
        %v2229 = vadd.f32 %v1710, %v2159
        %v2230 = vadd.f32 %v1715, %v2164
        %v2231 = vadd.f32 %v1718, %v2167
        %v2232 = vadd.f32 %v1723, %v2172
        %v2233 = vadd.f32 %v1726, %v2175
        %v2234 = vadd.f32 %v1731, %v2180
        %v2235 = vadd.f32 %v1734, %v2183
        %v2236 = vadd.f32 %v1739, %v2188
        %v2237 = vadd.f32 %v1742, %v2191
        %v2238 = vadd.f32 %v1747, %v2196
        %v2239 = vadd.f32 %v1750, %v2199
        %v2240 = vadd.f32 %v1755, %v2204
        %v2241 = vadd.f32 %v1758, %v2207
        %v2242 = vadd.f32 %v1763, %v2212
        %v2243 = vadd.f32 %v1766, %v2215
        %v2244 = vadd.f32 %v1771, %v2220
        %v2245 = vadd.f32 %v1774, %v2223
        %v2246 = vld [vmem:[%s2] sm:$0x1]
        %v2248 = vlaneseq
        %v2249 = vshrl.u32 %v2248, 7
        %v2250 = vsub.s32 0, %v2249
        %v2251 = vrot.slane %v2246, %v2250
        %v2253 = vadd.f32 %v2226, %v2251
        %v2254 = vadd.f32 %v2227, %v2251
        %v2255 = vadd.f32 %v2228, %v2251
        %v2256 = vadd.f32 %v2229, %v2251
        %v2257 = vadd.f32 %v2230, %v2251
        %v2258 = vadd.f32 %v2231, %v2251
        %v2259 = vadd.f32 %v2232, %v2251
        %v2260 = vadd.f32 %v2233, %v2251
        %v2261 = vadd.f32 %v2234, %v2251
        %v2262 = vadd.f32 %v2235, %v2251
        %v2263 = vadd.f32 %v2236, %v2251
        %v2264 = vadd.f32 %v2237, %v2251
        %v2265 = vadd.f32 %v2238, %v2251
        %v2266 = vadd.f32 %v2239, %v2251
        %v2267 = vadd.f32 %v2240, %v2251
        %v2268 = vadd.f32 %v2241, %v2251
        %v2269 = vadd.f32 %v2242, %v2251
        %v2270 = vadd.f32 %v2243, %v2251
        %v2271 = vadd.f32 %v2244, %v2251
        %v2272 = vadd.f32 %v2245, %v2251
        %v2273 = vmax.f32 %v2253, 0.0
        %v2274 = vmax.f32 %v2254, 0.0
        %v2275 = vmax.f32 %v2255, 0.0
        %v2276 = vmax.f32 %v2256, 0.0
        %v2277 = vmax.f32 %v2257, 0.0
        %v2278 = vmax.f32 %v2258, 0.0
        %v2279 = vmax.f32 %v2259, 0.0
        %v2280 = vmax.f32 %v2260, 0.0
        %v2281 = vmax.f32 %v2261, 0.0
        %v2282 = vmax.f32 %v2262, 0.0
        %v2283 = vmax.f32 %v2263, 0.0
        %v2284 = vmax.f32 %v2264, 0.0
        %v2285 = vmax.f32 %v2265, 0.0
        %v2286 = vmax.f32 %v2266, 0.0
        %v2287 = vmax.f32 %v2267, 0.0
        %v2288 = vmax.f32 %v2268, 0.0
        %v2289 = vmax.f32 %v2269, 0.0
        %v2290 = vmax.f32 %v2270, 0.0
        %v2291 = vmax.f32 %v2271, 0.0
        %v2292 = vmax.f32 %v2272, 0.0
        %v2293 = vpack.c.bf16 %v2274, %v2273
        %v2294 = vpack.c.bf16 %v2276, %v2275
        %v2295 = vpack.c.bf16 %v2278, %v2277
        %v2296 = vpack.c.bf16 %v2280, %v2279
        %v2297 = vpack.c.bf16 %v2282, %v2281
        %v2298 = vpack.c.bf16 %v2284, %v2283
        %v2299 = vpack.c.bf16 %v2286, %v2285
        %v2300 = vpack.c.bf16 %v2288, %v2287
        %v2301 = vpack.c.bf16 %v2290, %v2289
        %v2302 = vpack.c.bf16 %v2292, %v2291
        %2303 = vst [vmem:[#allocation3 + $0x8] sm:$0xff] %v2293
        %2304 = vst [vmem:[#allocation3 + $0x20] sm:$0xff] %v2294
        %2305 = vst [vmem:[#allocation3 + $0x38] sm:$0xff] %v2295
        %2306 = vst [vmem:[#allocation3 + $0x50] sm:$0xff] %v2296
        %2307 = vst [vmem:[#allocation3 + $0x68] sm:$0xff] %v2297
        %2308 = vst [vmem:[#allocation3 + $0x80] sm:$0xff] %v2298
        %2309 = vst [vmem:[#allocation3 + $0x98] sm:$0xff] %v2299
        %2310 = vst [vmem:[#allocation3 + $0xb0] sm:$0xff] %v2300
        %2311 = vst [vmem:[#allocation3 + $0xc8] sm:$0xff] %v2301
        %2312 = vst [vmem:[#allocation3 + $0xe0] sm:$0xff] %v2302
        %v2314 = vshrl.u32 %v2293, 16
        %v2316 = vrot.slane %v2314, 7
        %v2317 = vshll.u32 %v2293, 16
        %v2319 = vor.u32 %v2316, %v2317
        %v2321 = vshrl.u32 %v2294, 16
        %v2323 = vrot.slane %v2321, 7
        %v2324 = vshll.u32 %v2294, 16
        %v2326 = vor.u32 %v2323, %v2324
        %v2328 = vshrl.u32 %v2295, 16
        %v2330 = vrot.slane %v2328, 7
        %v2331 = vshll.u32 %v2295, 16
        %v2333 = vor.u32 %v2330, %v2331
        %v2335 = vshrl.u32 %v2296, 16
        %v2337 = vrot.slane %v2335, 7
        %v2338 = vshll.u32 %v2296, 16
        %v2340 = vor.u32 %v2337, %v2338
        %v2342 = vshrl.u32 %v2297, 16
        %v2344 = vrot.slane %v2342, 7
        %v2345 = vshll.u32 %v2297, 16
        %v2347 = vor.u32 %v2344, %v2345
        %v2349 = vshrl.u32 %v2298, 16
        %v2351 = vrot.slane %v2349, 7
        %v2352 = vshll.u32 %v2298, 16
        %v2354 = vor.u32 %v2351, %v2352
        %v2356 = vshrl.u32 %v2299, 16
        %v2358 = vrot.slane %v2356, 7
        %v2359 = vshll.u32 %v2299, 16
        %v2361 = vor.u32 %v2358, %v2359
        %v2363 = vshrl.u32 %v2300, 16
        %v2365 = vrot.slane %v2363, 7
        %v2366 = vshll.u32 %v2300, 16
        %v2368 = vor.u32 %v2365, %v2366
        %v2370 = vshrl.u32 %v2301, 16
        %v2372 = vrot.slane %v2370, 7
        %v2373 = vshll.u32 %v2301, 16
        %v2375 = vor.u32 %v2372, %v2373
        %v2377 = vshrl.u32 %v2302, 16
        %v2379 = vrot.slane %v2377, 7
        %v2380 = vshll.u32 %v2302, 16
        %v2382 = vor.u32 %v2379, %v2380
        %vm2393 = vcmask 1047552
        %vm2394 = vsmask.f32 7938
        %vm2395 = vmand %vm2393, %vm2394
        %v2396 = vld [vmem:[#allocation3] sm:$0xff]
        %v2397 = vsel %vm2395, %v2319, %v2396
        %2398 = vst [vmem:[#allocation3] sm:$0xff] %v2397
        %v2399 = vld [vmem:[#allocation3 + $0x18] sm:$0xff]
        %v2400 = vsel %vm2395, %v2326, %v2399
        %2401 = vst [vmem:[#allocation3 + $0x18] sm:$0xff] %v2400
        %v2402 = vld [vmem:[#allocation3 + $0x30] sm:$0xff]
        %v2403 = vsel %vm2395, %v2333, %v2402
        %2404 = vst [vmem:[#allocation3 + $0x30] sm:$0xff] %v2403
        %v2405 = vld [vmem:[#allocation3 + $0x48] sm:$0xff]
        %v2406 = vsel %vm2395, %v2340, %v2405
        %2407 = vst [vmem:[#allocation3 + $0x48] sm:$0xff] %v2406
        %v2408 = vld [vmem:[#allocation3 + $0x60] sm:$0xff]
        %v2409 = vsel %vm2395, %v2347, %v2408
        %2410 = vst [vmem:[#allocation3 + $0x60] sm:$0xff] %v2409
        %v2411 = vld [vmem:[#allocation3 + $0x78] sm:$0xff]
        %v2412 = vsel %vm2395, %v2354, %v2411
        %2413 = vst [vmem:[#allocation3 + $0x78] sm:$0xff] %v2412
        %v2414 = vld [vmem:[#allocation3 + $0x90] sm:$0xff]
        %v2415 = vsel %vm2395, %v2361, %v2414
        %2416 = vst [vmem:[#allocation3 + $0x90] sm:$0xff] %v2415
        %v2417 = vld [vmem:[#allocation3 + $0xa8] sm:$0xff]
        %v2418 = vsel %vm2395, %v2368, %v2417
        %2419 = vst [vmem:[#allocation3 + $0xa8] sm:$0xff] %v2418
        %v2420 = vld [vmem:[#allocation3 + $0xc0] sm:$0xff]
        %v2421 = vsel %vm2395, %v2375, %v2420
        %2422 = vst [vmem:[#allocation3 + $0xc0] sm:$0xff] %v2421
        %v2423 = vld [vmem:[#allocation3 + $0xd8] sm:$0xff]
        %v2424 = vsel %vm2395, %v2382, %v2423
        %2425 = vst [vmem:[#allocation3 + $0xd8] sm:$0xff] %v2424
        %vm2426 = vcmask 1040384
        %vm2427 = vsmask.f32 256
        %vm2428 = vmand %vm2426, %vm2427
        %v2429 = vld [vmem:[#allocation3] sm:$0x1]
        %v2430 = vsel %vm2428, 0, %v2429
        %2431 = vst [vmem:[#allocation3] sm:$0x1] %v2430
        %v2432 = vld [vmem:[#allocation3 + $0x18] sm:$0x1]
        %v2433 = vsel %vm2428, 0, %v2432
        %2434 = vst [vmem:[#allocation3 + $0x18] sm:$0x1] %v2433
        %v2435 = vld [vmem:[#allocation3 + $0x30] sm:$0x1]
        %v2436 = vsel %vm2428, 0, %v2435
        %2437 = vst [vmem:[#allocation3 + $0x30] sm:$0x1] %v2436
        %v2438 = vld [vmem:[#allocation3 + $0x48] sm:$0x1]
        %v2439 = vsel %vm2428, 0, %v2438
        %2440 = vst [vmem:[#allocation3 + $0x48] sm:$0x1] %v2439
        %v2441 = vld [vmem:[#allocation3 + $0x60] sm:$0x1]
        %v2442 = vsel %vm2428, 0, %v2441
        %2443 = vst [vmem:[#allocation3 + $0x60] sm:$0x1] %v2442
        %v2444 = vld [vmem:[#allocation3 + $0x78] sm:$0x1]
        %v2445 = vsel %vm2428, 0, %v2444
        %2446 = vst [vmem:[#allocation3 + $0x78] sm:$0x1] %v2445
        %v2447 = vld [vmem:[#allocation3 + $0x90] sm:$0x1]
        %v2448 = vsel %vm2428, 0, %v2447
        %2449 = vst [vmem:[#allocation3 + $0x90] sm:$0x1] %v2448
        %v2450 = vld [vmem:[#allocation3 + $0xa8] sm:$0x1]
        %v2451 = vsel %vm2428, 0, %v2450
        %2452 = vst [vmem:[#allocation3 + $0xa8] sm:$0x1] %v2451
        %v2453 = vld [vmem:[#allocation3 + $0xc0] sm:$0x1]
        %v2454 = vsel %vm2428, 0, %v2453
        %2455 = vst [vmem:[#allocation3 + $0xc0] sm:$0x1] %v2454
        %v2456 = vld [vmem:[#allocation3 + $0xd8] sm:$0x1]
        %v2457 = vsel %vm2428, 0, %v2456
        %2458 = vst [vmem:[#allocation3 + $0xd8] sm:$0x1] %v2457
        %v2459 = vrot.slane %v2317, 1
        %v2460 = vor.u32 %v2314, %v2459
        %v2461 = vrot.slane %v2324, 1
        %v2462 = vor.u32 %v2321, %v2461
        %v2463 = vrot.slane %v2331, 1
        %v2464 = vor.u32 %v2328, %v2463
        %v2465 = vrot.slane %v2338, 1
        %v2466 = vor.u32 %v2335, %v2465
        %v2467 = vrot.slane %v2345, 1
        %v2468 = vor.u32 %v2342, %v2467
        %v2469 = vrot.slane %v2352, 1
        %v2470 = vor.u32 %v2349, %v2469
        %v2471 = vrot.slane %v2359, 1
        %v2472 = vor.u32 %v2356, %v2471
        %v2473 = vrot.slane %v2366, 1
        %v2474 = vor.u32 %v2363, %v2473
        %v2475 = vrot.slane %v2373, 1
        %v2476 = vor.u32 %v2370, %v2475
        %v2477 = vrot.slane %v2380, 1
        %v2478 = vor.u32 %v2377, %v2477
        %vm2489 = vmand %vm2393, %vm508
        %v2490 = vld [vmem:[#allocation3 + $0x10] sm:$0xff]
        %v2491 = vsel %vm2489, %v2460, %v2490
        %2492 = vst [vmem:[#allocation3 + $0x10] sm:$0xff] %v2491
        %v2493 = vld [vmem:[#allocation3 + $0x28] sm:$0xff]
        %v2494 = vsel %vm2489, %v2462, %v2493
        %2495 = vst [vmem:[#allocation3 + $0x28] sm:$0xff] %v2494
        %v2496 = vld [vmem:[#allocation3 + $0x40] sm:$0xff]
        %v2497 = vsel %vm2489, %v2464, %v2496
        %2498 = vst [vmem:[#allocation3 + $0x40] sm:$0xff] %v2497
        %v2499 = vld [vmem:[#allocation3 + $0x58] sm:$0xff]
        %v2500 = vsel %vm2489, %v2466, %v2499
        %2501 = vst [vmem:[#allocation3 + $0x58] sm:$0xff] %v2500
        %v2502 = vld [vmem:[#allocation3 + $0x70] sm:$0xff]
        %v2503 = vsel %vm2489, %v2468, %v2502
        %2504 = vst [vmem:[#allocation3 + $0x70] sm:$0xff] %v2503
        %v2505 = vld [vmem:[#allocation3 + $0x88] sm:$0xff]
        %v2506 = vsel %vm2489, %v2470, %v2505
        %2507 = vst [vmem:[#allocation3 + $0x88] sm:$0xff] %v2506
        %v2508 = vld [vmem:[#allocation3 + $0xa0] sm:$0xff]
        %v2509 = vsel %vm2489, %v2472, %v2508
        %2510 = vst [vmem:[#allocation3 + $0xa0] sm:$0xff] %v2509
        %v2511 = vld [vmem:[#allocation3 + $0xb8] sm:$0xff]
        %v2512 = vsel %vm2489, %v2474, %v2511
        %2513 = vst [vmem:[#allocation3 + $0xb8] sm:$0xff] %v2512
        %v2514 = vld [vmem:[#allocation3 + $0xd0] sm:$0xff]
        %v2515 = vsel %vm2489, %v2476, %v2514
        %2516 = vst [vmem:[#allocation3 + $0xd0] sm:$0xff] %v2515
        %v2517 = vld [vmem:[#allocation3 + $0xe8] sm:$0xff]
        %v2518 = vsel %vm2489, %v2478, %v2517
        %2519 = vst [vmem:[#allocation3 + $0xe8] sm:$0xff] %v2518
        %vm2520 = vcmask 1047559
        %vm2521 = vsmask.f32 7966
        %vm2522 = vmand %vm2520, %vm2521
        %v2523 = vld [vmem:[#allocation3 + $0x10] sm:$0x80]
        %v2524 = vsel %vm2522, 0, %v2523
        %2525 = vst [vmem:[#allocation3 + $0x10] sm:$0x80] %v2524
        %v2526 = vld [vmem:[#allocation3 + $0x28] sm:$0x80]
        %v2527 = vsel %vm2522, 0, %v2526
        %2528 = vst [vmem:[#allocation3 + $0x28] sm:$0x80] %v2527
        %v2529 = vld [vmem:[#allocation3 + $0x40] sm:$0x80]
        %v2530 = vsel %vm2522, 0, %v2529
        %2531 = vst [vmem:[#allocation3 + $0x40] sm:$0x80] %v2530
        %v2532 = vld [vmem:[#allocation3 + $0x58] sm:$0x80]
        %v2533 = vsel %vm2522, 0, %v2532
        %2534 = vst [vmem:[#allocation3 + $0x58] sm:$0x80] %v2533
        %v2535 = vld [vmem:[#allocation3 + $0x70] sm:$0x80]
        %v2536 = vsel %vm2522, 0, %v2535
        %2537 = vst [vmem:[#allocation3 + $0x70] sm:$0x80] %v2536
        %v2538 = vld [vmem:[#allocation3 + $0x88] sm:$0x80]
        %v2539 = vsel %vm2522, 0, %v2538
        %2540 = vst [vmem:[#allocation3 + $0x88] sm:$0x80] %v2539
        %v2541 = vld [vmem:[#allocation3 + $0xa0] sm:$0x80]
        %v2542 = vsel %vm2522, 0, %v2541
        %2543 = vst [vmem:[#allocation3 + $0xa0] sm:$0x80] %v2542
        %v2544 = vld [vmem:[#allocation3 + $0xb8] sm:$0x80]
        %v2545 = vsel %vm2522, 0, %v2544
        %2546 = vst [vmem:[#allocation3 + $0xb8] sm:$0x80] %v2545
        %v2547 = vld [vmem:[#allocation3 + $0xd0] sm:$0x80]
        %v2548 = vsel %vm2522, 0, %v2547
        %2549 = vst [vmem:[#allocation3 + $0xd0] sm:$0x80] %v2548
        %v2550 = vld [vmem:[#allocation3 + $0xe8] sm:$0x80]
        %v2551 = vsel %vm2522, 0, %v2550
        %2552 = vst [vmem:[#allocation3 + $0xe8] sm:$0x80] %v2551
        %p2553 = scmp.eq.s32.totalorder %s25, 0
        // Predicated region
        $region45: #{tpu_custom_call.1} parent=39 // pred_check
          %p2554 = pneg %p2553
        $region46: #{tpu_custom_call.1} parent=39 // pred_check_branch
          %2556 = sbr.rel (%p2554) target = $region48
        $region47: #{tpu_custom_call.1} parent=39 // pred_region
          %2557 = vst [vmem:[#allocation3] sm:$0xff] 0
          %2558 = vst [vmem:[#allocation3 + $0x8] sm:$0xff] 0
          %2559 = vst [vmem:[#allocation3 + $0x10] sm:$0xff] 0
        $region48: #{tpu_custom_call.1} parent=39 // pred_fallthru
          _
        %p2560 = scmp.eq.s32.totalorder %s25, 1
        // Predicated region
        $region49: #{tpu_custom_call.1} parent=39 // pred_check
          %p2561 = pneg %p2560
        $region50: #{tpu_custom_call.1} parent=39 // pred_check_branch
          %2563 = sbr.rel (%p2561) target = $region52
        $region51: #{tpu_custom_call.1} parent=39 // pred_region
          %s2564 = scalar_lea.vmem [#allocation3], 216
          %2565 = vst [vmem:[%s2564] sm:$0xff] 0
          %2566 = vst [vmem:[%s2564 + $0x8] sm:$0xff] 0
          %2567 = vst [vmem:[%s2564 + $0x10] sm:$0xff] 0
        $region52: #{tpu_custom_call.1} parent=39 // pred_fallthru
          _
        %v2568 = vld [vmem:[#allocation3] sm:$0xff]
        %v2569 = vld [vmem:[#allocation3 + $0x8] sm:$0xff]
        %v2570 = vld [vmem:[#allocation3 + $0x10] sm:$0xff]
        %v2571 = vld [vmem:[#allocation3 + $0x18] sm:$0xff]
        %v2572 = vld [vmem:[#allocation3 + $0x20] sm:$0xff]
        %v2573 = vld [vmem:[#allocation3 + $0x28] sm:$0xff]
        %v2574 = vld [vmem:[#allocation3 + $0x30] sm:$0xff]
        %v2575 = vld [vmem:[#allocation3 + $0x38] sm:$0xff]
        %v2576 = vld [vmem:[#allocation3 + $0x40] sm:$0xff]
        %v2577 = vld [vmem:[#allocation3 + $0x48] sm:$0xff]
        %v2578 = vld [vmem:[#allocation3 + $0x50] sm:$0xff]
        %v2579 = vld [vmem:[#allocation3 + $0x58] sm:$0xff]
        %v2580 = vld [vmem:[#allocation3 + $0x60] sm:$0xff]
        %v2581 = vld [vmem:[#allocation3 + $0x68] sm:$0xff]
        %v2582 = vld [vmem:[#allocation3 + $0x70] sm:$0xff]
        %v2583 = vld [vmem:[#allocation3 + $0x78] sm:$0xff]
        %v2584 = vld [vmem:[#allocation3 + $0x80] sm:$0xff]
        %v2585 = vld [vmem:[#allocation3 + $0x88] sm:$0xff]
        %v2586 = vld [vmem:[#allocation3 + $0x90] sm:$0xff]
        %v2587 = vld [vmem:[#allocation3 + $0x98] sm:$0xff]
        %v2588 = vld [vmem:[#allocation3 + $0xa0] sm:$0xff]
        %v2589 = vld [vmem:[#allocation3 + $0xa8] sm:$0xff]
        %v2590 = vld [vmem:[#allocation3 + $0xb0] sm:$0xff]
        %v2591 = vld [vmem:[#allocation3 + $0xb8] sm:$0xff]
        %v2592 = vld [vmem:[#allocation4] sm:$0xf]
        %v2593 = vld [vmem:[#allocation4 + $0x4] sm:$0xf]
        %v2594 = vld [vmem:[#allocation4 + $0x8] sm:$0xf]
        %v2595 = vld [vmem:[#allocation4 + $0xc] sm:$0xf]
        %v2596 = vld [vmem:[#allocation4 + $0x10] sm:$0xf]
        %v2597 = vld [vmem:[#allocation4 + $0x14] sm:$0xf]
        %v2598 = vld [vmem:[#allocation4 + $0x18] sm:$0xf]
        %v2599 = vld [vmem:[#allocation4 + $0x1c] sm:$0xf]
        %v2600 = vld [vmem:[#allocation4 + $0x20] sm:$0xf]
        %v2601 = vld [vmem:[#allocation4 + $0x24] sm:$0xf]
        %v2602 = vld [vmem:[#allocation4 + $0x28] sm:$0xf]
        %v2603 = vld [vmem:[#allocation4 + $0x2c] sm:$0xf]
        %v2604 = vld [vmem:[#allocation4 + $0x30] sm:$0xf]
        %v2605 = vld [vmem:[#allocation4 + $0x34] sm:$0xf]
        %v2606 = vld [vmem:[#allocation4 + $0x38] sm:$0xf]
        %v2607 = vld [vmem:[#allocation4 + $0x3c] sm:$0xf]
        %v2608 = vld [vmem:[#allocation4 + $0x40] sm:$0xf]
        %v2609 = vld [vmem:[#allocation4 + $0x44] sm:$0xf]
        %v2610 = vld [vmem:[#allocation4 + $0x48] sm:$0xf]
        %v2611 = vld [vmem:[#allocation4 + $0x4c] sm:$0xf]
        %v2612 = vld [vmem:[#allocation4 + $0x50] sm:$0xf]
        %v2613 = vld [vmem:[#allocation4 + $0x54] sm:$0xf]
        %v2614 = vld [vmem:[#allocation4 + $0x58] sm:$0xf]
        %v2615 = vld [vmem:[#allocation4 + $0x5c] sm:$0xf]
        %v2616 = vld [vmem:[#allocation4 + $0x60] sm:$0xf]
        %v2617 = vld [vmem:[#allocation4 + $0x64] sm:$0xf]
        %v2618 = vld [vmem:[#allocation4 + $0x68] sm:$0xf]
        %v2619 = vld [vmem:[#allocation4 + $0x6c] sm:$0xf]
        %v2620 = vld [vmem:[#allocation4 + $0x70] sm:$0xf]
        %v2621 = vld [vmem:[#allocation4 + $0x74] sm:$0xf]
        %v2622 = vld [vmem:[#allocation4 + $0x78] sm:$0xf]
        %v2623 = vld [vmem:[#allocation4 + $0x7c] sm:$0xf]
        %v2624 = vld [vmem:[#allocation4 + $0x80] sm:$0xf]
        %v2625 = vld [vmem:[#allocation4 + $0x84] sm:$0xf]
        %v2626 = vld [vmem:[#allocation4 + $0x88] sm:$0xf]
        %v2627 = vld [vmem:[#allocation4 + $0x8c] sm:$0xf]
        %v2628 = vld [vmem:[#allocation4 + $0x90] sm:$0xf]
        %v2629 = vld [vmem:[#allocation4 + $0x94] sm:$0xf]
        %v2630 = vld [vmem:[#allocation4 + $0x98] sm:$0xf]
        %v2631 = vld [vmem:[#allocation4 + $0x9c] sm:$0xf]
        %v2632 = vld [vmem:[#allocation4 + $0xa0] sm:$0xf]
        %v2633 = vld [vmem:[#allocation4 + $0xa4] sm:$0xf]
        %v2634 = vld [vmem:[#allocation4 + $0xa8] sm:$0xf]
        %v2635 = vld [vmem:[#allocation4 + $0xac] sm:$0xf]
        %v2636 = vld [vmem:[#allocation4 + $0xb0] sm:$0xf]
        %v2637 = vld [vmem:[#allocation4 + $0xb4] sm:$0xf]
        %v2638 = vld [vmem:[#allocation4 + $0xb8] sm:$0xf]
        %v2639 = vld [vmem:[#allocation4 + $0xbc] sm:$0xf]
        %s2640 = scalar_lea.vmem [#allocation3], 24
        %v2641 = vld [vmem:[%s2640] sm:$0xff]
        %v2642 = vld [vmem:[%s2640 + $0x8] sm:$0xff]
        %v2643 = vld [vmem:[%s2640 + $0x10] sm:$0xff]
        %v2644 = vld [vmem:[%s2640 + $0x18] sm:$0xff]
        %v2645 = vld [vmem:[%s2640 + $0x20] sm:$0xff]
        %v2646 = vld [vmem:[%s2640 + $0x28] sm:$0xff]
        %v2647 = vld [vmem:[%s2640 + $0x30] sm:$0xff]
        %v2648 = vld [vmem:[%s2640 + $0x38] sm:$0xff]
        %v2649 = vld [vmem:[%s2640 + $0x40] sm:$0xff]
        %v2650 = vld [vmem:[%s2640 + $0x48] sm:$0xff]
        %v2651 = vld [vmem:[%s2640 + $0x50] sm:$0xff]
        %v2652 = vld [vmem:[%s2640 + $0x58] sm:$0xff]
        %v2653 = vld [vmem:[%s2640 + $0x60] sm:$0xff]
        %v2654 = vld [vmem:[%s2640 + $0x68] sm:$0xff]
        %v2655 = vld [vmem:[%s2640 + $0x70] sm:$0xff]
        %v2656 = vld [vmem:[%s2640 + $0x78] sm:$0xff]
        %v2657 = vld [vmem:[%s2640 + $0x80] sm:$0xff]
        %v2658 = vld [vmem:[%s2640 + $0x88] sm:$0xff]
        %v2659 = vld [vmem:[%s2640 + $0x90] sm:$0xff]
        %v2660 = vld [vmem:[%s2640 + $0x98] sm:$0xff]
        %v2661 = vld [vmem:[%s2640 + $0xa0] sm:$0xff]
        %v2662 = vld [vmem:[%s2640 + $0xa8] sm:$0xff]
        %v2663 = vld [vmem:[%s2640 + $0xb0] sm:$0xff]
        %v2664 = vld [vmem:[%s2640 + $0xb8] sm:$0xff]
        %s2665 = scalar_lea.vmem [#allocation4], 192
        %v2666 = vld [vmem:[%s2665] sm:$0xf]
        %v2667 = vld [vmem:[%s2665 + $0x4] sm:$0xf]
        %v2668 = vld [vmem:[%s2665 + $0x8] sm:$0xf]
        %v2669 = vld [vmem:[%s2665 + $0xc] sm:$0xf]
        %v2670 = vld [vmem:[%s2665 + $0x10] sm:$0xf]
        %v2671 = vld [vmem:[%s2665 + $0x14] sm:$0xf]
        %v2672 = vld [vmem:[%s2665 + $0x18] sm:$0xf]
        %v2673 = vld [vmem:[%s2665 + $0x1c] sm:$0xf]
        %v2674 = vld [vmem:[%s2665 + $0x20] sm:$0xf]
        %v2675 = vld [vmem:[%s2665 + $0x24] sm:$0xf]
        %v2676 = vld [vmem:[%s2665 + $0x28] sm:$0xf]
        %v2677 = vld [vmem:[%s2665 + $0x2c] sm:$0xf]
        %v2678 = vld [vmem:[%s2665 + $0x30] sm:$0xf]
        %v2679 = vld [vmem:[%s2665 + $0x34] sm:$0xf]
        %v2680 = vld [vmem:[%s2665 + $0x38] sm:$0xf]
        %v2681 = vld [vmem:[%s2665 + $0x3c] sm:$0xf]
        %v2682 = vld [vmem:[%s2665 + $0x40] sm:$0xf]
        %v2683 = vld [vmem:[%s2665 + $0x44] sm:$0xf]
        %v2684 = vld [vmem:[%s2665 + $0x48] sm:$0xf]
        %v2685 = vld [vmem:[%s2665 + $0x4c] sm:$0xf]
        %v2686 = vld [vmem:[%s2665 + $0x50] sm:$0xf]
        %v2687 = vld [vmem:[%s2665 + $0x54] sm:$0xf]
        %v2688 = vld [vmem:[%s2665 + $0x58] sm:$0xf]
        %v2689 = vld [vmem:[%s2665 + $0x5c] sm:$0xf]
        %v2690 = vld [vmem:[%s2665 + $0x60] sm:$0xf]
        %v2691 = vld [vmem:[%s2665 + $0x64] sm:$0xf]
        %v2692 = vld [vmem:[%s2665 + $0x68] sm:$0xf]
        %v2693 = vld [vmem:[%s2665 + $0x6c] sm:$0xf]
        %v2694 = vld [vmem:[%s2665 + $0x70] sm:$0xf]
        %v2695 = vld [vmem:[%s2665 + $0x74] sm:$0xf]
        %v2696 = vld [vmem:[%s2665 + $0x78] sm:$0xf]
        %v2697 = vld [vmem:[%s2665 + $0x7c] sm:$0xf]
        %v2698 = vld [vmem:[%s2665 + $0x80] sm:$0xf]
        %v2699 = vld [vmem:[%s2665 + $0x84] sm:$0xf]
        %v2700 = vld [vmem:[%s2665 + $0x88] sm:$0xf]
        %v2701 = vld [vmem:[%s2665 + $0x8c] sm:$0xf]
        %v2702 = vld [vmem:[%s2665 + $0x90] sm:$0xf]
        %v2703 = vld [vmem:[%s2665 + $0x94] sm:$0xf]
        %v2704 = vld [vmem:[%s2665 + $0x98] sm:$0xf]
        %v2705 = vld [vmem:[%s2665 + $0x9c] sm:$0xf]
        %v2706 = vld [vmem:[%s2665 + $0xa0] sm:$0xf]
        %v2707 = vld [vmem:[%s2665 + $0xa4] sm:$0xf]
        %v2708 = vld [vmem:[%s2665 + $0xa8] sm:$0xf]
        %v2709 = vld [vmem:[%s2665 + $0xac] sm:$0xf]
        %v2710 = vld [vmem:[%s2665 + $0xb0] sm:$0xf]
        %v2711 = vld [vmem:[%s2665 + $0xb4] sm:$0xf]
        %v2712 = vld [vmem:[%s2665 + $0xb8] sm:$0xf]
        %v2713 = vld [vmem:[%s2665 + $0xbc] sm:$0xf]
        %v2762 = vunpack.c.l.b16 %v2666
        %v2763 = vunpack.c.l.b16 %v2667
        %v2764 = vunpack.c.l.b16 %v2668
        %v2765 = vunpack.c.l.b16 %v2669
        %v2766 = vunpack.c.l.b16 %v2670
        %v2767 = vunpack.c.l.b16 %v2671
        %v2768 = vunpack.c.l.b16 %v2672
        %v2769 = vunpack.c.l.b16 %v2673
        %v2770 = vunpack.c.l.b16 %v2674
        %v2771 = vunpack.c.l.b16 %v2675
        %v2772 = vunpack.c.l.b16 %v2676
        %v2773 = vunpack.c.l.b16 %v2677
        %v2774 = vunpack.c.l.b16 %v2678
        %v2775 = vunpack.c.l.b16 %v2679
        %v2776 = vunpack.c.l.b16 %v2680
        %v2777 = vunpack.c.l.b16 %v2681
        %v2778 = vunpack.c.l.b16 %v2682
        %v2779 = vunpack.c.l.b16 %v2683
        %v2780 = vunpack.c.l.b16 %v2684
        %v2781 = vunpack.c.l.b16 %v2685
        %v2782 = vunpack.c.l.b16 %v2686
        %v2783 = vunpack.c.l.b16 %v2687
        %v2784 = vunpack.c.l.b16 %v2688
        %v2785 = vunpack.c.l.b16 %v2689
        %v2786 = vunpack.c.l.b16 %v2690
        %v2787 = vunpack.c.l.b16 %v2691
        %v2788 = vunpack.c.l.b16 %v2692
        %v2789 = vunpack.c.l.b16 %v2693
        %v2790 = vunpack.c.l.b16 %v2694
        %v2791 = vunpack.c.l.b16 %v2695
        %v2792 = vunpack.c.l.b16 %v2696
        %v2793 = vunpack.c.l.b16 %v2697
        %v2794 = vunpack.c.l.b16 %v2698
        %v2795 = vunpack.c.l.b16 %v2699
        %v2796 = vunpack.c.l.b16 %v2700
        %v2797 = vunpack.c.l.b16 %v2701
        %v2798 = vunpack.c.l.b16 %v2702
        %v2799 = vunpack.c.l.b16 %v2703
        %v2800 = vunpack.c.l.b16 %v2704
        %v2801 = vunpack.c.l.b16 %v2705
        %v2802 = vunpack.c.l.b16 %v2706
        %v2803 = vunpack.c.l.b16 %v2707
        %v2804 = vunpack.c.l.b16 %v2708
        %v2805 = vunpack.c.l.b16 %v2709
        %v2806 = vunpack.c.l.b16 %v2710
        %v2807 = vunpack.c.l.b16 %v2711
        %v2808 = vunpack.c.l.b16 %v2712
        %v2809 = vunpack.c.l.b16 %v2713
        %v2810 = vpack.c.b16 %v2763, %v2762
        %v2811 = vpack.c.b16 %v2765, %v2764
        %v2812 = vpack.c.b16 %v2767, %v2766
        %v2813 = vpack.c.b16 %v2769, %v2768
        %v2814 = vpack.c.b16 %v2771, %v2770
        %v2815 = vpack.c.b16 %v2773, %v2772
        %v2816 = vpack.c.b16 %v2775, %v2774
        %v2817 = vpack.c.b16 %v2777, %v2776
        %v2818 = vpack.c.b16 %v2779, %v2778
        %v2819 = vpack.c.b16 %v2781, %v2780
        %v2820 = vpack.c.b16 %v2783, %v2782
        %v2821 = vpack.c.b16 %v2785, %v2784
        %v2822 = vpack.c.b16 %v2787, %v2786
        %v2823 = vpack.c.b16 %v2789, %v2788
        %v2824 = vpack.c.b16 %v2791, %v2790
        %v2825 = vpack.c.b16 %v2793, %v2792
        %v2826 = vpack.c.b16 %v2795, %v2794
        %v2827 = vpack.c.b16 %v2797, %v2796
        %v2828 = vpack.c.b16 %v2799, %v2798
        %v2829 = vpack.c.b16 %v2801, %v2800
        %v2830 = vpack.c.b16 %v2803, %v2802
        %v2831 = vpack.c.b16 %v2805, %v2804
        %v2832 = vpack.c.b16 %v2807, %v2806
        %v2833 = vpack.c.b16 %v2809, %v2808
        %2858 = vmatprep.subr.bf16.mxu0 0
        %2859 = vmatpush1.bf16.msra.mxu0 %v2810
        %2860 = vmatprep.subr.bf16.mxu0 0
        %2861 = vmatpush1.bf16.msra.mxu0 %v2811
        %2862 = vmatprep.subr.bf16.mxu0 0
        %2863 = vmatpush1.bf16.msra.mxu0 %v2812
        %2864 = vmatprep.subr.bf16.mxu0 0
        %2865 = vmatpush1.bf16.msra.mxu0 %v2813
        %2866 = vmatprep.subr.bf16.mxu0 0
        %2867 = vmatpush1.bf16.msra.mxu0 %v2814
        %2868 = vmatprep.subr.bf16.mxu0 0
        %2869 = vmatpush1.bf16.msra.mxu0 %v2815
        %2870 = vmatprep.subr.bf16.mxu0 0
        %2871 = vmatpush1.bf16.msra.mxu0 %v2816
        %2872 = vmatprep.subr.bf16.mxu0 0
        %2873 = vmatpush1.bf16.msra.mxu0 %v2817
        %2874 = vmatprep.subr.bf16.mxu0 0
        %2875 = vmatpush1.bf16.msra.mxu0 %v2818
        %2876 = vmatprep.subr.bf16.mxu0 0
        %2877 = vmatpush1.bf16.msra.mxu0 %v2819
        %2878 = vmatprep.subr.bf16.mxu0 0
        %2879 = vmatpush1.bf16.msra.mxu0 %v2820
        %2880 = vmatprep.subr.bf16.mxu0 0
        %2881 = vmatpush1.bf16.msra.mxu0 %v2821
        %2882 = vmatprep.subr.bf16.mxu0 0
        %2883 = vmatpush1.bf16.msra.mxu0 %v2822
        %2884 = vmatprep.subr.bf16.mxu0 0
        %2885 = vmatpush1.bf16.msra.mxu0 %v2823
        %2886 = vmatprep.subr.bf16.mxu0 0
        %2887 = vmatpush1.bf16.msra.mxu0 %v2824
        %2888 = vmatprep.subr.bf16.mxu0 0
        %2889 = vmatpush1.bf16.msra.mxu0 %v2825
        %2890 = vmatprep.mubr.bf16.mxu0 %v2642
        %2891 = vmatmul.mubr.bf16.gmra.mrb[0].mxu0 %v2641
        %v2892 = vpop.f32.mrb[0].mxu0
        %v2893 = vadd.f32 0.0, %v2892
        %v2894 = vpop.f32.mrb[0].mxu0
        %v2895 = vpop.f32.mrb[0].mxu0
        %v2896 = vadd.f32 0.0, %v2895
        %v2897 = vpop.f32.mrb[0].mxu0
        %2898 = vmatprep.mubr.bf16.mxu0 %v2645
        %2899 = vmatmul.mubr.bf16.gmra.mrb[0].mxu0 %v2644
        %v2900 = vpop.f32.mrb[0].mxu0
        %v2901 = vadd.f32 0.0, %v2900
        %v2902 = vpop.f32.mrb[0].mxu0
        %v2903 = vpop.f32.mrb[0].mxu0
        %v2904 = vadd.f32 0.0, %v2903
        %v2905 = vpop.f32.mrb[0].mxu0
        %2906 = vmatprep.mubr.bf16.mxu0 %v2648
        %2907 = vmatmul.mubr.bf16.gmra.mrb[0].mxu0 %v2647
        %v2908 = vpop.f32.mrb[0].mxu0
        %v2909 = vadd.f32 0.0, %v2908
        %v2910 = vpop.f32.mrb[0].mxu0
        %v2911 = vpop.f32.mrb[0].mxu0
        %v2912 = vadd.f32 0.0, %v2911
        %v2913 = vpop.f32.mrb[0].mxu0
        %2914 = vmatprep.mubr.bf16.mxu0 %v2651
        %2915 = vmatmul.mubr.bf16.gmra.mrb[0].mxu0 %v2650
        %v2916 = vpop.f32.mrb[0].mxu0
        %v2917 = vadd.f32 0.0, %v2916
        %v2918 = vpop.f32.mrb[0].mxu0
        %v2919 = vpop.f32.mrb[0].mxu0
        %v2920 = vadd.f32 0.0, %v2919
        %v2921 = vpop.f32.mrb[0].mxu0
        %2922 = vmatprep.mubr.bf16.mxu0 %v2654
        %2923 = vmatmul.mubr.bf16.gmra.mrb[0].mxu0 %v2653
        %v2924 = vpop.f32.mrb[0].mxu0
        %v2925 = vadd.f32 0.0, %v2924
        %v2926 = vpop.f32.mrb[0].mxu0
        %v2927 = vpop.f32.mrb[0].mxu0
        %v2928 = vadd.f32 0.0, %v2927
        %v2929 = vpop.f32.mrb[0].mxu0
        %2930 = vmatprep.mubr.bf16.mxu0 %v2657
        %2931 = vmatmul.mubr.bf16.gmra.mrb[0].mxu0 %v2656
        %v2932 = vpop.f32.mrb[0].mxu0
        %v2933 = vadd.f32 0.0, %v2932
        %v2934 = vpop.f32.mrb[0].mxu0
        %v2935 = vpop.f32.mrb[0].mxu0
        %v2936 = vadd.f32 0.0, %v2935
        %v2937 = vpop.f32.mrb[0].mxu0
        %2938 = vmatprep.mubr.bf16.mxu0 %v2660
        %2939 = vmatmul.mubr.bf16.gmra.mrb[0].mxu0 %v2659
        %v2940 = vpop.f32.mrb[0].mxu0
        %v2941 = vadd.f32 0.0, %v2940
        %v2942 = vpop.f32.mrb[0].mxu0
        %v2943 = vpop.f32.mrb[0].mxu0
        %v2944 = vadd.f32 0.0, %v2943
        %v2945 = vpop.f32.mrb[0].mxu0
        %2946 = vmatprep.mubr.bf16.mxu0 %v2663
        %2947 = vmatmul.mubr.bf16.gmra.mrb[0].mxu0 %v2662
        %v2948 = vpop.f32.mrb[0].mxu0
        %v2949 = vadd.f32 0.0, %v2948
        %v2950 = vpop.f32.mrb[0].mxu0
        %v2951 = vpop.f32.mrb[0].mxu0
        %v2952 = vadd.f32 0.0, %v2951
        %v2953 = vpop.f32.mrb[0].mxu0
        %2954 = vdwg.mxu0
        %2955 = vmatprep.subr.bf16.mxu0 0
        %2956 = vmatpush1.bf16.msra.mxu0 %v2826
        %2957 = vmatprep.subr.bf16.mxu0 0
        %2958 = vmatpush1.bf16.msra.mxu0 %v2827
        %2959 = vmatprep.subr.bf16.mxu0 0
        %2960 = vmatpush1.bf16.msra.mxu0 %v2828
        %2961 = vmatprep.subr.bf16.mxu0 0
        %2962 = vmatpush1.bf16.msra.mxu0 %v2829
        %2963 = vmatprep.subr.bf16.mxu0 0
        %2964 = vmatpush1.bf16.msra.mxu0 %v2830
        %2965 = vmatprep.subr.bf16.mxu0 0
        %2966 = vmatpush1.bf16.msra.mxu0 %v2831
        %2967 = vmatprep.subr.bf16.mxu0 0
        %2968 = vmatpush1.bf16.msra.mxu0 %v2832
        %2969 = vmatprep.subr.bf16.mxu0 0
        %2970 = vmatpush1.bf16.msra.mxu0 %v2833
        %2971 = vmatprep.subr.bf16.mxu0 0
        %2972 = vmatpush1.bf16.msra.mxu0 0
        %2973 = vmatprep.subr.bf16.mxu0 0
        %2974 = vmatpush1.bf16.msra.mxu0 0
        %2975 = vmatprep.subr.bf16.mxu0 0
        %2976 = vmatpush1.bf16.msra.mxu0 0
        %2977 = vmatprep.subr.bf16.mxu0 0
        %2978 = vmatpush1.bf16.msra.mxu0 0
        %2979 = vmatprep.subr.bf16.mxu0 0
        %2980 = vmatpush1.bf16.msra.mxu0 0
        %2981 = vmatprep.subr.bf16.mxu0 0
        %2982 = vmatpush1.bf16.msra.mxu0 0
        %2983 = vmatprep.subr.bf16.mxu0 0
        %2984 = vmatpush1.bf16.msra.mxu0 0
        %2985 = vmatprep.subr.bf16.mxu0 0
        %2986 = vmatpush1.bf16.msra.mxu0 0
        %2987 = vmatprep.mubr.bf16.mxu0 0
        %2988 = vmatmul.mubr.bf16.gmra.mrb[0].mxu0 %v2643
        %v2989 = vpop.f32.mrb[0].mxu0
        %v2990 = vadd.f32 %v2893, %v2989
        %v2991 = vpop.f32.mrb[0].mxu0
        %v2992 = vpop.f32.mrb[0].mxu0
        %v2993 = vadd.f32 %v2896, %v2992
        %v2994 = vpop.f32.mrb[0].mxu0
        %2995 = vmatprep.mubr.bf16.mxu0 0
        %2996 = vmatmul.mubr.bf16.gmra.mrb[0].mxu0 %v2646
        %v2997 = vpop.f32.mrb[0].mxu0
        %v2998 = vadd.f32 %v2901, %v2997
        %v2999 = vpop.f32.mrb[0].mxu0
        %v3000 = vpop.f32.mrb[0].mxu0
        %v3001 = vadd.f32 %v2904, %v3000
        %v3002 = vpop.f32.mrb[0].mxu0
        %3003 = vmatprep.mubr.bf16.mxu0 0
        %3004 = vmatmul.mubr.bf16.gmra.mrb[0].mxu0 %v2649
        %v3005 = vpop.f32.mrb[0].mxu0
        %v3006 = vadd.f32 %v2909, %v3005
        %v3007 = vpop.f32.mrb[0].mxu0
        %v3008 = vpop.f32.mrb[0].mxu0
        %v3009 = vadd.f32 %v2912, %v3008
        %v3010 = vpop.f32.mrb[0].mxu0
        %3011 = vmatprep.mubr.bf16.mxu0 0
        %3012 = vmatmul.mubr.bf16.gmra.mrb[0].mxu0 %v2652
        %v3013 = vpop.f32.mrb[0].mxu0
        %v3014 = vadd.f32 %v2917, %v3013
        %v3015 = vpop.f32.mrb[0].mxu0
        %v3016 = vpop.f32.mrb[0].mxu0
        %v3017 = vadd.f32 %v2920, %v3016
        %v3018 = vpop.f32.mrb[0].mxu0
        %3019 = vmatprep.mubr.bf16.mxu0 0
        %3020 = vmatmul.mubr.bf16.gmra.mrb[0].mxu0 %v2655
        %v3021 = vpop.f32.mrb[0].mxu0
        %v3022 = vadd.f32 %v2925, %v3021
        %v3023 = vpop.f32.mrb[0].mxu0
        %v3024 = vpop.f32.mrb[0].mxu0
        %v3025 = vadd.f32 %v2928, %v3024
        %v3026 = vpop.f32.mrb[0].mxu0
        %3027 = vmatprep.mubr.bf16.mxu0 0
        %3028 = vmatmul.mubr.bf16.gmra.mrb[0].mxu0 %v2658
        %v3029 = vpop.f32.mrb[0].mxu0
        %v3030 = vadd.f32 %v2933, %v3029
        %v3031 = vpop.f32.mrb[0].mxu0
        %v3032 = vpop.f32.mrb[0].mxu0
        %v3033 = vadd.f32 %v2936, %v3032
        %v3034 = vpop.f32.mrb[0].mxu0
        %3035 = vmatprep.mubr.bf16.mxu0 0
        %3036 = vmatmul.mubr.bf16.gmra.mrb[0].mxu0 %v2661
        %v3037 = vpop.f32.mrb[0].mxu0
        %v3038 = vadd.f32 %v2941, %v3037
        %v3039 = vpop.f32.mrb[0].mxu0
        %v3040 = vpop.f32.mrb[0].mxu0
        %v3041 = vadd.f32 %v2944, %v3040
        %v3042 = vpop.f32.mrb[0].mxu0
        %3043 = vmatprep.mubr.bf16.mxu0 0
        %3044 = vmatmul.mubr.bf16.gmra.mrb[0].mxu0 %v2664
        %v3045 = vpop.f32.mrb[0].mxu0
        %v3046 = vadd.f32 %v2949, %v3045
        %v3047 = vpop.f32.mrb[0].mxu0
        %v3048 = vpop.f32.mrb[0].mxu0
        %v3049 = vadd.f32 %v2952, %v3048
        %v3050 = vpop.f32.mrb[0].mxu0
        %3051 = vdwg.mxu0
        %v3100 = vunpack.c.l.b16 %v2592
        %v3101 = vunpack.c.l.b16 %v2593
        %v3102 = vunpack.c.l.b16 %v2594
        %v3103 = vunpack.c.l.b16 %v2595
        %v3104 = vunpack.c.l.b16 %v2596
        %v3105 = vunpack.c.l.b16 %v2597
        %v3106 = vunpack.c.l.b16 %v2598
        %v3107 = vunpack.c.l.b16 %v2599
        %v3108 = vunpack.c.l.b16 %v2600
        %v3109 = vunpack.c.l.b16 %v2601
        %v3110 = vunpack.c.l.b16 %v2602
        %v3111 = vunpack.c.l.b16 %v2603
        %v3112 = vunpack.c.l.b16 %v2604
        %v3113 = vunpack.c.l.b16 %v2605
        %v3114 = vunpack.c.l.b16 %v2606
        %v3115 = vunpack.c.l.b16 %v2607
        %v3116 = vunpack.c.l.b16 %v2608
        %v3117 = vunpack.c.l.b16 %v2609
        %v3118 = vunpack.c.l.b16 %v2610
        %v3119 = vunpack.c.l.b16 %v2611
        %v3120 = vunpack.c.l.b16 %v2612
        %v3121 = vunpack.c.l.b16 %v2613
        %v3122 = vunpack.c.l.b16 %v2614
        %v3123 = vunpack.c.l.b16 %v2615
        %v3124 = vunpack.c.l.b16 %v2616
        %v3125 = vunpack.c.l.b16 %v2617
        %v3126 = vunpack.c.l.b16 %v2618
        %v3127 = vunpack.c.l.b16 %v2619
        %v3128 = vunpack.c.l.b16 %v2620
        %v3129 = vunpack.c.l.b16 %v2621
        %v3130 = vunpack.c.l.b16 %v2622
        %v3131 = vunpack.c.l.b16 %v2623
        %v3132 = vunpack.c.l.b16 %v2624
        %v3133 = vunpack.c.l.b16 %v2625
        %v3134 = vunpack.c.l.b16 %v2626
        %v3135 = vunpack.c.l.b16 %v2627
        %v3136 = vunpack.c.l.b16 %v2628
        %v3137 = vunpack.c.l.b16 %v2629
        %v3138 = vunpack.c.l.b16 %v2630
        %v3139 = vunpack.c.l.b16 %v2631
        %v3140 = vunpack.c.l.b16 %v2632
        %v3141 = vunpack.c.l.b16 %v2633
        %v3142 = vunpack.c.l.b16 %v2634
        %v3143 = vunpack.c.l.b16 %v2635
        %v3144 = vunpack.c.l.b16 %v2636
        %v3145 = vunpack.c.l.b16 %v2637
        %v3146 = vunpack.c.l.b16 %v2638
        %v3147 = vunpack.c.l.b16 %v2639
        %v3148 = vpack.c.b16 %v3101, %v3100
        %v3149 = vpack.c.b16 %v3103, %v3102
        %v3150 = vpack.c.b16 %v3105, %v3104
        %v3151 = vpack.c.b16 %v3107, %v3106
        %v3152 = vpack.c.b16 %v3109, %v3108
        %v3153 = vpack.c.b16 %v3111, %v3110
        %v3154 = vpack.c.b16 %v3113, %v3112
        %v3155 = vpack.c.b16 %v3115, %v3114
        %v3156 = vpack.c.b16 %v3117, %v3116
        %v3157 = vpack.c.b16 %v3119, %v3118
        %v3158 = vpack.c.b16 %v3121, %v3120
        %v3159 = vpack.c.b16 %v3123, %v3122
        %v3160 = vpack.c.b16 %v3125, %v3124
        %v3161 = vpack.c.b16 %v3127, %v3126
        %v3162 = vpack.c.b16 %v3129, %v3128
        %v3163 = vpack.c.b16 %v3131, %v3130
        %v3164 = vpack.c.b16 %v3133, %v3132
        %v3165 = vpack.c.b16 %v3135, %v3134
        %v3166 = vpack.c.b16 %v3137, %v3136
        %v3167 = vpack.c.b16 %v3139, %v3138
        %v3168 = vpack.c.b16 %v3141, %v3140
        %v3169 = vpack.c.b16 %v3143, %v3142
        %v3170 = vpack.c.b16 %v3145, %v3144
        %v3171 = vpack.c.b16 %v3147, %v3146
        %3196 = vmatprep.subr.bf16.mxu0 0
        %3197 = vmatpush1.bf16.msra.mxu0 %v3148
        %3198 = vmatprep.subr.bf16.mxu0 0
        %3199 = vmatpush1.bf16.msra.mxu0 %v3149
        %3200 = vmatprep.subr.bf16.mxu0 0
        %3201 = vmatpush1.bf16.msra.mxu0 %v3150
        %3202 = vmatprep.subr.bf16.mxu0 0
        %3203 = vmatpush1.bf16.msra.mxu0 %v3151
        %3204 = vmatprep.subr.bf16.mxu0 0
        %3205 = vmatpush1.bf16.msra.mxu0 %v3152
        %3206 = vmatprep.subr.bf16.mxu0 0
        %3207 = vmatpush1.bf16.msra.mxu0 %v3153
        %3208 = vmatprep.subr.bf16.mxu0 0
        %3209 = vmatpush1.bf16.msra.mxu0 %v3154
        %3210 = vmatprep.subr.bf16.mxu0 0
        %3211 = vmatpush1.bf16.msra.mxu0 %v3155
        %3212 = vmatprep.subr.bf16.mxu0 0
        %3213 = vmatpush1.bf16.msra.mxu0 %v3156
        %3214 = vmatprep.subr.bf16.mxu0 0
        %3215 = vmatpush1.bf16.msra.mxu0 %v3157
        %3216 = vmatprep.subr.bf16.mxu0 0
        %3217 = vmatpush1.bf16.msra.mxu0 %v3158
        %3218 = vmatprep.subr.bf16.mxu0 0
        %3219 = vmatpush1.bf16.msra.mxu0 %v3159
        %3220 = vmatprep.subr.bf16.mxu0 0
        %3221 = vmatpush1.bf16.msra.mxu0 %v3160
        %3222 = vmatprep.subr.bf16.mxu0 0
        %3223 = vmatpush1.bf16.msra.mxu0 %v3161
        %3224 = vmatprep.subr.bf16.mxu0 0
        %3225 = vmatpush1.bf16.msra.mxu0 %v3162
        %3226 = vmatprep.subr.bf16.mxu0 0
        %3227 = vmatpush1.bf16.msra.mxu0 %v3163
        %3228 = vmatprep.mubr.bf16.mxu0 %v2569
        %3229 = vmatmul.mubr.bf16.gmra.mrb[0].mxu0 %v2568
        %v3230 = vpop.f32.mrb[0].mxu0
        %v3231 = vadd.f32 %v2990, %v3230
        %v3232 = vpop.f32.mrb[0].mxu0
        %v3233 = vpop.f32.mrb[0].mxu0
        %v3234 = vadd.f32 %v2993, %v3233
        %v3235 = vpop.f32.mrb[0].mxu0
        %3236 = vmatprep.mubr.bf16.mxu0 %v2572
        %3237 = vmatmul.mubr.bf16.gmra.mrb[0].mxu0 %v2571
        %v3238 = vpop.f32.mrb[0].mxu0
        %v3239 = vadd.f32 %v2998, %v3238
        %v3240 = vpop.f32.mrb[0].mxu0
        %v3241 = vpop.f32.mrb[0].mxu0
        %v3242 = vadd.f32 %v3001, %v3241
        %v3243 = vpop.f32.mrb[0].mxu0
        %3244 = vmatprep.mubr.bf16.mxu0 %v2575
        %3245 = vmatmul.mubr.bf16.gmra.mrb[0].mxu0 %v2574
        %v3246 = vpop.f32.mrb[0].mxu0
        %v3247 = vadd.f32 %v3006, %v3246
        %v3248 = vpop.f32.mrb[0].mxu0
        %v3249 = vpop.f32.mrb[0].mxu0
        %v3250 = vadd.f32 %v3009, %v3249
        %v3251 = vpop.f32.mrb[0].mxu0
        %3252 = vmatprep.mubr.bf16.mxu0 %v2578
        %3253 = vmatmul.mubr.bf16.gmra.mrb[0].mxu0 %v2577
        %v3254 = vpop.f32.mrb[0].mxu0
        %v3255 = vadd.f32 %v3014, %v3254
        %v3256 = vpop.f32.mrb[0].mxu0
        %v3257 = vpop.f32.mrb[0].mxu0
        %v3258 = vadd.f32 %v3017, %v3257
        %v3259 = vpop.f32.mrb[0].mxu0
        %3260 = vmatprep.mubr.bf16.mxu0 %v2581
        %3261 = vmatmul.mubr.bf16.gmra.mrb[0].mxu0 %v2580
        %v3262 = vpop.f32.mrb[0].mxu0
        %v3263 = vadd.f32 %v3022, %v3262
        %v3264 = vpop.f32.mrb[0].mxu0
        %v3265 = vpop.f32.mrb[0].mxu0
        %v3266 = vadd.f32 %v3025, %v3265
        %v3267 = vpop.f32.mrb[0].mxu0
        %3268 = vmatprep.mubr.bf16.mxu0 %v2584
        %3269 = vmatmul.mubr.bf16.gmra.mrb[0].mxu0 %v2583
        %v3270 = vpop.f32.mrb[0].mxu0
        %v3271 = vadd.f32 %v3030, %v3270
        %v3272 = vpop.f32.mrb[0].mxu0
        %v3273 = vpop.f32.mrb[0].mxu0
        %v3274 = vadd.f32 %v3033, %v3273
        %v3275 = vpop.f32.mrb[0].mxu0
        %3276 = vmatprep.mubr.bf16.mxu0 %v2587
        %3277 = vmatmul.mubr.bf16.gmra.mrb[0].mxu0 %v2586
        %v3278 = vpop.f32.mrb[0].mxu0
        %v3279 = vadd.f32 %v3038, %v3278
        %v3280 = vpop.f32.mrb[0].mxu0
        %v3281 = vpop.f32.mrb[0].mxu0
        %v3282 = vadd.f32 %v3041, %v3281
        %v3283 = vpop.f32.mrb[0].mxu0
        %3284 = vmatprep.mubr.bf16.mxu0 %v2590
        %3285 = vmatmul.mubr.bf16.gmra.mrb[0].mxu0 %v2589
        %v3286 = vpop.f32.mrb[0].mxu0
        %v3287 = vadd.f32 %v3046, %v3286
        %v3288 = vpop.f32.mrb[0].mxu0
        %v3289 = vpop.f32.mrb[0].mxu0
        %v3290 = vadd.f32 %v3049, %v3289
        %v3291 = vpop.f32.mrb[0].mxu0
        %3292 = vdwg.mxu0
        %3293 = vmatprep.subr.bf16.mxu0 0
        %3294 = vmatpush1.bf16.msra.mxu0 %v3164
        %3295 = vmatprep.subr.bf16.mxu0 0
        %3296 = vmatpush1.bf16.msra.mxu0 %v3165
        %3297 = vmatprep.subr.bf16.mxu0 0
        %3298 = vmatpush1.bf16.msra.mxu0 %v3166
        %3299 = vmatprep.subr.bf16.mxu0 0
        %3300 = vmatpush1.bf16.msra.mxu0 %v3167
        %3301 = vmatprep.subr.bf16.mxu0 0
        %3302 = vmatpush1.bf16.msra.mxu0 %v3168
        %3303 = vmatprep.subr.bf16.mxu0 0
        %3304 = vmatpush1.bf16.msra.mxu0 %v3169
        %3305 = vmatprep.subr.bf16.mxu0 0
        %3306 = vmatpush1.bf16.msra.mxu0 %v3170
        %3307 = vmatprep.subr.bf16.mxu0 0
        %3308 = vmatpush1.bf16.msra.mxu0 %v3171
        %3309 = vmatprep.subr.bf16.mxu0 0
        %3310 = vmatpush1.bf16.msra.mxu0 0
        %3311 = vmatprep.subr.bf16.mxu0 0
        %3312 = vmatpush1.bf16.msra.mxu0 0
        %3313 = vmatprep.subr.bf16.mxu0 0
        %3314 = vmatpush1.bf16.msra.mxu0 0
        %3315 = vmatprep.subr.bf16.mxu0 0
        %3316 = vmatpush1.bf16.msra.mxu0 0
        %3317 = vmatprep.subr.bf16.mxu0 0
        %3318 = vmatpush1.bf16.msra.mxu0 0
        %3319 = vmatprep.subr.bf16.mxu0 0
        %3320 = vmatpush1.bf16.msra.mxu0 0
        %3321 = vmatprep.subr.bf16.mxu0 0
        %3322 = vmatpush1.bf16.msra.mxu0 0
        %3323 = vmatprep.subr.bf16.mxu0 0
        %3324 = vmatpush1.bf16.msra.mxu0 0
        %3325 = vmatprep.mubr.bf16.mxu0 0
        %3326 = vmatmul.mubr.bf16.gmra.mrb[0].mxu0 %v2570
        %v3327 = vpop.f32.mrb[0].mxu0
        %v3328 = vadd.f32 %v3231, %v3327
        %v3329 = vpop.f32.mrb[0].mxu0
        %v3330 = vpop.f32.mrb[0].mxu0
        %v3331 = vadd.f32 %v3234, %v3330
        %v3332 = vpop.f32.mrb[0].mxu0
        %3333 = vmatprep.mubr.bf16.mxu0 0
        %3334 = vmatmul.mubr.bf16.gmra.mrb[0].mxu0 %v2573
        %v3335 = vpop.f32.mrb[0].mxu0
        %v3336 = vadd.f32 %v3239, %v3335
        %v3337 = vpop.f32.mrb[0].mxu0
        %v3338 = vpop.f32.mrb[0].mxu0
        %v3339 = vadd.f32 %v3242, %v3338
        %v3340 = vpop.f32.mrb[0].mxu0
        %3341 = vmatprep.mubr.bf16.mxu0 0
        %3342 = vmatmul.mubr.bf16.gmra.mrb[0].mxu0 %v2576
        %v3343 = vpop.f32.mrb[0].mxu0
        %v3344 = vadd.f32 %v3247, %v3343
        %v3345 = vpop.f32.mrb[0].mxu0
        %v3346 = vpop.f32.mrb[0].mxu0
        %v3347 = vadd.f32 %v3250, %v3346
        %v3348 = vpop.f32.mrb[0].mxu0
        %3349 = vmatprep.mubr.bf16.mxu0 0
        %3350 = vmatmul.mubr.bf16.gmra.mrb[0].mxu0 %v2579
        %v3351 = vpop.f32.mrb[0].mxu0
        %v3352 = vadd.f32 %v3255, %v3351
        %v3353 = vpop.f32.mrb[0].mxu0
        %v3354 = vpop.f32.mrb[0].mxu0
        %v3355 = vadd.f32 %v3258, %v3354
        %v3356 = vpop.f32.mrb[0].mxu0
        %3357 = vmatprep.mubr.bf16.mxu0 0
        %3358 = vmatmul.mubr.bf16.gmra.mrb[0].mxu0 %v2582
        %v3359 = vpop.f32.mrb[0].mxu0
        %v3360 = vadd.f32 %v3263, %v3359
        %v3361 = vpop.f32.mrb[0].mxu0
        %v3362 = vpop.f32.mrb[0].mxu0
        %v3363 = vadd.f32 %v3266, %v3362
        %v3364 = vpop.f32.mrb[0].mxu0
        %3365 = vmatprep.mubr.bf16.mxu0 0
        %3366 = vmatmul.mubr.bf16.gmra.mrb[0].mxu0 %v2585
        %v3367 = vpop.f32.mrb[0].mxu0
        %v3368 = vadd.f32 %v3271, %v3367
        %v3369 = vpop.f32.mrb[0].mxu0
        %v3370 = vpop.f32.mrb[0].mxu0
        %v3371 = vadd.f32 %v3274, %v3370
        %v3372 = vpop.f32.mrb[0].mxu0
        %3373 = vmatprep.mubr.bf16.mxu0 0
        %3374 = vmatmul.mubr.bf16.gmra.mrb[0].mxu0 %v2588
        %v3375 = vpop.f32.mrb[0].mxu0
        %v3376 = vadd.f32 %v3279, %v3375
        %v3377 = vpop.f32.mrb[0].mxu0
        %v3378 = vpop.f32.mrb[0].mxu0
        %v3379 = vadd.f32 %v3282, %v3378
        %v3380 = vpop.f32.mrb[0].mxu0
        %3381 = vmatprep.mubr.bf16.mxu0 0
        %3382 = vmatmul.mubr.bf16.gmra.mrb[0].mxu0 %v2591
        %v3383 = vpop.f32.mrb[0].mxu0
        %v3384 = vadd.f32 %v3287, %v3383
        %v3385 = vpop.f32.mrb[0].mxu0
        %v3386 = vpop.f32.mrb[0].mxu0
        %v3387 = vadd.f32 %v3290, %v3386
        %v3388 = vpop.f32.mrb[0].mxu0
        %3389 = vdwg.mxu0
        %s3390 = scalar_lea.vmem [#allocation3], 48
        %v3391 = vld [vmem:[%s3390] sm:$0xff]
        %v3392 = vld [vmem:[%s3390 + $0x8] sm:$0xff]
        %v3393 = vld [vmem:[%s3390 + $0x10] sm:$0xff]
        %v3394 = vld [vmem:[%s3390 + $0x18] sm:$0xff]
        %v3395 = vld [vmem:[%s3390 + $0x20] sm:$0xff]
        %v3396 = vld [vmem:[%s3390 + $0x28] sm:$0xff]
        %v3397 = vld [vmem:[%s3390 + $0x30] sm:$0xff]
        %v3398 = vld [vmem:[%s3390 + $0x38] sm:$0xff]
        %v3399 = vld [vmem:[%s3390 + $0x40] sm:$0xff]
        %v3400 = vld [vmem:[%s3390 + $0x48] sm:$0xff]
        %v3401 = vld [vmem:[%s3390 + $0x50] sm:$0xff]
        %v3402 = vld [vmem:[%s3390 + $0x58] sm:$0xff]
        %v3403 = vld [vmem:[%s3390 + $0x60] sm:$0xff]
        %v3404 = vld [vmem:[%s3390 + $0x68] sm:$0xff]
        %v3405 = vld [vmem:[%s3390 + $0x70] sm:$0xff]
        %v3406 = vld [vmem:[%s3390 + $0x78] sm:$0xff]
        %v3407 = vld [vmem:[%s3390 + $0x80] sm:$0xff]
        %v3408 = vld [vmem:[%s3390 + $0x88] sm:$0xff]
        %v3409 = vld [vmem:[%s3390 + $0x90] sm:$0xff]
        %v3410 = vld [vmem:[%s3390 + $0x98] sm:$0xff]
        %v3411 = vld [vmem:[%s3390 + $0xa0] sm:$0xff]
        %v3412 = vld [vmem:[%s3390 + $0xa8] sm:$0xff]
        %v3413 = vld [vmem:[%s3390 + $0xb0] sm:$0xff]
        %v3414 = vld [vmem:[%s3390 + $0xb8] sm:$0xff]
        %s3415 = scalar_lea.vmem [#allocation4], 384
        %v3416 = vld [vmem:[%s3415] sm:$0xf]
        %v3417 = vld [vmem:[%s3415 + $0x4] sm:$0xf]
        %v3418 = vld [vmem:[%s3415 + $0x8] sm:$0xf]
        %v3419 = vld [vmem:[%s3415 + $0xc] sm:$0xf]
        %v3420 = vld [vmem:[%s3415 + $0x10] sm:$0xf]
        %v3421 = vld [vmem:[%s3415 + $0x14] sm:$0xf]
        %v3422 = vld [vmem:[%s3415 + $0x18] sm:$0xf]
        %v3423 = vld [vmem:[%s3415 + $0x1c] sm:$0xf]
        %v3424 = vld [vmem:[%s3415 + $0x20] sm:$0xf]
        %v3425 = vld [vmem:[%s3415 + $0x24] sm:$0xf]
        %v3426 = vld [vmem:[%s3415 + $0x28] sm:$0xf]
        %v3427 = vld [vmem:[%s3415 + $0x2c] sm:$0xf]
        %v3428 = vld [vmem:[%s3415 + $0x30] sm:$0xf]
        %v3429 = vld [vmem:[%s3415 + $0x34] sm:$0xf]
        %v3430 = vld [vmem:[%s3415 + $0x38] sm:$0xf]
        %v3431 = vld [vmem:[%s3415 + $0x3c] sm:$0xf]
        %v3432 = vld [vmem:[%s3415 + $0x40] sm:$0xf]
        %v3433 = vld [vmem:[%s3415 + $0x44] sm:$0xf]
        %v3434 = vld [vmem:[%s3415 + $0x48] sm:$0xf]
        %v3435 = vld [vmem:[%s3415 + $0x4c] sm:$0xf]
        %v3436 = vld [vmem:[%s3415 + $0x50] sm:$0xf]
        %v3437 = vld [vmem:[%s3415 + $0x54] sm:$0xf]
        %v3438 = vld [vmem:[%s3415 + $0x58] sm:$0xf]
        %v3439 = vld [vmem:[%s3415 + $0x5c] sm:$0xf]
        %v3440 = vld [vmem:[%s3415 + $0x60] sm:$0xf]
        %v3441 = vld [vmem:[%s3415 + $0x64] sm:$0xf]
        %v3442 = vld [vmem:[%s3415 + $0x68] sm:$0xf]
        %v3443 = vld [vmem:[%s3415 + $0x6c] sm:$0xf]
        %v3444 = vld [vmem:[%s3415 + $0x70] sm:$0xf]
        %v3445 = vld [vmem:[%s3415 + $0x74] sm:$0xf]
        %v3446 = vld [vmem:[%s3415 + $0x78] sm:$0xf]
        %v3447 = vld [vmem:[%s3415 + $0x7c] sm:$0xf]
        %v3448 = vld [vmem:[%s3415 + $0x80] sm:$0xf]
        %v3449 = vld [vmem:[%s3415 + $0x84] sm:$0xf]
        %v3450 = vld [vmem:[%s3415 + $0x88] sm:$0xf]
        %v3451 = vld [vmem:[%s3415 + $0x8c] sm:$0xf]
        %v3452 = vld [vmem:[%s3415 + $0x90] sm:$0xf]
        %v3453 = vld [vmem:[%s3415 + $0x94] sm:$0xf]
        %v3454 = vld [vmem:[%s3415 + $0x98] sm:$0xf]
        %v3455 = vld [vmem:[%s3415 + $0x9c] sm:$0xf]
        %v3456 = vld [vmem:[%s3415 + $0xa0] sm:$0xf]
        %v3457 = vld [vmem:[%s3415 + $0xa4] sm:$0xf]
        %v3458 = vld [vmem:[%s3415 + $0xa8] sm:$0xf]
        %v3459 = vld [vmem:[%s3415 + $0xac] sm:$0xf]
        %v3460 = vld [vmem:[%s3415 + $0xb0] sm:$0xf]
        %v3461 = vld [vmem:[%s3415 + $0xb4] sm:$0xf]
        %v3462 = vld [vmem:[%s3415 + $0xb8] sm:$0xf]
        %v3463 = vld [vmem:[%s3415 + $0xbc] sm:$0xf]
        %v3512 = vunpack.c.l.b16 %v3416
        %v3513 = vunpack.c.l.b16 %v3417
        %v3514 = vunpack.c.l.b16 %v3418
        %v3515 = vunpack.c.l.b16 %v3419
        %v3516 = vunpack.c.l.b16 %v3420
        %v3517 = vunpack.c.l.b16 %v3421
        %v3518 = vunpack.c.l.b16 %v3422
        %v3519 = vunpack.c.l.b16 %v3423
        %v3520 = vunpack.c.l.b16 %v3424
        %v3521 = vunpack.c.l.b16 %v3425
        %v3522 = vunpack.c.l.b16 %v3426
        %v3523 = vunpack.c.l.b16 %v3427
        %v3524 = vunpack.c.l.b16 %v3428
        %v3525 = vunpack.c.l.b16 %v3429
        %v3526 = vunpack.c.l.b16 %v3430
        %v3527 = vunpack.c.l.b16 %v3431
        %v3528 = vunpack.c.l.b16 %v3432
        %v3529 = vunpack.c.l.b16 %v3433
        %v3530 = vunpack.c.l.b16 %v3434
        %v3531 = vunpack.c.l.b16 %v3435
        %v3532 = vunpack.c.l.b16 %v3436
        %v3533 = vunpack.c.l.b16 %v3437
        %v3534 = vunpack.c.l.b16 %v3438
        %v3535 = vunpack.c.l.b16 %v3439
        %v3536 = vunpack.c.l.b16 %v3440
        %v3537 = vunpack.c.l.b16 %v3441
        %v3538 = vunpack.c.l.b16 %v3442
        %v3539 = vunpack.c.l.b16 %v3443
        %v3540 = vunpack.c.l.b16 %v3444
        %v3541 = vunpack.c.l.b16 %v3445
        %v3542 = vunpack.c.l.b16 %v3446
        %v3543 = vunpack.c.l.b16 %v3447
        %v3544 = vunpack.c.l.b16 %v3448
        %v3545 = vunpack.c.l.b16 %v3449
        %v3546 = vunpack.c.l.b16 %v3450
        %v3547 = vunpack.c.l.b16 %v3451
        %v3548 = vunpack.c.l.b16 %v3452
        %v3549 = vunpack.c.l.b16 %v3453
        %v3550 = vunpack.c.l.b16 %v3454
        %v3551 = vunpack.c.l.b16 %v3455
        %v3552 = vunpack.c.l.b16 %v3456
        %v3553 = vunpack.c.l.b16 %v3457
        %v3554 = vunpack.c.l.b16 %v3458
        %v3555 = vunpack.c.l.b16 %v3459
        %v3556 = vunpack.c.l.b16 %v3460
        %v3557 = vunpack.c.l.b16 %v3461
        %v3558 = vunpack.c.l.b16 %v3462
        %v3559 = vunpack.c.l.b16 %v3463
        %v3560 = vpack.c.b16 %v3513, %v3512
        %v3561 = vpack.c.b16 %v3515, %v3514
        %v3562 = vpack.c.b16 %v3517, %v3516
        %v3563 = vpack.c.b16 %v3519, %v3518
        %v3564 = vpack.c.b16 %v3521, %v3520
        %v3565 = vpack.c.b16 %v3523, %v3522
        %v3566 = vpack.c.b16 %v3525, %v3524
        %v3567 = vpack.c.b16 %v3527, %v3526
        %v3568 = vpack.c.b16 %v3529, %v3528
        %v3569 = vpack.c.b16 %v3531, %v3530
        %v3570 = vpack.c.b16 %v3533, %v3532
        %v3571 = vpack.c.b16 %v3535, %v3534
        %v3572 = vpack.c.b16 %v3537, %v3536
        %v3573 = vpack.c.b16 %v3539, %v3538
        %v3574 = vpack.c.b16 %v3541, %v3540
        %v3575 = vpack.c.b16 %v3543, %v3542
        %v3576 = vpack.c.b16 %v3545, %v3544
        %v3577 = vpack.c.b16 %v3547, %v3546
        %v3578 = vpack.c.b16 %v3549, %v3548
        %v3579 = vpack.c.b16 %v3551, %v3550
        %v3580 = vpack.c.b16 %v3553, %v3552
        %v3581 = vpack.c.b16 %v3555, %v3554
        %v3582 = vpack.c.b16 %v3557, %v3556
        %v3583 = vpack.c.b16 %v3559, %v3558
        %3608 = vmatprep.subr.bf16.mxu0 0
        %3609 = vmatpush1.bf16.msra.mxu0 %v3560
        %3610 = vmatprep.subr.bf16.mxu0 0
        %3611 = vmatpush1.bf16.msra.mxu0 %v3561
        %3612 = vmatprep.subr.bf16.mxu0 0
        %3613 = vmatpush1.bf16.msra.mxu0 %v3562
        %3614 = vmatprep.subr.bf16.mxu0 0
        %3615 = vmatpush1.bf16.msra.mxu0 %v3563
        %3616 = vmatprep.subr.bf16.mxu0 0
        %3617 = vmatpush1.bf16.msra.mxu0 %v3564
        %3618 = vmatprep.subr.bf16.mxu0 0
        %3619 = vmatpush1.bf16.msra.mxu0 %v3565
        %3620 = vmatprep.subr.bf16.mxu0 0
        %3621 = vmatpush1.bf16.msra.mxu0 %v3566
        %3622 = vmatprep.subr.bf16.mxu0 0
        %3623 = vmatpush1.bf16.msra.mxu0 %v3567
        %3624 = vmatprep.subr.bf16.mxu0 0
        %3625 = vmatpush1.bf16.msra.mxu0 %v3568
        %3626 = vmatprep.subr.bf16.mxu0 0
        %3627 = vmatpush1.bf16.msra.mxu0 %v3569
        %3628 = vmatprep.subr.bf16.mxu0 0
        %3629 = vmatpush1.bf16.msra.mxu0 %v3570
        %3630 = vmatprep.subr.bf16.mxu0 0
        %3631 = vmatpush1.bf16.msra.mxu0 %v3571
        %3632 = vmatprep.subr.bf16.mxu0 0
        %3633 = vmatpush1.bf16.msra.mxu0 %v3572
        %3634 = vmatprep.subr.bf16.mxu0 0
        %3635 = vmatpush1.bf16.msra.mxu0 %v3573
        %3636 = vmatprep.subr.bf16.mxu0 0
        %3637 = vmatpush1.bf16.msra.mxu0 %v3574
        %3638 = vmatprep.subr.bf16.mxu0 0
        %3639 = vmatpush1.bf16.msra.mxu0 %v3575
        %3640 = vmatprep.mubr.bf16.mxu0 %v3392
        %3641 = vmatmul.mubr.bf16.gmra.mrb[0].mxu0 %v3391
        %v3642 = vpop.f32.mrb[0].mxu0
        %v3643 = vadd.f32 0.0, %v3642
        %v3644 = vpop.f32.mrb[0].mxu0
        %v3645 = vpop.f32.mrb[0].mxu0
        %v3646 = vadd.f32 0.0, %v3645
        %v3647 = vpop.f32.mrb[0].mxu0
        %3648 = vmatprep.mubr.bf16.mxu0 %v3395
        %3649 = vmatmul.mubr.bf16.gmra.mrb[0].mxu0 %v3394
        %v3650 = vpop.f32.mrb[0].mxu0
        %v3651 = vadd.f32 0.0, %v3650
        %v3652 = vpop.f32.mrb[0].mxu0
        %v3653 = vpop.f32.mrb[0].mxu0
        %v3654 = vadd.f32 0.0, %v3653
        %v3655 = vpop.f32.mrb[0].mxu0
        %3656 = vmatprep.mubr.bf16.mxu0 %v3398
        %3657 = vmatmul.mubr.bf16.gmra.mrb[0].mxu0 %v3397
        %v3658 = vpop.f32.mrb[0].mxu0
        %v3659 = vadd.f32 0.0, %v3658
        %v3660 = vpop.f32.mrb[0].mxu0
        %v3661 = vpop.f32.mrb[0].mxu0
        %v3662 = vadd.f32 0.0, %v3661
        %v3663 = vpop.f32.mrb[0].mxu0
        %3664 = vmatprep.mubr.bf16.mxu0 %v3401
        %3665 = vmatmul.mubr.bf16.gmra.mrb[0].mxu0 %v3400
        %v3666 = vpop.f32.mrb[0].mxu0
        %v3667 = vadd.f32 0.0, %v3666
        %v3668 = vpop.f32.mrb[0].mxu0
        %v3669 = vpop.f32.mrb[0].mxu0
        %v3670 = vadd.f32 0.0, %v3669
        %v3671 = vpop.f32.mrb[0].mxu0
        %3672 = vmatprep.mubr.bf16.mxu0 %v3404
        %3673 = vmatmul.mubr.bf16.gmra.mrb[0].mxu0 %v3403
        %v3674 = vpop.f32.mrb[0].mxu0
        %v3675 = vadd.f32 0.0, %v3674
        %v3676 = vpop.f32.mrb[0].mxu0
        %v3677 = vpop.f32.mrb[0].mxu0
        %v3678 = vadd.f32 0.0, %v3677
        %v3679 = vpop.f32.mrb[0].mxu0
        %3680 = vmatprep.mubr.bf16.mxu0 %v3407
        %3681 = vmatmul.mubr.bf16.gmra.mrb[0].mxu0 %v3406
        %v3682 = vpop.f32.mrb[0].mxu0
        %v3683 = vadd.f32 0.0, %v3682
        %v3684 = vpop.f32.mrb[0].mxu0
        %v3685 = vpop.f32.mrb[0].mxu0
        %v3686 = vadd.f32 0.0, %v3685
        %v3687 = vpop.f32.mrb[0].mxu0
        %3688 = vmatprep.mubr.bf16.mxu0 %v3410
        %3689 = vmatmul.mubr.bf16.gmra.mrb[0].mxu0 %v3409
        %v3690 = vpop.f32.mrb[0].mxu0
        %v3691 = vadd.f32 0.0, %v3690
        %v3692 = vpop.f32.mrb[0].mxu0
        %v3693 = vpop.f32.mrb[0].mxu0
        %v3694 = vadd.f32 0.0, %v3693
        %v3695 = vpop.f32.mrb[0].mxu0
        %3696 = vmatprep.mubr.bf16.mxu0 %v3413
        %3697 = vmatmul.mubr.bf16.gmra.mrb[0].mxu0 %v3412
        %v3698 = vpop.f32.mrb[0].mxu0
        %v3699 = vadd.f32 0.0, %v3698
        %v3700 = vpop.f32.mrb[0].mxu0
        %v3701 = vpop.f32.mrb[0].mxu0
        %v3702 = vadd.f32 0.0, %v3701
        %v3703 = vpop.f32.mrb[0].mxu0
        %3704 = vdwg.mxu0
        %3705 = vmatprep.subr.bf16.mxu0 0
        %3706 = vmatpush1.bf16.msra.mxu0 %v3576
        %3707 = vmatprep.subr.bf16.mxu0 0
        %3708 = vmatpush1.bf16.msra.mxu0 %v3577
        %3709 = vmatprep.subr.bf16.mxu0 0
        %3710 = vmatpush1.bf16.msra.mxu0 %v3578
        %3711 = vmatprep.subr.bf16.mxu0 0
        %3712 = vmatpush1.bf16.msra.mxu0 %v3579
        %3713 = vmatprep.subr.bf16.mxu0 0
        %3714 = vmatpush1.bf16.msra.mxu0 %v3580
        %3715 = vmatprep.subr.bf16.mxu0 0
        %3716 = vmatpush1.bf16.msra.mxu0 %v3581
        %3717 = vmatprep.subr.bf16.mxu0 0
        %3718 = vmatpush1.bf16.msra.mxu0 %v3582
        %3719 = vmatprep.subr.bf16.mxu0 0
        %3720 = vmatpush1.bf16.msra.mxu0 %v3583
        %3721 = vmatprep.subr.bf16.mxu0 0
        %3722 = vmatpush1.bf16.msra.mxu0 0
        %3723 = vmatprep.subr.bf16.mxu0 0
        %3724 = vmatpush1.bf16.msra.mxu0 0
        %3725 = vmatprep.subr.bf16.mxu0 0
        %3726 = vmatpush1.bf16.msra.mxu0 0
        %3727 = vmatprep.subr.bf16.mxu0 0
        %3728 = vmatpush1.bf16.msra.mxu0 0
        %3729 = vmatprep.subr.bf16.mxu0 0
        %3730 = vmatpush1.bf16.msra.mxu0 0
        %3731 = vmatprep.subr.bf16.mxu0 0
        %3732 = vmatpush1.bf16.msra.mxu0 0
        %3733 = vmatprep.subr.bf16.mxu0 0
        %3734 = vmatpush1.bf16.msra.mxu0 0
        %3735 = vmatprep.subr.bf16.mxu0 0
        %3736 = vmatpush1.bf16.msra.mxu0 0
        %3737 = vmatprep.mubr.bf16.mxu0 0
        %3738 = vmatmul.mubr.bf16.gmra.mrb[0].mxu0 %v3393
        %v3739 = vpop.f32.mrb[0].mxu0
        %v3740 = vadd.f32 %v3643, %v3739
        %v3741 = vpop.f32.mrb[0].mxu0
        %v3742 = vpop.f32.mrb[0].mxu0
        %v3743 = vadd.f32 %v3646, %v3742
        %v3744 = vpop.f32.mrb[0].mxu0
        %3745 = vmatprep.mubr.bf16.mxu0 0
        %3746 = vmatmul.mubr.bf16.gmra.mrb[0].mxu0 %v3396
        %v3747 = vpop.f32.mrb[0].mxu0
        %v3748 = vadd.f32 %v3651, %v3747
        %v3749 = vpop.f32.mrb[0].mxu0
        %v3750 = vpop.f32.mrb[0].mxu0
        %v3751 = vadd.f32 %v3654, %v3750
        %v3752 = vpop.f32.mrb[0].mxu0
        %3753 = vmatprep.mubr.bf16.mxu0 0
        %3754 = vmatmul.mubr.bf16.gmra.mrb[0].mxu0 %v3399
        %v3755 = vpop.f32.mrb[0].mxu0
        %v3756 = vadd.f32 %v3659, %v3755
        %v3757 = vpop.f32.mrb[0].mxu0
        %v3758 = vpop.f32.mrb[0].mxu0
        %v3759 = vadd.f32 %v3662, %v3758
        %v3760 = vpop.f32.mrb[0].mxu0
        %3761 = vmatprep.mubr.bf16.mxu0 0
        %3762 = vmatmul.mubr.bf16.gmra.mrb[0].mxu0 %v3402
        %v3763 = vpop.f32.mrb[0].mxu0
        %v3764 = vadd.f32 %v3667, %v3763
        %v3765 = vpop.f32.mrb[0].mxu0
        %v3766 = vpop.f32.mrb[0].mxu0
        %v3767 = vadd.f32 %v3670, %v3766
        %v3768 = vpop.f32.mrb[0].mxu0
        %3769 = vmatprep.mubr.bf16.mxu0 0
        %3770 = vmatmul.mubr.bf16.gmra.mrb[0].mxu0 %v3405
        %v3771 = vpop.f32.mrb[0].mxu0
        %v3772 = vadd.f32 %v3675, %v3771
        %v3773 = vpop.f32.mrb[0].mxu0
        %v3774 = vpop.f32.mrb[0].mxu0
        %v3775 = vadd.f32 %v3678, %v3774
        %v3776 = vpop.f32.mrb[0].mxu0
        %3777 = vmatprep.mubr.bf16.mxu0 0
        %3778 = vmatmul.mubr.bf16.gmra.mrb[0].mxu0 %v3408
        %v3779 = vpop.f32.mrb[0].mxu0
        %v3780 = vadd.f32 %v3683, %v3779
        %v3781 = vpop.f32.mrb[0].mxu0
        %v3782 = vpop.f32.mrb[0].mxu0
        %v3783 = vadd.f32 %v3686, %v3782
        %v3784 = vpop.f32.mrb[0].mxu0
        %3785 = vmatprep.mubr.bf16.mxu0 0
        %3786 = vmatmul.mubr.bf16.gmra.mrb[0].mxu0 %v3411
        %v3787 = vpop.f32.mrb[0].mxu0
        %v3788 = vadd.f32 %v3691, %v3787
        %v3789 = vpop.f32.mrb[0].mxu0
        %v3790 = vpop.f32.mrb[0].mxu0
        %v3791 = vadd.f32 %v3694, %v3790
        %v3792 = vpop.f32.mrb[0].mxu0
        %3793 = vmatprep.mubr.bf16.mxu0 0
        %3794 = vmatmul.mubr.bf16.gmra.mrb[0].mxu0 %v3414
        %v3795 = vpop.f32.mrb[0].mxu0
        %v3796 = vadd.f32 %v3699, %v3795
        %v3797 = vpop.f32.mrb[0].mxu0
        %v3798 = vpop.f32.mrb[0].mxu0
        %v3799 = vadd.f32 %v3702, %v3798
        %v3800 = vpop.f32.mrb[0].mxu0
        %3801 = vdwg.mxu0
        %v3802 = vadd.f32 %v3328, %v3740
        %v3803 = vadd.f32 %v3331, %v3743
        %v3804 = vadd.f32 %v3336, %v3748
        %v3805 = vadd.f32 %v3339, %v3751
        %v3806 = vadd.f32 %v3344, %v3756
        %v3807 = vadd.f32 %v3347, %v3759
        %v3808 = vadd.f32 %v3352, %v3764
        %v3809 = vadd.f32 %v3355, %v3767
        %v3810 = vadd.f32 %v3360, %v3772
        %v3811 = vadd.f32 %v3363, %v3775
        %v3812 = vadd.f32 %v3368, %v3780
        %v3813 = vadd.f32 %v3371, %v3783
        %v3814 = vadd.f32 %v3376, %v3788
        %v3815 = vadd.f32 %v3379, %v3791
        %v3816 = vadd.f32 %v3384, %v3796
        %v3817 = vadd.f32 %v3387, %v3799
        %v3818 = vld [vmem:[%s4] sm:$0x1]
        %v3820 = vlaneseq
        %v3821 = vshrl.u32 %v3820, 7
        %v3822 = vsub.s32 0, %v3821
        %v3823 = vrot.slane %v3818, %v3822
        %v3825 = vadd.f32 %v3802, %v3823
        %v3826 = vadd.f32 %v3803, %v3823
        %v3827 = vadd.f32 %v3804, %v3823
        %v3828 = vadd.f32 %v3805, %v3823
        %v3829 = vadd.f32 %v3806, %v3823
        %v3830 = vadd.f32 %v3807, %v3823
        %v3831 = vadd.f32 %v3808, %v3823
        %v3832 = vadd.f32 %v3809, %v3823
        %v3833 = vadd.f32 %v3810, %v3823
        %v3834 = vadd.f32 %v3811, %v3823
        %v3835 = vadd.f32 %v3812, %v3823
        %v3836 = vadd.f32 %v3813, %v3823
        %v3837 = vadd.f32 %v3814, %v3823
        %v3838 = vadd.f32 %v3815, %v3823
        %v3839 = vadd.f32 %v3816, %v3823
        %v3840 = vadd.f32 %v3817, %v3823
        %v3841 = vunpack.c.l.bf16 %v871
        %v3842 = vunpack.c.h.bf16 %v871
        %v3843 = vunpack.c.l.bf16 %v872
        %v3844 = vunpack.c.h.bf16 %v872
        %v3845 = vunpack.c.l.bf16 %v873
        %v3846 = vunpack.c.h.bf16 %v873
        %v3847 = vunpack.c.l.bf16 %v874
        %v3848 = vunpack.c.h.bf16 %v874
        %v3849 = vunpack.c.l.bf16 %v875
        %v3850 = vunpack.c.h.bf16 %v875
        %v3851 = vunpack.c.l.bf16 %v876
        %v3852 = vunpack.c.h.bf16 %v876
        %v3853 = vunpack.c.l.bf16 %v877
        %v3854 = vunpack.c.h.bf16 %v877
        %v3855 = vunpack.c.l.bf16 %v878
        %v3856 = vunpack.c.h.bf16 %v878
        %v3857 = vadd.f32 %v3825, %v3841
        %v3858 = vadd.f32 %v3826, %v3842
        %v3859 = vadd.f32 %v3827, %v3843
        %v3860 = vadd.f32 %v3828, %v3844
        %v3861 = vadd.f32 %v3829, %v3845
        %v3862 = vadd.f32 %v3830, %v3846
        %v3863 = vadd.f32 %v3831, %v3847
        %v3864 = vadd.f32 %v3832, %v3848
        %v3865 = vadd.f32 %v3833, %v3849
        %v3866 = vadd.f32 %v3834, %v3850
        %v3867 = vadd.f32 %v3835, %v3851
        %v3868 = vadd.f32 %v3836, %v3852
        %v3869 = vadd.f32 %v3837, %v3853
        %v3870 = vadd.f32 %v3838, %v3854
        %v3871 = vadd.f32 %v3839, %v3855
        %v3872 = vadd.f32 %v3840, %v3856
        %v3873 = vmax.f32 %v3857, 0.0
        %v3874 = vmax.f32 %v3858, 0.0
        %v3875 = vmax.f32 %v3859, 0.0
        %v3876 = vmax.f32 %v3860, 0.0
        %v3877 = vmax.f32 %v3861, 0.0
        %v3878 = vmax.f32 %v3862, 0.0
        %v3879 = vmax.f32 %v3863, 0.0
        %v3880 = vmax.f32 %v3864, 0.0
        %v3881 = vmax.f32 %v3865, 0.0
        %v3882 = vmax.f32 %v3866, 0.0
        %v3883 = vmax.f32 %v3867, 0.0
        %v3884 = vmax.f32 %v3868, 0.0
        %v3885 = vmax.f32 %v3869, 0.0
        %v3886 = vmax.f32 %v3870, 0.0
        %v3887 = vmax.f32 %v3871, 0.0
        %v3888 = vmax.f32 %v3872, 0.0
        %v3889 = vpack.c.bf16 %v3874, %v3873
        %v3890 = vpack.c.bf16 %v3876, %v3875
        %v3891 = vpack.c.bf16 %v3878, %v3877
        %v3892 = vpack.c.bf16 %v3880, %v3879
        %v3893 = vpack.c.bf16 %v3882, %v3881
        %v3894 = vpack.c.bf16 %v3884, %v3883
        %v3895 = vpack.c.bf16 %v3886, %v3885
        %v3896 = vpack.c.bf16 %v3888, %v3887
        %v3905 = vunpack.c.l.b16 %v3889
        %v3906 = vunpack.c.h.b16 %v3889
        %v3907 = vunpack.c.l.b16 %v3890
        %v3908 = vunpack.c.h.b16 %v3890
        %v3909 = vunpack.c.l.b16 %v3891
        %v3910 = vunpack.c.h.b16 %v3891
        %v3911 = vunpack.c.l.b16 %v3892
        %v3912 = vunpack.c.h.b16 %v3892
        %v3913 = vunpack.c.l.b16 %v3893
        %v3914 = vunpack.c.h.b16 %v3893
        %v3915 = vunpack.c.l.b16 %v3894
        %v3916 = vunpack.c.h.b16 %v3894
        %v3917 = vunpack.c.l.b16 %v3895
        %v3918 = vunpack.c.h.b16 %v3895
        %v3919 = vunpack.c.l.b16 %v3896
        %v3920 = vunpack.c.h.b16 %v3896
        %v3921 = vpack.c.b16 %v3905, %v3905
        %v3922 = vpack.c.b16 %v3906, %v3906
        %v3923 = vpack.c.b16 %v3907, %v3907
        %v3924 = vpack.c.b16 %v3908, %v3908
        %v3925 = vpack.c.b16 %v3909, %v3909
        %v3926 = vpack.c.b16 %v3910, %v3910
        %v3927 = vpack.c.b16 %v3911, %v3911
        %v3928 = vpack.c.b16 %v3912, %v3912
        %v3929 = vpack.c.b16 %v3913, %v3913
        %v3930 = vpack.c.b16 %v3914, %v3914
        %v3931 = vpack.c.b16 %v3915, %v3915
        %v3932 = vpack.c.b16 %v3916, %v3916
        %v3933 = vpack.c.b16 %v3917, %v3917
        %v3934 = vpack.c.b16 %v3918, %v3918
        %v3935 = vpack.c.b16 %v3919, %v3919
        %v3936 = vpack.c.b16 %v3920, %v3920
        %3953 = vst [vmem:[%s256] sm:$0xf] %v3921
        %3954 = vst [vmem:[%s256 + $0x4] sm:$0xf] %v3922
        %3955 = vst [vmem:[%s256 + $0x8] sm:$0xf] %v3923
        %3956 = vst [vmem:[%s256 + $0xc] sm:$0xf] %v3924
        %3957 = vst [vmem:[%s256 + $0x10] sm:$0xf] %v3925
        %3958 = vst [vmem:[%s256 + $0x14] sm:$0xf] %v3926
        %3959 = vst [vmem:[%s256 + $0x18] sm:$0xf] %v3927
        %3960 = vst [vmem:[%s256 + $0x1c] sm:$0xf] %v3928
        %3961 = vst [vmem:[%s256 + $0x20] sm:$0xf] %v3929
        %3962 = vst [vmem:[%s256 + $0x24] sm:$0xf] %v3930
        %3963 = vst [vmem:[%s256 + $0x28] sm:$0xf] %v3931
        %3964 = vst [vmem:[%s256 + $0x2c] sm:$0xf] %v3932
        %3965 = vst [vmem:[%s256 + $0x30] sm:$0xf] %v3933
        %3966 = vst [vmem:[%s256 + $0x34] sm:$0xf] %v3934
        %3967 = vst [vmem:[%s256 + $0x38] sm:$0xf] %v3935
        %3968 = vst [vmem:[%s256 + $0x3c] sm:$0xf] %v3936
        %s3969 = sand.u32 %s154, 1
        %s3970 = scalar_lea.sflag [#allocation6], %s3969
        %s3971 = sand.u32 %s154, 1
        %s3972 = smul.addr %s3971, 64
        %s3973 = scalar_lea.vmem [#allocation7], %s3972
        // Predicated region
        $region53: #{tpu_custom_call.1} parent=39 // pred_check
          %p3974 = pneg %p164
        $region54: #{tpu_custom_call.1} parent=39 // pred_check_branch
          %3976 = sbr.rel (%p3974) target = $region56
        $region55: #{tpu_custom_call.1} parent=39 // pred_region
          %s3977 = smul.u32 8, %s25
          %s3979 = ssub.s32 1024, 1024
          %3980 = vsyncadd %s3970, %s3979
          %s3981 = smul.addr %s3977, 2
          %s3982 = smul.addr %s24, 32
          %s3983 = sadd.s32 %s3981, %s3982
          %s3984 = smul.addr %s3983, 64
          %s3985 = scalar_lea.hbm %s5, %s3984
          %s3986 = sshll.u32 %s3973, 4
          %s3987 = int_to_ptr.vmem [resolvable:$true] %s3986
          %3992 = dma.vmem_to_hbm [thread:$0]  %s3987, 1024, %s3985, %s3970, 64, 64, 4
        $region56: #{tpu_custom_call.1} parent=39 // pred_fallthru
          _
      $region40: #{tpu_custom_call.1} parent=5 // pred_fallthru
        _
      %p3993 = scmp.le.s32.totalorder 2, %s15
      // Predicated region
      $region57: #{tpu_custom_call.1} parent=5 // pred_check
        %p3994 = pneg %p3993
      $region58: #{tpu_custom_call.1} parent=5 // pred_check_branch
        %3996 = sbr.rel (%p3994) target = $region60
      $region59: #{tpu_custom_call.1} parent=5 // pred_region
        %s3997 = ssub.s32 %s15, 2
        // Predicated region
        $region61: #{tpu_custom_call.1} parent=59 // pred_check
          %p3998 = pneg %p170
        $region62: #{tpu_custom_call.1} parent=59 // pred_check_branch
          %4000 = sbr.rel (%p3998) target = $region64
        $region63: #{tpu_custom_call.1} parent=59 // pred_region
          %s4001 = sand.u32 %s155, 1
          %s4002 = scalar_lea.sflag [#allocation6], %s4001
          %s4003 = sand.u32 %s155, 1
          %s4004 = smul.addr %s4003, 64
          %s4005 = scalar_lea.vmem [#allocation7], %s4004
          %4006 = dma.done %s4002, 1024
        $region64: #{tpu_custom_call.1} parent=59 // pred_fallthru
          _
      $region60: #{tpu_custom_call.1} parent=5 // pred_fallthru
        _
    $region6: #{tpu_custom_call.1} parent=1 // loop_footer
      %s19 = sadd.s32 1, %s15
    $region7: #{tpu_custom_call.1} parent=1 // loop_footer_branch
      %14 = sbr.rel target = $region3
    $region8: #{tpu_custom_call.1} parent=1 // loop_exit
      _
    %4007 = vsyncpa [#allocation5], 1
    %s4008 = scalar_lea.sflag [#allocation5], 1
    %4009 = vsyncpa %s4008, 1
    %4010 = vsyncpa [#allocation6], 1
    %s4011 = scalar_lea.sflag [#allocation6], 1
    %4012 = vsyncpa %s4011, 1

</llo_original>
